<compile_context>
chip_gen: v5e
topology: v5e:2x2
jax: 0.10.0
libtpu: 0.0.40
codegen_flags: <defaults>
</compile_context>

<pallas_src>
import functools

import jax
import jax.numpy as jnp
from jax.experimental import pallas as pl
from jax.experimental.pallas import tpu as pltpu


def _round_up(x, m):
    return ((x + m - 1) // m) * m


# ---------------------------------------------------------------------------
# Generic tiled matmul + bias kernel (parallel grid).  Used for the hoisted
# layer-0 word projection, the midi projection and the final fc.
# ---------------------------------------------------------------------------
def _matmul_bias_kernel(a_ref, b_ref, bias_ref, o_ref):
    o_ref[...] = (
        jnp.dot(a_ref[...], b_ref[...].astype(jnp.float32),
                preferred_element_type=jnp.float32)
        + bias_ref[...]
    ).astype(o_ref.dtype)


def pallas_matmul_bias(a, b, bias=None, *, tm_max=128, tn_max=512):
    """(M, K) @ (K, N) + bias(1, N) -> (M, N) float32.  Pads to (8,128) tiles."""
    M, K = a.shape
    K2, N = b.shape
    assert K == K2
    if bias is None:
        bias = jnp.zeros((1, N), jnp.float32)

    tm = min(tm_max, _round_up(M, 8))       # multiple of 8
    tn = min(tn_max, _round_up(N, 128))     # multiple of 128
    Mp = _round_up(M, tm)
    Np = _round_up(N, tn)

    a_p = jnp.pad(a, ((0, Mp - M), (0, 0)))
    b_p = jnp.pad(b, ((0, 0), (0, Np - N)))
    bias_p = jnp.pad(bias.astype(jnp.float32), ((0, 0), (0, Np - N)))

    out = pl.pallas_call(
        _matmul_bias_kernel,
        out_shape=jax.ShapeDtypeStruct((Mp, Np), jnp.float32),
        grid_spec=pltpu.PrefetchScalarGridSpec(
            num_scalar_prefetch=0,
            grid=(Mp // tm, Np // tn),
            in_specs=[
                pl.BlockSpec((tm, K), lambda i, j: (i, 0)),
                pl.BlockSpec((K, tn), lambda i, j: (0, j)),
                pl.BlockSpec((1, tn), lambda i, j: (0, j)),
            ],
            out_specs=pl.BlockSpec((tm, tn), lambda i, j: (i, j)),
        ),
        compiler_params=pltpu.CompilerParams(
            dimension_semantics=("parallel", "parallel"),
        ),
    )(a_p, b_p, bias_p)
    return out[:M, :N]


# ---------------------------------------------------------------------------
# Recurrent kernel: multi-layer LSTM over a chunk of T_TILE time steps.
# ---------------------------------------------------------------------------
def _lstm_recurrent_kernel(L, Hp, S, t_tile,
                           xproj_ref, x0b_ref, h0_ref, c0_ref, *rest):
    n_w = 1 + 2 * (L - 1)
    w_refs = rest[:n_w]
    htop_ref, hN_ref, cN_ref = rest[n_w:n_w + 3]

    # Layer 0 only needs W_hh (its input projection / biases were hoisted).
    # Layers >= 1 use a fused [W_ih ; W_hh] weight plus the summed bias.
    w_hh0 = w_refs[0]
    w_cat = [None] * L
    b = [None] * L
    k = 1
    for l in range(1, L):
        w_cat[l], b[l] = w_refs[k], w_refs[k + 1]
        k += 2

    chunk = pl.program_id(0)
    needs_mask = (S % t_tile) != 0

    @pl.when(chunk == 0)
    def _init():
        # hN/cN output blocks are VMEM-resident across the whole grid (constant
        # block index) and double as the live recurrent state.
        hN_ref[...] = h0_ref[...]
        cN_ref[...] = c0_ref[...]

    def step(i, carry):
        t_global = chunk * t_tile + i

        # layer-0 gate pre-activation: word_t @ W_ih(word)  (precomputed, f32)
        #                             + midi @ W_ih(midi) + b_ih + b_hh (per-batch)
        gates_in = xproj_ref[i] + x0b_ref[...]

        new_h = []
        new_c = []
        layer_in = None
        for l in range(L):
            h_prev = hN_ref[l]
            c_prev = cN_ref[l]
            if l == 0:
                gates = gates_in + jnp.dot(
                    h_prev, w_hh0[...], preferred_element_type=jnp.float32)
            else:
                # Fused input+hidden matmul: [x_l | h_prev] @ [W_ih ; W_hh].
                xin = jnp.concatenate([layer_in, h_prev], axis=1)
                gates = (
                    jnp.dot(xin, w_cat[l][...],
                            preferred_element_type=jnp.float32)
                    + b[l][...]
                )
            # PyTorch gate order i, f, g, o; Hp is a multiple of 128 so these
            # slices are lane-aligned.
            i_g = jax.nn.sigmoid(gates[:, 0 * Hp:1 * Hp])
            f_g = jax.nn.sigmoid(gates[:, 1 * Hp:2 * Hp])
            g_g = jnp.tanh(gates[:, 2 * Hp:3 * Hp])
            o_g = jax.nn.sigmoid(gates[:, 3 * Hp:4 * Hp])
            c_n = f_g * c_prev + i_g * g_g
            h_n = o_g * jnp.tanh(c_n)
            new_h.append(h_n)
            new_c.append(c_n)
            layer_in = h_n  # dropout omitted (eval semantics)

        # lane-dense slab write of the top-layer hidden state for this step.
        htop_ref[i] = layer_in

        def _commit():
            for l in range(L):
                hN_ref[l] = new_h[l]
                cN_ref[l] = new_c[l]

        if needs_mask:
            pl.when(t_global < S)(_commit)   # skip padded tail steps
        else:
            _commit()
        return carry

    jax.lax.fori_loop(0, t_tile, step, 0, unroll=True)


def _pad_gate_cols(w, H, Hp):
    """(..., 4*H) -> (..., 4*Hp), zero-padding each of the 4 gate blocks."""
    if Hp == H:
        return w
    lead = w.shape[:-1]
    w4 = w.reshape(lead + (4, H))
    w4 = jnp.pad(w4, [(0, 0)] * len(lead) + [(0, 0), (0, Hp - H)])
    return w4.reshape(lead + (4 * Hp,))


def lyrics_generator_forward(x, midi, hidden, params, *, t_tile=8):
    """Pallas TPU forward pass for LyricsGenerator (eval semantics).

    x:      (B, S, E) float32 word features
    midi:   (B, M)    float32
    hidden: (h0, c0), each (L, B, H) float32
    Returns logits (B, S, V) float32 and (hN, cN), each (L, B, H).
    """
    B, S, E = x.shape
    M = midi.shape[1]
    h0, c0 = hidden
    L, _, H = h0.shape
    V = params["fc_b"].shape[1]
    f32 = jnp.float32

    # ---- hardware-aligned padded sizes ----
    Bp = _round_up(B, 8)          # sublane
    Hp = _round_up(H, 128)        # lane-aligned gate blocks
    G = 4 * Hp
    T = min(t_tile, S)
    Sp = _round_up(S, T)

    # ---- prepare padded, gate-aligned parameters ----
    # bf16 weights for the hoisted big matmuls, f32 for the recurrent kernel.
    w_ih0 = params["lstm0_w_ih_t"]                           # (E + M, 4H)
    w_ih0_word = _pad_gate_cols(w_ih0[:E], H, Hp)            # (E, G)  bf16
    w_ih0_midi = _pad_gate_cols(w_ih0[E:], H, Hp)            # (M, G)  bf16
    b0 = _pad_gate_cols(
        (params["lstm0_b_ih"] + params["lstm0_b_hh"]).astype(f32), H, Hp)

    w_hh0 = _pad_gate_cols(params["lstm0_w_hh_t"].astype(f32), H, Hp)
    w_hh0 = jnp.pad(w_hh0, ((0, Hp - H), (0, 0)))            # (Hp, G)  f32

    w_cat_rest, b_rest = [], []
    for l in range(1, L):
        wih = _pad_gate_cols(params[f"lstm{l}_w_ih_t"].astype(f32), H, Hp)
        wih = jnp.pad(wih, ((0, Hp - H), (0, 0)))            # (Hp, G)
        whh = _pad_gate_cols(params[f"lstm{l}_w_hh_t"].astype(f32), H, Hp)
        whh = jnp.pad(whh, ((0, Hp - H), (0, 0)))            # (Hp, G)
        w_cat_rest.append(jnp.concatenate([wih, whh], axis=0))   # (2Hp, G) f32
        b_rest.append(_pad_gate_cols(
            (params[f"lstm{l}_b_ih"] + params[f"lstm{l}_b_hh"]).astype(f32),
            H, Hp))
    fc_w = jnp.pad(params["fc_w_t"], ((0, Hp - H), (0, 0)))   # (Hp, V) bf16
    fc_b = params["fc_b"].astype(f32)                         # (1, V)

    # ---- hoisted batched matmuls (off the serial time loop) ----
    # layer-0 word-input projection for ALL time steps at once.
    x_sbe = jnp.transpose(x, (1, 0, 2)).reshape(S * B, E)
    xproj = pallas_matmul_bias(x_sbe.astype(f32), w_ih0_word)      # (S*B, G)
    xproj = jnp.pad(xproj.reshape(S, B, G),
                    ((0, Sp - S), (0, Bp - B), (0, 0)))            # (Sp, Bp, G)

    # constant per-batch part of layer-0 gates: midi @ W + b_ih + b_hh.
    x0b = pallas_matmul_bias(midi.astype(f32), w_ih0_midi, b0)     # (B, G)
    x0b = jnp.pad(x0b, ((0, Bp - B), (0, 0)))                      # (Bp, G)

    h0_p = jnp.pad(h0.astype(f32), ((0, 0), (0, Bp - B), (0, Hp - H)))
    c0_p = jnp.pad(c0.astype(f32), ((0, 0), (0, Bp - B), (0, Hp - H)))

    # ---- recurrent kernel over time chunks ----
    w_args = [w_hh0]
    for l in range(1, L):
        w_args += [w_cat_rest[l - 1], b_rest[l - 1]]
    w_specs = [pl.BlockSpec(a.shape, lambda i: (0, 0)) for a in w_args]

    kernel = functools.partial(_lstm_recurrent_kernel, L, Hp, S, T)

    in_specs = (
        [
            pl.BlockSpec((T, Bp, G), lambda i: (i, 0, 0)),      # xproj chunk
            pl.BlockSpec((Bp, G), lambda i: (0, 0)),            # midi+bias term
            pl.BlockSpec((L, Bp, Hp), lambda i: (0, 0, 0)),     # h0
            pl.BlockSpec((L, Bp, Hp), lambda i: (0, 0, 0)),     # c0
        ]
        + w_specs
    )
    out_specs = [
        pl.BlockSpec((T, Bp, Hp), lambda i: (i, 0, 0)),         # top-layer h slab
        pl.BlockSpec((L, Bp, Hp), lambda i: (0, 0, 0)),         # hN (live state)
        pl.BlockSpec((L, Bp, Hp), lambda i: (0, 0, 0)),         # cN (live state)
    ]
    out_shape = (
        jax.ShapeDtypeStruct((Sp, Bp, Hp), f32),
        jax.ShapeDtypeStruct((L, Bp, Hp), f32),
        jax.ShapeDtypeStruct((L, Bp, Hp), f32),
    )

    h_top, hN, cN = pl.pallas_call(
        kernel,
        out_shape=out_shape,
        grid_spec=pltpu.PrefetchScalarGridSpec(
            num_scalar_prefetch=0,
            grid=(Sp // T,),
            in_specs=in_specs,
            out_specs=out_specs,
        ),
        compiler_params=pltpu.CompilerParams(
            dimension_semantics=("arbitrary",),   # time is sequential
        ),
    )(xproj, x0b, h0_p, c0_p, *w_args)

    # ---- hoisted fc projection: one big parallel matmul ----
    h_top = h_top[:S, :B]                                          # (S, B, Hp)
    logits = pallas_matmul_bias(h_top.reshape(S * B, Hp), fc_w, fc_b)
    logits = jnp.transpose(logits.reshape(S, B, V), (1, 0, 2))     # (B, S, V)

    return logits, (hN[:, :B, :H], cN[:, :B, :H])


# ---------------------------------------------------------------------------
# Pure-JAX reference mirroring the PyTorch forward (eval mode).
# ---------------------------------------------------------------------------
def _ref_forward(x, midi, hidden, params):
    B, S, E = x.shape
    h0, c0 = hidden
    L, _, H = h0.shape
    f32 = jnp.float32
    h = [h0[l] for l in range(L)]
    c = [c0[l] for l in range(L)]
    combined = jnp.concatenate(
        [x, jnp.broadcast_to(midi[:, None, :], (B, S, midi.shape[1]))], axis=2)
    outs = []
    for t in range(S):
        inp = combined[:, t]
        for l in range(L):
            gates = (inp @ params[f"lstm{l}_w_ih_t"].astype(f32)
                     + h[l] @ params[f"lstm{l}_w_hh_t"].astype(f32)
                     + params[f"lstm{l}_b_ih"] + params[f"lstm{l}_b_hh"])
            i_g = jax.nn.sigmoid(gates[:, 0 * H:1 * H])
            f_g = jax.nn.sigmoid(gates[:, 1 * H:2 * H])
            g_g = jnp.tanh(gates[:, 2 * H:3 * H])
            o_g = jax.nn.sigmoid(gates[:, 3 * H:4 * H])
            c[l] = f_g * c[l] + i_g * g_g
            h[l] = o_g * jnp.tanh(c[l])
            inp = h[l]
        outs.append(inp @ params["fc_w_t"].astype(f32) + params["fc_b"])
    return jnp.stack(outs, axis=1), (jnp.stack(h, 0), jnp.stack(c, 0))


def make_params(key, *, vocab_size, input_dim, midi_dim, hidden_dim, num_layers):
    """Synthetic parameters; matmul weights pre-transposed and stored bf16."""
    params = {}
    k = key

    def nxt():
        nonlocal k
        k, sub = jax.random.split(k)
        return sub

    scale = 0.1
    bf16 = jnp.bfloat16
    for l in range(num_layers):
        d_in = (input_dim + midi_dim) if l == 0 else hidden_dim
        params[f"lstm{l}_w_ih_t"] = (scale * jax.random.normal(
            nxt(), (d_in, 4 * hidden_dim), jnp.float32)).astype(bf16)
        params[f"lstm{l}_w_hh_t"] = (scale * jax.random.normal(
            nxt(), (hidden_dim, 4 * hidden_dim), jnp.float32)).astype(bf16)
        params[f"lstm{l}_b_ih"] = scale * jax.random.normal(
            nxt(), (1, 4 * hidden_dim), jnp.float32)
        params[f"lstm{l}_b_hh"] = scale * jax.random.normal(
            nxt(), (1, 4 * hidden_dim), jnp.float32)
    params["fc_w_t"] = (scale * jax.random.normal(
        nxt(), (hidden_dim, vocab_size), jnp.float32)).astype(bf16)
    params["fc_b"] = scale * jax.random.normal(nxt(), (1, vocab_size), jnp.float32)
    return params


if __name__ == "__main__":
    B, S = 2, 8
    EMBED, HIDDEN, LAYERS = 32, 32, 2
    VOCAB, MIDI = 64, 50

    key = jax.random.PRNGKey(0)
    kp, kx, km = jax.random.split(key, 3)

    params = make_params(kp, vocab_size=VOCAB, input_dim=EMBED,
                         midi_dim=MIDI, hidden_dim=HIDDEN, num_layers=LAYERS)

    x = jax.random.normal(kx, (B, S, EMBED), jnp.float32)
    midi = jax.random.normal(km, (B, MIDI), jnp.float32)
    # init_hidden equivalent: zeros of shape (num_layers, batch, hidden)
    hidden = (jnp.zeros((LAYERS, B, HIDDEN), jnp.float32),
              jnp.zeros((LAYERS, B, HIDDEN), jnp.float32))

    # t_tile=4 -> 2 time chunks, exercising the cross-chunk state carry.
    fwd = jax.jit(functools.partial(lyrics_generator_forward, t_tile=4))
    out, (hN, cN) = fwd(x, midi, hidden, params)
    jax.block_until_ready(out)
    jax.block_until_ready(hN)
    jax.block_until_ready(cN)

    ref_out, (ref_h, ref_c) = _ref_forward(x, midi, hidden, params)

    assert out.shape == (B, S, VOCAB)
    assert hN.shape == (LAYERS, B, HIDDEN) and cN.shape == (LAYERS, B, HIDDEN)
    assert jnp.allclose(out, ref_out, atol=2e-2, rtol=2e-2), \
        float(jnp.max(jnp.abs(out - ref_out)))
    assert jnp.allclose(hN, ref_h, atol=2e-2, rtol=2e-2)
    assert jnp.allclose(cN, ref_c, atol=2e-2, rtol=2e-2)

    print("KERNEL_OK")
</pallas_src>

<mosaic_0001>
module attributes {stable_mosaic.version = 11 : i64} {
  func.func @_matmul_bias_kernel(%arg0: i32, %arg1: i32, %arg2: memref<16x32xf32, #tpu.memory_space<vmem>>, %arg3: memref<32x512xbf16, #tpu.memory_space<vmem>>, %arg4: memref<1x512xf32, #tpu.memory_space<vmem>>, %arg5: memref<16x512xf32, #tpu.memory_space<vmem>>) attributes {dimension_semantics = [#tpu.dimension_semantics<parallel>, #tpu.dimension_semantics<parallel>], iteration_bounds = array<i64: 1, 1>, scalar_prefetch = 0 : i64, scratch_operands = 0 : i64, tpu.core_type = #tpu.core_type<tc>, window_params = [{transform_indices = @transform_0, window_bounds = array<i64: 16, 32>}, {transform_indices = @transform_1, window_bounds = array<i64: 32, 512>}, {transform_indices = @transform_2, window_bounds = array<i64: 1, 512>}, {transform_indices = @transform_3, window_bounds = array<i64: 16, 512>}]} {
    %c0 = arith.constant 0 : index
    %c0_0 = arith.constant 0 : index
    %0 = vector.load %arg2[%c0, %c0_0] : memref<16x32xf32, #tpu.memory_space<vmem>>, vector<16x32xf32>
    %c0_1 = arith.constant 0 : index
    %c0_2 = arith.constant 0 : index
    %1 = vector.load %arg3[%c0_1, %c0_2] : memref<32x512xbf16, #tpu.memory_space<vmem>>, vector<32x512xbf16>
    %2 = arith.extf %1 : vector<32x512xbf16> to vector<32x512xf32>
    %cst = arith.constant dense<0.000000e+00> : vector<16x512xf32>
    %3 = tpu.matmul %0, %2, %cst {dimension_numbers = #tpu.dot_dimension_numbers<[1], [0], [0], [1], [0, 0, 1, 1], [], []>} : vector<16x32xf32>, vector<32x512xf32>, vector<16x512xf32> -> vector<16x512xf32>
    %c0_3 = arith.constant 0 : index
    %c0_4 = arith.constant 0 : index
    %4 = vector.load %arg4[%c0_3, %c0_4] : memref<1x512xf32, #tpu.memory_space<vmem>>, vector<1x512xf32>
    %5 = vector.broadcast %4 : vector<1x512xf32> to vector<16x512xf32>
    %6 = arith.addf %3, %5 : vector<16x512xf32>
    %c0_5 = arith.constant 0 : index
    %c0_6 = arith.constant 0 : index
    %7 = vector.load %arg5[%c0_5, %c0_6] : memref<16x512xf32, #tpu.memory_space<vmem>>, vector<16x512xf32>
    tpu.vector_store %arg5[%c0_5, %c0_6], %6 {strides = array<i32>} : memref<16x512xf32, #tpu.memory_space<vmem>>, vector<16x512xf32>,
    return
  }
  func.func @transform_0(%arg0: i32, %arg1: i32) -> (i32, i32) {
    %c0_i32 = arith.constant 0 : i32
    %c0_i32_0 = arith.constant 0 : i32
    return %arg0, %c0_i32 : i32, i32
  }
  func.func @transform_1(%arg0: i32, %arg1: i32) -> (i32, i32) {
    %c0_i32 = arith.constant 0 : i32
    %c0_i32_0 = arith.constant 0 : i32
    return %c0_i32, %arg1 : i32, i32
  }
  func.func @transform_2(%arg0: i32, %arg1: i32) -> (i32, i32) {
    %c0_i32 = arith.constant 0 : i32
    %c0_i32_0 = arith.constant 0 : i32
    return %c0_i32, %arg1 : i32, i32
  }
  func.func @transform_3(%arg0: i32, %arg1: i32) -> (i32, i32) {
    %c0_i32 = arith.constant 0 : i32
    return %arg0, %arg1 : i32, i32
  }
}

module attributes {stable_mosaic.version = 11 : i64} {
  func.func @_matmul_bias_kernel(%arg0: i32, %arg1: i32, %arg2: memref<8x50xf32, #tpu.memory_space<vmem>>, %arg3: memref<50x512xbf16, #tpu.memory_space<vmem>>, %arg4: memref<1x512xf32, #tpu.memory_space<vmem>>, %arg5: memref<8x512xf32, #tpu.memory_space<vmem>>) attributes {dimension_semantics = [#tpu.dimension_semantics<parallel>, #tpu.dimension_semantics<parallel>], iteration_bounds = array<i64: 1, 1>, scalar_prefetch = 0 : i64, scratch_operands = 0 : i64, tpu.core_type = #tpu.core_type<tc>, window_params = [{transform_indices = @transform_0, window_bounds = array<i64: 8, 50>}, {transform_indices = @transform_1, window_bounds = array<i64: 50, 512>}, {transform_indices = @transform_2, window_bounds = array<i64: 1, 512>}, {transform_indices = @transform_3, window_bounds = array<i64: 8, 512>}]} {
    %c0 = arith.constant 0 : index
    %c0_0 = arith.constant 0 : index
    %0 = vector.load %arg2[%c0, %c0_0] : memref<8x50xf32, #tpu.memory_space<vmem>>, vector<8x50xf32>
    %c0_1 = arith.constant 0 : index
    %c0_2 = arith.constant 0 : index
    %1 = vector.load %arg3[%c0_1, %c0_2] : memref<50x512xbf16, #tpu.memory_space<vmem>>, vector<50x512xbf16>
    %2 = arith.extf %1 : vector<50x512xbf16> to vector<50x512xf32>
    %cst = arith.constant dense<0.000000e+00> : vector<8x512xf32>
    %3 = tpu.matmul %0, %2, %cst {dimension_numbers = #tpu.dot_dimension_numbers<[1], [0], [0], [1], [0, 0, 1, 1], [], []>} : vector<8x50xf32>, vector<50x512xf32>, vector<8x512xf32> -> vector<8x512xf32>
    %c0_3 = arith.constant 0 : index
    %c0_4 = arith.constant 0 : index
    %4 = vector.load %arg4[%c0_3, %c0_4] : memref<1x512xf32, #tpu.memory_space<vmem>>, vector<1x512xf32>
    %5 = vector.broadcast %4 : vector<1x512xf32> to vector<8x512xf32>
    %6 = arith.addf %3, %5 : vector<8x512xf32>
    %c0_5 = arith.constant 0 : index
    %c0_6 = arith.constant 0 : index
    %7 = vector.load %arg5[%c0_5, %c0_6] : memref<8x512xf32, #tpu.memory_space<vmem>>, vector<8x512xf32>
    tpu.vector_store %arg5[%c0_5, %c0_6], %6 {strides = array<i32>} : memref<8x512xf32, #tpu.memory_space<vmem>>, vector<8x512xf32>,
    return
  }
  func.func @transform_0(%arg0: i32, %arg1: i32) -> (i32, i32) {
    %c0_i32 = arith.constant 0 : i32
    %c0_i32_0 = arith.constant 0 : i32
    return %arg0, %c0_i32 : i32, i32
  }
  func.func @transform_1(%arg0: i32, %arg1: i32) -> (i32, i32) {
    %c0_i32 = arith.constant 0 : i32
    %c0_i32_0 = arith.constant 0 : i32
    return %c0_i32, %arg1 : i32, i32
  }
  func.func @transform_2(%arg0: i32, %arg1: i32) -> (i32, i32) {
    %c0_i32 = arith.constant 0 : i32
    %c0_i32_0 = arith.constant 0 : i32
    return %c0_i32, %arg1 : i32, i32
  }
  func.func @transform_3(%arg0: i32, %arg1: i32) -> (i32, i32) {
    %c0_i32 = arith.constant 0 : i32
    return %arg0, %arg1 : i32, i32
  }
}

module attributes {stable_mosaic.version = 11 : i64} {
  func.func @_lstm_recurrent_kernel(%arg0: i32, %arg1: memref<4x8x512xf32, #tpu.memory_space<vmem>>, %arg2: memref<8x512xf32, #tpu.memory_space<vmem>>, %arg3: memref<2x8x128xf32, #tpu.memory_space<vmem>>, %arg4: memref<2x8x128xf32, #tpu.memory_space<vmem>>, %arg5: memref<128x512xf32, #tpu.memory_space<vmem>>, %arg6: memref<256x512xf32, #tpu.memory_space<vmem>>, %arg7: memref<1x512xf32, #tpu.memory_space<vmem>>, %arg8: memref<4x8x128xf32, #tpu.memory_space<vmem>>, %arg9: memref<2x8x128xf32, #tpu.memory_space<vmem>>, %arg10: memref<2x8x128xf32, #tpu.memory_space<vmem>>) attributes {dimension_semantics = [#tpu.dimension_semantics<arbitrary>], iteration_bounds = array<i64: 2>, scalar_prefetch = 0 : i64, scratch_operands = 0 : i64, tpu.core_type = #tpu.core_type<tc>, window_params = [{transform_indices = @transform_0, window_bounds = array<i64: 4, 8, 512>}, {pipeline_mode = #tpu.pipeline_mode<synchronous>, transform_indices = @transform_1, window_bounds = array<i64: 8, 512>}, {pipeline_mode = #tpu.pipeline_mode<synchronous>, transform_indices = @transform_2, window_bounds = array<i64: 2, 8, 128>}, {pipeline_mode = #tpu.pipeline_mode<synchronous>, transform_indices = @transform_3, window_bounds = array<i64: 2, 8, 128>}, {pipeline_mode = #tpu.pipeline_mode<synchronous>, transform_indices = @transform_4, window_bounds = array<i64: 128, 512>}, {pipeline_mode = #tpu.pipeline_mode<synchronous>, transform_indices = @transform_5, window_bounds = array<i64: 256, 512>}, {pipeline_mode = #tpu.pipeline_mode<synchronous>, transform_indices = @transform_6, window_bounds = array<i64: 1, 512>}, {transform_indices = @transform_7, window_bounds = array<i64: 4, 8, 128>}, {pipeline_mode = #tpu.pipeline_mode<synchronous>, transform_indices = @transform_8, window_bounds = array<i64: 2, 8, 128>}, {pipeline_mode = #tpu.pipeline_mode<synchronous>, transform_indices = @transform_9, window_bounds = array<i64: 2, 8, 128>}]} {
    %c0_i32 = arith.constant 0 : i32
    %0 = arith.cmpi eq, %arg0, %c0_i32 : i32
    %1 = arith.extui %0 : i1 to i32
    %c0_i32_0 = arith.constant 0 : i32
    %2 = arith.cmpi ne, %1, %c0_i32_0 : i32
    scf.if %2 {
      %c0_175 = arith.constant 0 : index
      %c0_176 = arith.constant 0 : index
      %c0_177 = arith.constant 0 : index
      %355 = vector.load %arg3[%c0_175, %c0_176, %c0_177] : memref<2x8x128xf32, #tpu.memory_space<vmem>>, vector<2x8x128xf32>
      %c0_178 = arith.constant 0 : index
      %c0_179 = arith.constant 0 : index
      %c0_180 = arith.constant 0 : index
      %356 = vector.load %arg9[%c0_178, %c0_179, %c0_180] : memref<2x8x128xf32, #tpu.memory_space<vmem>>, vector<2x8x128xf32>
      tpu.vector_store %arg9[%c0_178, %c0_179, %c0_180], %355 {strides = array<i32>} : memref<2x8x128xf32, #tpu.memory_space<vmem>>, vector<2x8x128xf32>,
      %c0_181 = arith.constant 0 : index
      %c0_182 = arith.constant 0 : index
      %c0_183 = arith.constant 0 : index
      %357 = vector.load %arg4[%c0_181, %c0_182, %c0_183] : memref<2x8x128xf32, #tpu.memory_space<vmem>>, vector<2x8x128xf32>
      %c0_184 = arith.constant 0 : index
      %c0_185 = arith.constant 0 : index
      %c0_186 = arith.constant 0 : index
      %358 = vector.load %arg10[%c0_184, %c0_185, %c0_186] : memref<2x8x128xf32, #tpu.memory_space<vmem>>, vector<2x8x128xf32>
      tpu.vector_store %arg10[%c0_184, %c0_185, %c0_186], %357 {strides = array<i32>} : memref<2x8x128xf32, #tpu.memory_space<vmem>>, vector<2x8x128xf32>,
    } else {
    }
    %c0_i32_1 = arith.constant 0 : i32
    %3 = arith.index_cast %c0_i32_1 : i32 to index
    %c0 = arith.constant 0 : index
    %c0_2 = arith.constant 0 : index
    %4 = vector.load %arg1[%3, %c0, %c0_2] : memref<4x8x512xf32, #tpu.memory_space<vmem>>, vector<1x8x512xf32>
    %5 = vector.shape_cast %4 : vector<1x8x512xf32> to vector<8x512xf32>
    %c0_3 = arith.constant 0 : index
    %c0_4 = arith.constant 0 : index
    %6 = vector.load %arg2[%c0_3, %c0_4] : memref<8x512xf32, #tpu.memory_space<vmem>>, vector<8x512xf32>
    %7 = arith.addf %5, %6 : vector<8x512xf32>
    %c0_5 = arith.constant 0 : index
    %c0_6 = arith.constant 0 : index
    %c0_7 = arith.constant 0 : index
    %8 = vector.load %arg9[%c0_5, %c0_6, %c0_7] : memref<2x8x128xf32, #tpu.memory_space<vmem>>, vector<1x8x128xf32>
    %9 = vector.shape_cast %8 : vector<1x8x128xf32> to vector<8x128xf32>
    %c0_8 = arith.constant 0 : index
    %c0_9 = arith.constant 0 : index
    %c0_10 = arith.constant 0 : index
    %10 = vector.load %arg10[%c0_8, %c0_9, %c0_10] : memref<2x8x128xf32, #tpu.memory_space<vmem>>, vector<1x8x128xf32>
    %11 = vector.shape_cast %10 : vector<1x8x128xf32> to vector<8x128xf32>
    %c0_11 = arith.constant 0 : index
    %c0_12 = arith.constant 0 : index
    %12 = vector.load %arg5[%c0_11, %c0_12] : memref<128x512xf32, #tpu.memory_space<vmem>>, vector<128x512xf32>
    %cst = arith.constant dense<0.000000e+00> : vector<8x512xf32>
    %13 = tpu.matmul %9, %12, %cst {dimension_numbers = #tpu.dot_dimension_numbers<[1], [0], [0], [1], [0, 0, 1, 1], [], []>} : vector<8x128xf32>, vector<128x512xf32>, vector<8x512xf32> -> vector<8x512xf32>
    %14 = arith.addf %7, %13 : vector<8x512xf32>
    %15 = vector.extract_strided_slice %14 {offsets = [0, 0], sizes = [8, 128], strides = [1, 1]} : vector<8x512xf32> to vector<8x128xf32>
    %16 = arith.negf %15 : vector<8x128xf32>
    %17 = math.exp %16 : vector<8x128xf32>
    %cst_13 = arith.constant 1.000000e+00 : f32
    %18 = vector.broadcast %cst_13 : f32 to vector<8x128xf32>
    %19 = arith.addf %18, %17 : vector<8x128xf32>
    %20 = arith.divf %18, %19 : vector<8x128xf32>
    %21 = vector.extract_strided_slice %14 {offsets = [0, 128], sizes = [8, 128], strides = [1, 1]} : vector<8x512xf32> to vector<8x128xf32>
    %22 = arith.negf %21 : vector<8x128xf32>
    %23 = math.exp %22 : vector<8x128xf32>
    %cst_14 = arith.constant 1.000000e+00 : f32
    %24 = vector.broadcast %cst_14 : f32 to vector<8x128xf32>
    %25 = arith.addf %24, %23 : vector<8x128xf32>
    %26 = arith.divf %24, %25 : vector<8x128xf32>
    %27 = vector.extract_strided_slice %14 {offsets = [0, 256], sizes = [8, 128], strides = [1, 1]} : vector<8x512xf32> to vector<8x128xf32>
    %28 = math.tanh %27 : vector<8x128xf32>
    %29 = vector.extract_strided_slice %14 {offsets = [0, 384], sizes = [8, 128], strides = [1, 1]} : vector<8x512xf32> to vector<8x128xf32>
    %30 = arith.negf %29 : vector<8x128xf32>
    %31 = math.exp %30 : vector<8x128xf32>
    %cst_15 = arith.constant 1.000000e+00 : f32
    %32 = vector.broadcast %cst_15 : f32 to vector<8x128xf32>
    %33 = arith.addf %32, %31 : vector<8x128xf32>
    %34 = arith.divf %32, %33 : vector<8x128xf32>
    %35 = arith.mulf %26, %11 : vector<8x128xf32>
    %36 = arith.mulf %20, %28 : vector<8x128xf32>
    %37 = arith.addf %35, %36 : vector<8x128xf32>
    %38 = math.tanh %37 : vector<8x128xf32>
    %39 = arith.mulf %34, %38 : vector<8x128xf32>
    %c1 = arith.constant 1 : index
    %c0_16 = arith.constant 0 : index
    %c0_17 = arith.constant 0 : index
    %40 = vector.load %arg9[%c1, %c0_16, %c0_17] : memref<2x8x128xf32, #tpu.memory_space<vmem>>, vector<1x8x128xf32>
    %41 = vector.shape_cast %40 : vector<1x8x128xf32> to vector<8x128xf32>
    %c1_18 = arith.constant 1 : index
    %c0_19 = arith.constant 0 : index
    %c0_20 = arith.constant 0 : index
    %42 = vector.load %arg10[%c1_18, %c0_19, %c0_20] : memref<2x8x128xf32, #tpu.memory_space<vmem>>, vector<1x8x128xf32>
    %43 = vector.shape_cast %42 : vector<1x8x128xf32> to vector<8x128xf32>
    %44 = tpu.concatenate %39, %41 in 1 : vector<8x128xf32>, vector<8x128xf32> -> vector<8x256xf32>
    %c0_21 = arith.constant 0 : index
    %c0_22 = arith.constant 0 : index
    %45 = vector.load %arg6[%c0_21, %c0_22] : memref<256x512xf32, #tpu.memory_space<vmem>>, vector<256x512xf32>
    %cst_23 = arith.constant dense<0.000000e+00> : vector<8x512xf32>
    %46 = tpu.matmul %44, %45, %cst_23 {dimension_numbers = #tpu.dot_dimension_numbers<[1], [0], [0], [1], [0, 0, 1, 1], [], []>} : vector<8x256xf32>, vector<256x512xf32>, vector<8x512xf32> -> vector<8x512xf32>
    %c0_24 = arith.constant 0 : index
    %c0_25 = arith.constant 0 : index
    %47 = vector.load %arg7[%c0_24, %c0_25] : memref<1x512xf32, #tpu.memory_space<vmem>>, vector<1x512xf32>
    %48 = vector.broadcast %47 : vector<1x512xf32> to vector<8x512xf32>
    %49 = arith.addf %46, %48 : vector<8x512xf32>
    %50 = vector.extract_strided_slice %49 {offsets = [0, 0], sizes = [8, 128], strides = [1, 1]} : vector<8x512xf32> to vector<8x128xf32>
    %51 = arith.negf %50 : vector<8x128xf32>
    %52 = math.exp %51 : vector<8x128xf32>
    %cst_26 = arith.constant 1.000000e+00 : f32
    %53 = vector.broadcast %cst_26 : f32 to vector<8x128xf32>
    %54 = arith.addf %53, %52 : vector<8x128xf32>
    %55 = arith.divf %53, %54 : vector<8x128xf32>
    %56 = vector.extract_strided_slice %49 {offsets = [0, 128], sizes = [8, 128], strides = [1, 1]} : vector<8x512xf32> to vector<8x128xf32>
    %57 = arith.negf %56 : vector<8x128xf32>
    %58 = math.exp %57 : vector<8x128xf32>
    %cst_27 = arith.constant 1.000000e+00 : f32
    %59 = vector.broadcast %cst_27 : f32 to vector<8x128xf32>
    %60 = arith.addf %59, %58 : vector<8x128xf32>
    %61 = arith.divf %59, %60 : vector<8x128xf32>
    %62 = vector.extract_strided_slice %49 {offsets = [0, 256], sizes = [8, 128], strides = [1, 1]} : vector<8x512xf32> to vector<8x128xf32>
    %63 = math.tanh %62 : vector<8x128xf32>
    %64 = vector.extract_strided_slice %49 {offsets = [0, 384], sizes = [8, 128], strides = [1, 1]} : vector<8x512xf32> to vector<8x128xf32>
    %65 = arith.negf %64 : vector<8x128xf32>
    %66 = math.exp %65 : vector<8x128xf32>
    %cst_28 = arith.constant 1.000000e+00 : f32
    %67 = vector.broadcast %cst_28 : f32 to vector<8x128xf32>
    %68 = arith.addf %67, %66 : vector<8x128xf32>
    %69 = arith.divf %67, %68 : vector<8x128xf32>
    %70 = arith.mulf %61, %43 : vector<8x128xf32>
    %71 = arith.mulf %55, %63 : vector<8x128xf32>
    %72 = arith.addf %70, %71 : vector<8x128xf32>
    %73 = math.tanh %72 : vector<8x128xf32>
    %74 = arith.mulf %69, %73 : vector<8x128xf32>
    %75 = arith.index_cast %c0_i32_1 : i32 to index
    %c0_29 = arith.constant 0 : index
    %c0_30 = arith.constant 0 : index
    %76 = vector.load %arg8[%75, %c0_29, %c0_30] : memref<4x8x128xf32, #tpu.memory_space<vmem>>, vector<1x8x128xf32>
    %77 = vector.shape_cast %76 : vector<1x8x128xf32> to vector<8x128xf32>
    %78 = vector.shape_cast %74 : vector<8x128xf32> to vector<1x8x128xf32>
    tpu.vector_store %arg8[%75, %c0_29, %c0_30], %78 {strides = array<i32>} : memref<4x8x128xf32, #tpu.memory_space<vmem>>, vector<1x8x128xf32>,
    %c0_31 = arith.constant 0 : index
    %c0_32 = arith.constant 0 : index
    %c0_33 = arith.constant 0 : index
    %79 = vector.load %arg9[%c0_31, %c0_32, %c0_33] : memref<2x8x128xf32, #tpu.memory_space<vmem>>, vector<1x8x128xf32>
    %80 = vector.shape_cast %79 : vector<1x8x128xf32> to vector<8x128xf32>
    %81 = vector.shape_cast %39 : vector<8x128xf32> to vector<1x8x128xf32>
    tpu.vector_store %arg9[%c0_31, %c0_32, %c0_33], %81 {strides = array<i32>} : memref<2x8x128xf32, #tpu.memory_space<vmem>>, vector<1x8x128xf32>,
    %c0_34 = arith.constant 0 : index
    %c0_35 = arith.constant 0 : index
    %c0_36 = arith.constant 0 : index
    %82 = vector.load %arg10[%c0_34, %c0_35, %c0_36] : memref<2x8x128xf32, #tpu.memory_space<vmem>>, vector<1x8x128xf32>
    %83 = vector.shape_cast %82 : vector<1x8x128xf32> to vector<8x128xf32>
    %84 = vector.shape_cast %37 : vector<8x128xf32> to vector<1x8x128xf32>
    tpu.vector_store %arg10[%c0_34, %c0_35, %c0_36], %84 {strides = array<i32>} : memref<2x8x128xf32, #tpu.memory_space<vmem>>, vector<1x8x128xf32>,
    %c1_37 = arith.constant 1 : index
    %c0_38 = arith.constant 0 : index
    %c0_39 = arith.constant 0 : index
    %85 = vector.load %arg9[%c1_37, %c0_38, %c0_39] : memref<2x8x128xf32, #tpu.memory_space<vmem>>, vector<1x8x128xf32>
    %86 = vector.shape_cast %85 : vector<1x8x128xf32> to vector<8x128xf32>
    %87 = vector.shape_cast %74 : vector<8x128xf32> to vector<1x8x128xf32>
    tpu.vector_store %arg9[%c1_37, %c0_38, %c0_39], %87 {strides = array<i32>} : memref<2x8x128xf32, #tpu.memory_space<vmem>>, vector<1x8x128xf32>,
    %c1_40 = arith.constant 1 : index
    %c0_41 = arith.constant 0 : index
    %c0_42 = arith.constant 0 : index
    %88 = vector.load %arg10[%c1_40, %c0_41, %c0_42] : memref<2x8x128xf32, #tpu.memory_space<vmem>>, vector<1x8x128xf32>
    %89 = vector.shape_cast %88 : vector<1x8x128xf32> to vector<8x128xf32>
    %90 = vector.shape_cast %72 : vector<8x128xf32> to vector<1x8x128xf32>
    tpu.vector_store %arg10[%c1_40, %c0_41, %c0_42], %90 {strides = array<i32>} : memref<2x8x128xf32, #tpu.memory_space<vmem>>, vector<1x8x128xf32>,
    %c1_i32 = arith.constant 1 : i32
    %91 = arith.index_cast %c1_i32 : i32 to index
    %c0_43 = arith.constant 0 : index
    %c0_44 = arith.constant 0 : index
    %92 = vector.load %arg1[%91, %c0_43, %c0_44] : memref<4x8x512xf32, #tpu.memory_space<vmem>>, vector<1x8x512xf32>
    %93 = vector.shape_cast %92 : vector<1x8x512xf32> to vector<8x512xf32>
    %c0_45 = arith.constant 0 : index
    %c0_46 = arith.constant 0 : index
    %94 = vector.load %arg2[%c0_45, %c0_46] : memref<8x512xf32, #tpu.memory_space<vmem>>, vector<8x512xf32>
    %95 = arith.addf %93, %94 : vector<8x512xf32>
    %c0_47 = arith.constant 0 : index
    %c0_48 = arith.constant 0 : index
    %c0_49 = arith.constant 0 : index
    %96 = vector.load %arg9[%c0_47, %c0_48, %c0_49] : memref<2x8x128xf32, #tpu.memory_space<vmem>>, vector<1x8x128xf32>
    %97 = vector.shape_cast %96 : vector<1x8x128xf32> to vector<8x128xf32>
    %c0_50 = arith.constant 0 : index
    %c0_51 = arith.constant 0 : index
    %c0_52 = arith.constant 0 : index
    %98 = vector.load %arg10[%c0_50, %c0_51, %c0_52] : memref<2x8x128xf32, #tpu.memory_space<vmem>>, vector<1x8x128xf32>
    %99 = vector.shape_cast %98 : vector<1x8x128xf32> to vector<8x128xf32>
    %c0_53 = arith.constant 0 : index
    %c0_54 = arith.constant 0 : index
    %100 = vector.load %arg5[%c0_53, %c0_54] : memref<128x512xf32, #tpu.memory_space<vmem>>, vector<128x512xf32>
    %cst_55 = arith.constant dense<0.000000e+00> : vector<8x512xf32>
    %101 = tpu.matmul %97, %100, %cst_55 {dimension_numbers = #tpu.dot_dimension_numbers<[1], [0], [0], [1], [0, 0, 1, 1], [], []>} : vector<8x128xf32>, vector<128x512xf32>, vector<8x512xf32> -> vector<8x512xf32>
    %102 = arith.addf %95, %101 : vector<8x512xf32>
    %103 = vector.extract_strided_slice %102 {offsets = [0, 0], sizes = [8, 128], strides = [1, 1]} : vector<8x512xf32> to vector<8x128xf32>
    %104 = arith.negf %103 : vector<8x128xf32>
    %105 = math.exp %104 : vector<8x128xf32>
    %cst_56 = arith.constant 1.000000e+00 : f32
    %106 = vector.broadcast %cst_56 : f32 to vector<8x128xf32>
    %107 = arith.addf %106, %105 : vector<8x128xf32>
    %108 = arith.divf %106, %107 : vector<8x128xf32>
    %109 = vector.extract_strided_slice %102 {offsets = [0, 128], sizes = [8, 128], strides = [1, 1]} : vector<8x512xf32> to vector<8x128xf32>
    %110 = arith.negf %109 : vector<8x128xf32>
    %111 = math.exp %110 : vector<8x128xf32>
    %cst_57 = arith.constant 1.000000e+00 : f32
    %112 = vector.broadcast %cst_57 : f32 to vector<8x128xf32>
    %113 = arith.addf %112, %111 : vector<8x128xf32>
    %114 = arith.divf %112, %113 : vector<8x128xf32>
    %115 = vector.extract_strided_slice %102 {offsets = [0, 256], sizes = [8, 128], strides = [1, 1]} : vector<8x512xf32> to vector<8x128xf32>
    %116 = math.tanh %115 : vector<8x128xf32>
    %117 = vector.extract_strided_slice %102 {offsets = [0, 384], sizes = [8, 128], strides = [1, 1]} : vector<8x512xf32> to vector<8x128xf32>
    %118 = arith.negf %117 : vector<8x128xf32>
    %119 = math.exp %118 : vector<8x128xf32>
    %cst_58 = arith.constant 1.000000e+00 : f32
    %120 = vector.broadcast %cst_58 : f32 to vector<8x128xf32>
    %121 = arith.addf %120, %119 : vector<8x128xf32>
    %122 = arith.divf %120, %121 : vector<8x128xf32>
    %123 = arith.mulf %114, %99 : vector<8x128xf32>
    %124 = arith.mulf %108, %116 : vector<8x128xf32>
    %125 = arith.addf %123, %124 : vector<8x128xf32>
    %126 = math.tanh %125 : vector<8x128xf32>
    %127 = arith.mulf %122, %126 : vector<8x128xf32>
    %c1_59 = arith.constant 1 : index
    %c0_60 = arith.constant 0 : index
    %c0_61 = arith.constant 0 : index
    %128 = vector.load %arg9[%c1_59, %c0_60, %c0_61] : memref<2x8x128xf32, #tpu.memory_space<vmem>>, vector<1x8x128xf32>
    %129 = vector.shape_cast %128 : vector<1x8x128xf32> to vector<8x128xf32>
    %c1_62 = arith.constant 1 : index
    %c0_63 = arith.constant 0 : index
    %c0_64 = arith.constant 0 : index
    %130 = vector.load %arg10[%c1_62, %c0_63, %c0_64] : memref<2x8x128xf32, #tpu.memory_space<vmem>>, vector<1x8x128xf32>
    %131 = vector.shape_cast %130 : vector<1x8x128xf32> to vector<8x128xf32>
    %132 = tpu.concatenate %127, %129 in 1 : vector<8x128xf32>, vector<8x128xf32> -> vector<8x256xf32>
    %c0_65 = arith.constant 0 : index
    %c0_66 = arith.constant 0 : index
    %133 = vector.load %arg6[%c0_65, %c0_66] : memref<256x512xf32, #tpu.memory_space<vmem>>, vector<256x512xf32>
    %cst_67 = arith.constant dense<0.000000e+00> : vector<8x512xf32>
    %134 = tpu.matmul %132, %133, %cst_67 {dimension_numbers = #tpu.dot_dimension_numbers<[1], [0], [0], [1], [0, 0, 1, 1], [], []>} : vector<8x256xf32>, vector<256x512xf32>, vector<8x512xf32> -> vector<8x512xf32>
    %c0_68 = arith.constant 0 : index
    %c0_69 = arith.constant 0 : index
    %135 = vector.load %arg7[%c0_68, %c0_69] : memref<1x512xf32, #tpu.memory_space<vmem>>, vector<1x512xf32>
    %136 = vector.broadcast %135 : vector<1x512xf32> to vector<8x512xf32>
    %137 = arith.addf %134, %136 : vector<8x512xf32>
    %138 = vector.extract_strided_slice %137 {offsets = [0, 0], sizes = [8, 128], strides = [1, 1]} : vector<8x512xf32> to vector<8x128xf32>
    %139 = arith.negf %138 : vector<8x128xf32>
    %140 = math.exp %139 : vector<8x128xf32>
    %cst_70 = arith.constant 1.000000e+00 : f32
    %141 = vector.broadcast %cst_70 : f32 to vector<8x128xf32>
    %142 = arith.addf %141, %140 : vector<8x128xf32>
    %143 = arith.divf %141, %142 : vector<8x128xf32>
    %144 = vector.extract_strided_slice %137 {offsets = [0, 128], sizes = [8, 128], strides = [1, 1]} : vector<8x512xf32> to vector<8x128xf32>
    %145 = arith.negf %144 : vector<8x128xf32>
    %146 = math.exp %145 : vector<8x128xf32>
    %cst_71 = arith.constant 1.000000e+00 : f32
    %147 = vector.broadcast %cst_71 : f32 to vector<8x128xf32>
    %148 = arith.addf %147, %146 : vector<8x128xf32>
    %149 = arith.divf %147, %148 : vector<8x128xf32>
    %150 = vector.extract_strided_slice %137 {offsets = [0, 256], sizes = [8, 128], strides = [1, 1]} : vector<8x512xf32> to vector<8x128xf32>
    %151 = math.tanh %150 : vector<8x128xf32>
    %152 = vector.extract_strided_slice %137 {offsets = [0, 384], sizes = [8, 128], strides = [1, 1]} : vector<8x512xf32> to vector<8x128xf32>
    %153 = arith.negf %152 : vector<8x128xf32>
    %154 = math.exp %153 : vector<8x128xf32>
    %cst_72 = arith.constant 1.000000e+00 : f32
    %155 = vector.broadcast %cst_72 : f32 to vector<8x128xf32>
    %156 = arith.addf %155, %154 : vector<8x128xf32>
    %157 = arith.divf %155, %156 : vector<8x128xf32>
    %158 = arith.mulf %149, %131 : vector<8x128xf32>
    %159 = arith.mulf %143, %151 : vector<8x128xf32>
    %160 = arith.addf %158, %159 : vector<8x128xf32>
    %161 = math.tanh %160 : vector<8x128xf32>
    %162 = arith.mulf %157, %161 : vector<8x128xf32>
    %163 = arith.index_cast %c1_i32 : i32 to index
    %c0_73 = arith.constant 0 : index
    %c0_74 = arith.constant 0 : index
    %164 = vector.load %arg8[%163, %c0_73, %c0_74] : memref<4x8x128xf32, #tpu.memory_space<vmem>>, vector<1x8x128xf32>
    %165 = vector.shape_cast %164 : vector<1x8x128xf32> to vector<8x128xf32>
    %166 = vector.shape_cast %162 : vector<8x128xf32> to vector<1x8x128xf32>
    tpu.vector_store %arg8[%163, %c0_73, %c0_74], %166 {strides = array<i32>} : memref<4x8x128xf32, #tpu.memory_space<vmem>>, vector<1x8x128xf32>,
    %c0_75 = arith.constant 0 : index
    %c0_76 = arith.constant 0 : index
    %c0_77 = arith.constant 0 : index
    %167 = vector.load %arg9[%c0_75, %c0_76, %c0_77] : memref<2x8x128xf32, #tpu.memory_space<vmem>>, vector<1x8x128xf32>
    %168 = vector.shape_cast %167 : vector<1x8x128xf32> to vector<8x128xf32>
    %169 = vector.shape_cast %127 : vector<8x128xf32> to vector<1x8x128xf32>
    tpu.vector_store %arg9[%c0_75, %c0_76, %c0_77], %169 {strides = array<i32>} : memref<2x8x128xf32, #tpu.memory_space<vmem>>, vector<1x8x128xf32>,
    %c0_78 = arith.constant 0 : index
    %c0_79 = arith.constant 0 : index
    %c0_80 = arith.constant 0 : index
    %170 = vector.load %arg10[%c0_78, %c0_79, %c0_80] : memref<2x8x128xf32, #tpu.memory_space<vmem>>, vector<1x8x128xf32>
    %171 = vector.shape_cast %170 : vector<1x8x128xf32> to vector<8x128xf32>
    %172 = vector.shape_cast %125 : vector<8x128xf32> to vector<1x8x128xf32>
    tpu.vector_store %arg10[%c0_78, %c0_79, %c0_80], %172 {strides = array<i32>} : memref<2x8x128xf32, #tpu.memory_space<vmem>>, vector<1x8x128xf32>,
    %c1_81 = arith.constant 1 : index
    %c0_82 = arith.constant 0 : index
    %c0_83 = arith.constant 0 : index
    %173 = vector.load %arg9[%c1_81, %c0_82, %c0_83] : memref<2x8x128xf32, #tpu.memory_space<vmem>>, vector<1x8x128xf32>
    %174 = vector.shape_cast %173 : vector<1x8x128xf32> to vector<8x128xf32>
    %175 = vector.shape_cast %162 : vector<8x128xf32> to vector<1x8x128xf32>
    tpu.vector_store %arg9[%c1_81, %c0_82, %c0_83], %175 {strides = array<i32>} : memref<2x8x128xf32, #tpu.memory_space<vmem>>, vector<1x8x128xf32>,
    %c1_84 = arith.constant 1 : index
    %c0_85 = arith.constant 0 : index
    %c0_86 = arith.constant 0 : index
    %176 = vector.load %arg10[%c1_84, %c0_85, %c0_86] : memref<2x8x128xf32, #tpu.memory_space<vmem>>, vector<1x8x128xf32>
    %177 = vector.shape_cast %176 : vector<1x8x128xf32> to vector<8x128xf32>
    %178 = vector.shape_cast %160 : vector<8x128xf32> to vector<1x8x128xf32>
    tpu.vector_store %arg10[%c1_84, %c0_85, %c0_86], %178 {strides = array<i32>} : memref<2x8x128xf32, #tpu.memory_space<vmem>>, vector<1x8x128xf32>,
    %c2_i32 = arith.constant 2 : i32
    %179 = arith.index_cast %c2_i32 : i32 to index
    %c0_87 = arith.constant 0 : index
    %c0_88 = arith.constant 0 : index
    %180 = vector.load %arg1[%179, %c0_87, %c0_88] : memref<4x8x512xf32, #tpu.memory_space<vmem>>, vector<1x8x512xf32>
    %181 = vector.shape_cast %180 : vector<1x8x512xf32> to vector<8x512xf32>
    %c0_89 = arith.constant 0 : index
    %c0_90 = arith.constant 0 : index
    %182 = vector.load %arg2[%c0_89, %c0_90] : memref<8x512xf32, #tpu.memory_space<vmem>>, vector<8x512xf32>
    %183 = arith.addf %181, %182 : vector<8x512xf32>
    %c0_91 = arith.constant 0 : index
    %c0_92 = arith.constant 0 : index
    %c0_93 = arith.constant 0 : index
    %184 = vector.load %arg9[%c0_91, %c0_92, %c0_93] : memref<2x8x128xf32, #tpu.memory_space<vmem>>, vector<1x8x128xf32>
    %185 = vector.shape_cast %184 : vector<1x8x128xf32> to vector<8x128xf32>
    %c0_94 = arith.constant 0 : index
    %c0_95 = arith.constant 0 : index
    %c0_96 = arith.constant 0 : index
    %186 = vector.load %arg10[%c0_94, %c0_95, %c0_96] : memref<2x8x128xf32, #tpu.memory_space<vmem>>, vector<1x8x128xf32>
    %187 = vector.shape_cast %186 : vector<1x8x128xf32> to vector<8x128xf32>
    %c0_97 = arith.constant 0 : index
    %c0_98 = arith.constant 0 : index
    %188 = vector.load %arg5[%c0_97, %c0_98] : memref<128x512xf32, #tpu.memory_space<vmem>>, vector<128x512xf32>
    %cst_99 = arith.constant dense<0.000000e+00> : vector<8x512xf32>
    %189 = tpu.matmul %185, %188, %cst_99 {dimension_numbers = #tpu.dot_dimension_numbers<[1], [0], [0], [1], [0, 0, 1, 1], [], []>} : vector<8x128xf32>, vector<128x512xf32>, vector<8x512xf32> -> vector<8x512xf32>
    %190 = arith.addf %183, %189 : vector<8x512xf32>
    %191 = vector.extract_strided_slice %190 {offsets = [0, 0], sizes = [8, 128], strides = [1, 1]} : vector<8x512xf32> to vector<8x128xf32>
    %192 = arith.negf %191 : vector<8x128xf32>
    %193 = math.exp %192 : vector<8x128xf32>
    %cst_100 = arith.constant 1.000000e+00 : f32
    %194 = vector.broadcast %cst_100 : f32 to vector<8x128xf32>
    %195 = arith.addf %194, %193 : vector<8x128xf32>
    %196 = arith.divf %194, %195 : vector<8x128xf32>
    %197 = vector.extract_strided_slice %190 {offsets = [0, 128], sizes = [8, 128], strides = [1, 1]} : vector<8x512xf32> to vector<8x128xf32>
    %198 = arith.negf %197 : vector<8x128xf32>
    %199 = math.exp %198 : vector<8x128xf32>
    %cst_101 = arith.constant 1.000000e+00 : f32
    %200 = vector.broadcast %cst_101 : f32 to vector<8x128xf32>
    %201 = arith.addf %200, %199 : vector<8x128xf32>
    %202 = arith.divf %200, %201 : vector<8x128xf32>
    %203 = vector.extract_strided_slice %190 {offsets = [0, 256], sizes = [8, 128], strides = [1, 1]} : vector<8x512xf32> to vector<8x128xf32>
    %204 = math.tanh %203 : vector<8x128xf32>
    %205 = vector.extract_strided_slice %190 {offsets = [0, 384], sizes = [8, 128], strides = [1, 1]} : vector<8x512xf32> to vector<8x128xf32>
    %206 = arith.negf %205 : vector<8x128xf32>
    %207 = math.exp %206 : vector<8x128xf32>
    %cst_102 = arith.constant 1.000000e+00 : f32
    %208 = vector.broadcast %cst_102 : f32 to vector<8x128xf32>
    %209 = arith.addf %208, %207 : vector<8x128xf32>
    %210 = arith.divf %208, %209 : vector<8x128xf32>
    %211 = arith.mulf %202, %187 : vector<8x128xf32>
    %212 = arith.mulf %196, %204 : vector<8x128xf32>
    %213 = arith.addf %211, %212 : vector<8x128xf32>
    %214 = math.tanh %213 : vector<8x128xf32>
    %215 = arith.mulf %210, %214 : vector<8x128xf32>
    %c1_103 = arith.constant 1 : index
    %c0_104 = arith.constant 0 : index
    %c0_105 = arith.constant 0 : index
    %216 = vector.load %arg9[%c1_103, %c0_104, %c0_105] : memref<2x8x128xf32, #tpu.memory_space<vmem>>, vector<1x8x128xf32>
    %217 = vector.shape_cast %216 : vector<1x8x128xf32> to vector<8x128xf32>
    %c1_106 = arith.constant 1 : index
    %c0_107 = arith.constant 0 : index
    %c0_108 = arith.constant 0 : index
    %218 = vector.load %arg10[%c1_106, %c0_107, %c0_108] : memref<2x8x128xf32, #tpu.memory_space<vmem>>, vector<1x8x128xf32>
    %219 = vector.shape_cast %218 : vector<1x8x128xf32> to vector<8x128xf32>
    %220 = tpu.concatenate %215, %217 in 1 : vector<8x128xf32>, vector<8x128xf32> -> vector<8x256xf32>
    %c0_109 = arith.constant 0 : index
    %c0_110 = arith.constant 0 : index
    %221 = vector.load %arg6[%c0_109, %c0_110] : memref<256x512xf32, #tpu.memory_space<vmem>>, vector<256x512xf32>
    %cst_111 = arith.constant dense<0.000000e+00> : vector<8x512xf32>
    %222 = tpu.matmul %220, %221, %cst_111 {dimension_numbers = #tpu.dot_dimension_numbers<[1], [0], [0], [1], [0, 0, 1, 1], [], []>} : vector<8x256xf32>, vector<256x512xf32>, vector<8x512xf32> -> vector<8x512xf32>
    %c0_112 = arith.constant 0 : index
    %c0_113 = arith.constant 0 : index
    %223 = vector.load %arg7[%c0_112, %c0_113] : memref<1x512xf32, #tpu.memory_space<vmem>>, vector<1x512xf32>
    %224 = vector.broadcast %223 : vector<1x512xf32> to vector<8x512xf32>
    %225 = arith.addf %222, %224 : vector<8x512xf32>
    %226 = vector.extract_strided_slice %225 {offsets = [0, 0], sizes = [8, 128], strides = [1, 1]} : vector<8x512xf32> to vector<8x128xf32>
    %227 = arith.negf %226 : vector<8x128xf32>
    %228 = math.exp %227 : vector<8x128xf32>
    %cst_114 = arith.constant 1.000000e+00 : f32
    %229 = vector.broadcast %cst_114 : f32 to vector<8x128xf32>
    %230 = arith.addf %229, %228 : vector<8x128xf32>
    %231 = arith.divf %229, %230 : vector<8x128xf32>
    %232 = vector.extract_strided_slice %225 {offsets = [0, 128], sizes = [8, 128], strides = [1, 1]} : vector<8x512xf32> to vector<8x128xf32>
    %233 = arith.negf %232 : vector<8x128xf32>
    %234 = math.exp %233 : vector<8x128xf32>
    %cst_115 = arith.constant 1.000000e+00 : f32
    %235 = vector.broadcast %cst_115 : f32 to vector<8x128xf32>
    %236 = arith.addf %235, %234 : vector<8x128xf32>
    %237 = arith.divf %235, %236 : vector<8x128xf32>
    %238 = vector.extract_strided_slice %225 {offsets = [0, 256], sizes = [8, 128], strides = [1, 1]} : vector<8x512xf32> to vector<8x128xf32>
    %239 = math.tanh %238 : vector<8x128xf32>
    %240 = vector.extract_strided_slice %225 {offsets = [0, 384], sizes = [8, 128], strides = [1, 1]} : vector<8x512xf32> to vector<8x128xf32>
    %241 = arith.negf %240 : vector<8x128xf32>
    %242 = math.exp %241 : vector<8x128xf32>
    %cst_116 = arith.constant 1.000000e+00 : f32
    %243 = vector.broadcast %cst_116 : f32 to vector<8x128xf32>
    %244 = arith.addf %243, %242 : vector<8x128xf32>
    %245 = arith.divf %243, %244 : vector<8x128xf32>
    %246 = arith.mulf %237, %219 : vector<8x128xf32>
    %247 = arith.mulf %231, %239 : vector<8x128xf32>
    %248 = arith.addf %246, %247 : vector<8x128xf32>
    %249 = math.tanh %248 : vector<8x128xf32>
    %250 = arith.mulf %245, %249 : vector<8x128xf32>
    %251 = arith.index_cast %c2_i32 : i32 to index
    %c0_117 = arith.constant 0 : index
    %c0_118 = arith.constant 0 : index
    %252 = vector.load %arg8[%251, %c0_117, %c0_118] : memref<4x8x128xf32, #tpu.memory_space<vmem>>, vector<1x8x128xf32>
    %253 = vector.shape_cast %252 : vector<1x8x128xf32> to vector<8x128xf32>
    %254 = vector.shape_cast %250 : vector<8x128xf32> to vector<1x8x128xf32>
    tpu.vector_store %arg8[%251, %c0_117, %c0_118], %254 {strides = array<i32>} : memref<4x8x128xf32, #tpu.memory_space<vmem>>, vector<1x8x128xf32>,
    %c0_119 = arith.constant 0 : index
    %c0_120 = arith.constant 0 : index
    %c0_121 = arith.constant 0 : index
    %255 = vector.load %arg9[%c0_119, %c0_120, %c0_121] : memref<2x8x128xf32, #tpu.memory_space<vmem>>, vector<1x8x128xf32>
    %256 = vector.shape_cast %255 : vector<1x8x128xf32> to vector<8x128xf32>
    %257 = vector.shape_cast %215 : vector<8x128xf32> to vector<1x8x128xf32>
    tpu.vector_store %arg9[%c0_119, %c0_120, %c0_121], %257 {strides = array<i32>} : memref<2x8x128xf32, #tpu.memory_space<vmem>>, vector<1x8x128xf32>,
    %c0_122 = arith.constant 0 : index
    %c0_123 = arith.constant 0 : index
    %c0_124 = arith.constant 0 : index
    %258 = vector.load %arg10[%c0_122, %c0_123, %c0_124] : memref<2x8x128xf32, #tpu.memory_space<vmem>>, vector<1x8x128xf32>
    %259 = vector.shape_cast %258 : vector<1x8x128xf32> to vector<8x128xf32>
    %260 = vector.shape_cast %213 : vector<8x128xf32> to vector<1x8x128xf32>
    tpu.vector_store %arg10[%c0_122, %c0_123, %c0_124], %260 {strides = array<i32>} : memref<2x8x128xf32, #tpu.memory_space<vmem>>, vector<1x8x128xf32>,
    %c1_125 = arith.constant 1 : index
    %c0_126 = arith.constant 0 : index
    %c0_127 = arith.constant 0 : index
    %261 = vector.load %arg9[%c1_125, %c0_126, %c0_127] : memref<2x8x128xf32, #tpu.memory_space<vmem>>, vector<1x8x128xf32>
    %262 = vector.shape_cast %261 : vector<1x8x128xf32> to vector<8x128xf32>
    %263 = vector.shape_cast %250 : vector<8x128xf32> to vector<1x8x128xf32>
    tpu.vector_store %arg9[%c1_125, %c0_126, %c0_127], %263 {strides = array<i32>} : memref<2x8x128xf32, #tpu.memory_space<vmem>>, vector<1x8x128xf32>,
    %c1_128 = arith.constant 1 : index
    %c0_129 = arith.constant 0 : index
    %c0_130 = arith.constant 0 : index
    %264 = vector.load %arg10[%c1_128, %c0_129, %c0_130] : memref<2x8x128xf32, #tpu.memory_space<vmem>>, vector<1x8x128xf32>
    %265 = vector.shape_cast %264 : vector<1x8x128xf32> to vector<8x128xf32>
    %266 = vector.shape_cast %248 : vector<8x128xf32> to vector<1x8x128xf32>
    tpu.vector_store %arg10[%c1_128, %c0_129, %c0_130], %266 {strides = array<i32>} : memref<2x8x128xf32, #tpu.memory_space<vmem>>, vector<1x8x128xf32>,
    %c3_i32 = arith.constant 3 : i32
    %267 = arith.index_cast %c3_i32 : i32 to index
    %c0_131 = arith.constant 0 : index
    %c0_132 = arith.constant 0 : index
    %268 = vector.load %arg1[%267, %c0_131, %c0_132] : memref<4x8x512xf32, #tpu.memory_space<vmem>>, vector<1x8x512xf32>
    %269 = vector.shape_cast %268 : vector<1x8x512xf32> to vector<8x512xf32>
    %c0_133 = arith.constant 0 : index
    %c0_134 = arith.constant 0 : index
    %270 = vector.load %arg2[%c0_133, %c0_134] : memref<8x512xf32, #tpu.memory_space<vmem>>, vector<8x512xf32>
    %271 = arith.addf %269, %270 : vector<8x512xf32>
    %c0_135 = arith.constant 0 : index
    %c0_136 = arith.constant 0 : index
    %c0_137 = arith.constant 0 : index
    %272 = vector.load %arg9[%c0_135, %c0_136, %c0_137] : memref<2x8x128xf32, #tpu.memory_space<vmem>>, vector<1x8x128xf32>
    %273 = vector.shape_cast %272 : vector<1x8x128xf32> to vector<8x128xf32>
    %c0_138 = arith.constant 0 : index
    %c0_139 = arith.constant 0 : index
    %c0_140 = arith.constant 0 : index
    %274 = vector.load %arg10[%c0_138, %c0_139, %c0_140] : memref<2x8x128xf32, #tpu.memory_space<vmem>>, vector<1x8x128xf32>
    %275 = vector.shape_cast %274 : vector<1x8x128xf32> to vector<8x128xf32>
    %c0_141 = arith.constant 0 : index
    %c0_142 = arith.constant 0 : index
    %276 = vector.load %arg5[%c0_141, %c0_142] : memref<128x512xf32, #tpu.memory_space<vmem>>, vector<128x512xf32>
    %cst_143 = arith.constant dense<0.000000e+00> : vector<8x512xf32>
    %277 = tpu.matmul %273, %276, %cst_143 {dimension_numbers = #tpu.dot_dimension_numbers<[1], [0], [0], [1], [0, 0, 1, 1], [], []>} : vector<8x128xf32>, vector<128x512xf32>, vector<8x512xf32> -> vector<8x512xf32>
    %278 = arith.addf %271, %277 : vector<8x512xf32>
    %279 = vector.extract_strided_slice %278 {offsets = [0, 0], sizes = [8, 128], strides = [1, 1]} : vector<8x512xf32> to vector<8x128xf32>
    %280 = arith.negf %279 : vector<8x128xf32>
    %281 = math.exp %280 : vector<8x128xf32>
    %cst_144 = arith.constant 1.000000e+00 : f32
    %282 = vector.broadcast %cst_144 : f32 to vector<8x128xf32>
    %283 = arith.addf %282, %281 : vector<8x128xf32>
    %284 = arith.divf %282, %283 : vector<8x128xf32>
    %285 = vector.extract_strided_slice %278 {offsets = [0, 128], sizes = [8, 128], strides = [1, 1]} : vector<8x512xf32> to vector<8x128xf32>
    %286 = arith.negf %285 : vector<8x128xf32>
    %287 = math.exp %286 : vector<8x128xf32>
    %cst_145 = arith.constant 1.000000e+00 : f32
    %288 = vector.broadcast %cst_145 : f32 to vector<8x128xf32>
    %289 = arith.addf %288, %287 : vector<8x128xf32>
    %290 = arith.divf %288, %289 : vector<8x128xf32>
    %291 = vector.extract_strided_slice %278 {offsets = [0, 256], sizes = [8, 128], strides = [1, 1]} : vector<8x512xf32> to vector<8x128xf32>
    %292 = math.tanh %291 : vector<8x128xf32>
    %293 = vector.extract_strided_slice %278 {offsets = [0, 384], sizes = [8, 128], strides = [1, 1]} : vector<8x512xf32> to vector<8x128xf32>
    %294 = arith.negf %293 : vector<8x128xf32>
    %295 = math.exp %294 : vector<8x128xf32>
    %cst_146 = arith.constant 1.000000e+00 : f32
    %296 = vector.broadcast %cst_146 : f32 to vector<8x128xf32>
    %297 = arith.addf %296, %295 : vector<8x128xf32>
    %298 = arith.divf %296, %297 : vector<8x128xf32>
    %299 = arith.mulf %290, %275 : vector<8x128xf32>
    %300 = arith.mulf %284, %292 : vector<8x128xf32>
    %301 = arith.addf %299, %300 : vector<8x128xf32>
    %302 = math.tanh %301 : vector<8x128xf32>
    %303 = arith.mulf %298, %302 : vector<8x128xf32>
    %c1_147 = arith.constant 1 : index
    %c0_148 = arith.constant 0 : index
    %c0_149 = arith.constant 0 : index
    %304 = vector.load %arg9[%c1_147, %c0_148, %c0_149] : memref<2x8x128xf32, #tpu.memory_space<vmem>>, vector<1x8x128xf32>
    %305 = vector.shape_cast %304 : vector<1x8x128xf32> to vector<8x128xf32>
    %c1_150 = arith.constant 1 : index
    %c0_151 = arith.constant 0 : index
    %c0_152 = arith.constant 0 : index
    %306 = vector.load %arg10[%c1_150, %c0_151, %c0_152] : memref<2x8x128xf32, #tpu.memory_space<vmem>>, vector<1x8x128xf32>
    %307 = vector.shape_cast %306 : vector<1x8x128xf32> to vector<8x128xf32>
    %308 = tpu.concatenate %303, %305 in 1 : vector<8x128xf32>, vector<8x128xf32> -> vector<8x256xf32>
    %c0_153 = arith.constant 0 : index
    %c0_154 = arith.constant 0 : index
    %309 = vector.load %arg6[%c0_153, %c0_154] : memref<256x512xf32, #tpu.memory_space<vmem>>, vector<256x512xf32>
    %cst_155 = arith.constant dense<0.000000e+00> : vector<8x512xf32>
    %310 = tpu.matmul %308, %309, %cst_155 {dimension_numbers = #tpu.dot_dimension_numbers<[1], [0], [0], [1], [0, 0, 1, 1], [], []>} : vector<8x256xf32>, vector<256x512xf32>, vector<8x512xf32> -> vector<8x512xf32>
    %c0_156 = arith.constant 0 : index
    %c0_157 = arith.constant 0 : index
    %311 = vector.load %arg7[%c0_156, %c0_157] : memref<1x512xf32, #tpu.memory_space<vmem>>, vector<1x512xf32>
    %312 = vector.broadcast %311 : vector<1x512xf32> to vector<8x512xf32>
    %313 = arith.addf %310, %312 : vector<8x512xf32>
    %314 = vector.extract_strided_slice %313 {offsets = [0, 0], sizes = [8, 128], strides = [1, 1]} : vector<8x512xf32> to vector<8x128xf32>
    %315 = arith.negf %314 : vector<8x128xf32>
    %316 = math.exp %315 : vector<8x128xf32>
    %cst_158 = arith.constant 1.000000e+00 : f32
    %317 = vector.broadcast %cst_158 : f32 to vector<8x128xf32>
    %318 = arith.addf %317, %316 : vector<8x128xf32>
    %319 = arith.divf %317, %318 : vector<8x128xf32>
    %320 = vector.extract_strided_slice %313 {offsets = [0, 128], sizes = [8, 128], strides = [1, 1]} : vector<8x512xf32> to vector<8x128xf32>
    %321 = arith.negf %320 : vector<8x128xf32>
    %322 = math.exp %321 : vector<8x128xf32>
    %cst_159 = arith.constant 1.000000e+00 : f32
    %323 = vector.broadcast %cst_159 : f32 to vector<8x128xf32>
    %324 = arith.addf %323, %322 : vector<8x128xf32>
    %325 = arith.divf %323, %324 : vector<8x128xf32>
    %326 = vector.extract_strided_slice %313 {offsets = [0, 256], sizes = [8, 128], strides = [1, 1]} : vector<8x512xf32> to vector<8x128xf32>
    %327 = math.tanh %326 : vector<8x128xf32>
    %328 = vector.extract_strided_slice %313 {offsets = [0, 384], sizes = [8, 128], strides = [1, 1]} : vector<8x512xf32> to vector<8x128xf32>
    %329 = arith.negf %328 : vector<8x128xf32>
    %330 = math.exp %329 : vector<8x128xf32>
    %cst_160 = arith.constant 1.000000e+00 : f32
    %331 = vector.broadcast %cst_160 : f32 to vector<8x128xf32>
    %332 = arith.addf %331, %330 : vector<8x128xf32>
    %333 = arith.divf %331, %332 : vector<8x128xf32>
    %334 = arith.mulf %325, %307 : vector<8x128xf32>
    %335 = arith.mulf %319, %327 : vector<8x128xf32>
    %336 = arith.addf %334, %335 : vector<8x128xf32>
    %337 = math.tanh %336 : vector<8x128xf32>
    %338 = arith.mulf %333, %337 : vector<8x128xf32>
    %339 = arith.index_cast %c3_i32 : i32 to index
    %c0_161 = arith.constant 0 : index
    %c0_162 = arith.constant 0 : index
    %340 = vector.load %arg8[%339, %c0_161, %c0_162] : memref<4x8x128xf32, #tpu.memory_space<vmem>>, vector<1x8x128xf32>
    %341 = vector.shape_cast %340 : vector<1x8x128xf32> to vector<8x128xf32>
    %342 = vector.shape_cast %338 : vector<8x128xf32> to vector<1x8x128xf32>
    tpu.vector_store %arg8[%339, %c0_161, %c0_162], %342 {strides = array<i32>} : memref<4x8x128xf32, #tpu.memory_space<vmem>>, vector<1x8x128xf32>,
    %c0_163 = arith.constant 0 : index
    %c0_164 = arith.constant 0 : index
    %c0_165 = arith.constant 0 : index
    %343 = vector.load %arg9[%c0_163, %c0_164, %c0_165] : memref<2x8x128xf32, #tpu.memory_space<vmem>>, vector<1x8x128xf32>
    %344 = vector.shape_cast %343 : vector<1x8x128xf32> to vector<8x128xf32>
    %345 = vector.shape_cast %303 : vector<8x128xf32> to vector<1x8x128xf32>
    tpu.vector_store %arg9[%c0_163, %c0_164, %c0_165], %345 {strides = array<i32>} : memref<2x8x128xf32, #tpu.memory_space<vmem>>, vector<1x8x128xf32>,
    %c0_166 = arith.constant 0 : index
    %c0_167 = arith.constant 0 : index
    %c0_168 = arith.constant 0 : index
    %346 = vector.load %arg10[%c0_166, %c0_167, %c0_168] : memref<2x8x128xf32, #tpu.memory_space<vmem>>, vector<1x8x128xf32>
    %347 = vector.shape_cast %346 : vector<1x8x128xf32> to vector<8x128xf32>
    %348 = vector.shape_cast %301 : vector<8x128xf32> to vector<1x8x128xf32>
    tpu.vector_store %arg10[%c0_166, %c0_167, %c0_168], %348 {strides = array<i32>} : memref<2x8x128xf32, #tpu.memory_space<vmem>>, vector<1x8x128xf32>,
    %c1_169 = arith.constant 1 : index
    %c0_170 = arith.constant 0 : index
    %c0_171 = arith.constant 0 : index
    %349 = vector.load %arg9[%c1_169, %c0_170, %c0_171] : memref<2x8x128xf32, #tpu.memory_space<vmem>>, vector<1x8x128xf32>
    %350 = vector.shape_cast %349 : vector<1x8x128xf32> to vector<8x128xf32>
    %351 = vector.shape_cast %338 : vector<8x128xf32> to vector<1x8x128xf32>
    tpu.vector_store %arg9[%c1_169, %c0_170, %c0_171], %351 {strides = array<i32>} : memref<2x8x128xf32, #tpu.memory_space<vmem>>, vector<1x8x128xf32>,
    %c1_172 = arith.constant 1 : index
    %c0_173 = arith.constant 0 : index
    %c0_174 = arith.constant 0 : index
    %352 = vector.load %arg10[%c1_172, %c0_173, %c0_174] : memref<2x8x128xf32, #tpu.memory_space<vmem>>, vector<1x8x128xf32>
    %353 = vector.shape_cast %352 : vector<1x8x128xf32> to vector<8x128xf32>
    %354 = vector.shape_cast %336 : vector<8x128xf32> to vector<1x8x128xf32>
    tpu.vector_store %arg10[%c1_172, %c0_173, %c0_174], %354 {strides = array<i32>} : memref<2x8x128xf32, #tpu.memory_space<vmem>>, vector<1x8x128xf32>,
    %c4_i32 = arith.constant 4 : i32
    return
  }
  func.func @transform_0(%arg0: i32) -> (i32, i32, i32) {
    %c0_i32 = arith.constant 0 : i32
    %c0_i32_0 = arith.constant 0 : i32
    %c0_i32_1 = arith.constant 0 : i32
    return %arg0, %c0_i32, %c0_i32_0 : i32, i32, i32
  }
  func.func @transform_1(%arg0: i32) -> (i32, i32) {
    %c0_i32 = arith.constant 0 : i32
    %c0_i32_0 = arith.constant 0 : i32
    %c0_i32_1 = arith.constant 0 : i32
    return %c0_i32, %c0_i32_0 : i32, i32
  }
  func.func @transform_2(%arg0: i32) -> (i32, i32, i32) {
    %c0_i32 = arith.constant 0 : i32
    %c0_i32_0 = arith.constant 0 : i32
    %c0_i32_1 = arith.constant 0 : i32
    %c0_i32_2 = arith.constant 0 : i32
    return %c0_i32, %c0_i32_0, %c0_i32_1 : i32, i32, i32
  }
  func.func @transform_3(%arg0: i32) -> (i32, i32, i32) {
    %c0_i32 = arith.constant 0 : i32
    %c0_i32_0 = arith.constant 0 : i32
    %c0_i32_1 = arith.constant 0 : i32
    %c0_i32_2 = arith.constant 0 : i32
    return %c0_i32, %c0_i32_0, %c0_i32_1 : i32, i32, i32
  }
  func.func @transform_4(%arg0: i32) -> (i32, i32) {
    %c0_i32 = arith.constant 0 : i32
    %c0_i32_0 = arith.constant 0 : i32
    %c0_i32_1 = arith.constant 0 : i32
    return %c0_i32, %c0_i32_0 : i32, i32
  }
  func.func @transform_5(%arg0: i32) -> (i32, i32) {
    %c0_i32 = arith.constant 0 : i32
    %c0_i32_0 = arith.constant 0 : i32
    %c0_i32_1 = arith.constant 0 : i32
    return %c0_i32, %c0_i32_0 : i32, i32
  }
  func.func @transform_6(%arg0: i32) -> (i32, i32) {
    %c0_i32 = arith.constant 0 : i32
    %c0_i32_0 = arith.constant 0 : i32
    %c0_i32_1 = arith.constant 0 : i32
    return %c0_i32, %c0_i32_0 : i32, i32
  }
  func.func @transform_7(%arg0: i32) -> (i32, i32, i32) {
    %c0_i32 = arith.constant 0 : i32
    %c0_i32_0 = arith.constant 0 : i32
    %c0_i32_1 = arith.constant 0 : i32
    return %arg0, %c0_i32, %c0_i32_0 : i32, i32, i32
  }
  func.func @transform_8(%arg0: i32) -> (i32, i32, i32) {
    %c0_i32 = arith.constant 0 : i32
    %c0_i32_0 = arith.constant 0 : i32
    %c0_i32_1 = arith.constant 0 : i32
    %c0_i32_2 = arith.constant 0 : i32
    return %c0_i32, %c0_i32_0, %c0_i32_1 : i32, i32, i32
  }
  func.func @transform_9(%arg0: i32) -> (i32, i32, i32) {
    %c0_i32 = arith.constant 0 : i32
    %c0_i32_0 = arith.constant 0 : i32
    %c0_i32_1 = arith.constant 0 : i32
    %c0_i32_2 = arith.constant 0 : i32
    return %c0_i32, %c0_i32_0, %c0_i32_1 : i32, i32, i32
  }
}

module attributes {stable_mosaic.version = 11 : i64} {
  func.func @_matmul_bias_kernel(%arg0: i32, %arg1: i32, %arg2: memref<16x128xf32, #tpu.memory_space<vmem>>, %arg3: memref<128x128xbf16, #tpu.memory_space<vmem>>, %arg4: memref<1x128xf32, #tpu.memory_space<vmem>>, %arg5: memref<16x128xf32, #tpu.memory_space<vmem>>) attributes {dimension_semantics = [#tpu.dimension_semantics<parallel>, #tpu.dimension_semantics<parallel>], iteration_bounds = array<i64: 1, 1>, scalar_prefetch = 0 : i64, scratch_operands = 0 : i64, tpu.core_type = #tpu.core_type<tc>, window_params = [{transform_indices = @transform_0, window_bounds = array<i64: 16, 128>}, {transform_indices = @transform_1, window_bounds = array<i64: 128, 128>}, {transform_indices = @transform_2, window_bounds = array<i64: 1, 128>}, {transform_indices = @transform_3, window_bounds = array<i64: 16, 128>}]} {
    %c0 = arith.constant 0 : index
    %c0_0 = arith.constant 0 : index
    %0 = vector.load %arg2[%c0, %c0_0] : memref<16x128xf32, #tpu.memory_space<vmem>>, vector<16x128xf32>
    %c0_1 = arith.constant 0 : index
    %c0_2 = arith.constant 0 : index
    %1 = vector.load %arg3[%c0_1, %c0_2] : memref<128x128xbf16, #tpu.memory_space<vmem>>, vector<128x128xbf16>
    %2 = arith.extf %1 : vector<128x128xbf16> to vector<128x128xf32>
    %cst = arith.constant dense<0.000000e+00> : vector<16x128xf32>
    %3 = tpu.matmul %0, %2, %cst {dimension_numbers = #tpu.dot_dimension_numbers<[1], [0], [0], [1], [0, 0, 1, 1], [], []>} : vector<16x128xf32>, vector<128x128xf32>, vector<16x128xf32> -> vector<16x128xf32>
    %c0_3 = arith.constant 0 : index
    %c0_4 = arith.constant 0 : index
    %4 = vector.load %arg4[%c0_3, %c0_4] : memref<1x128xf32, #tpu.memory_space<vmem>>, vector<1x128xf32>
    %5 = vector.broadcast %4 : vector<1x128xf32> to vector<16x128xf32>
    %6 = arith.addf %3, %5 : vector<16x128xf32>
    %c0_5 = arith.constant 0 : index
    %c0_6 = arith.constant 0 : index
    %7 = vector.load %arg5[%c0_5, %c0_6] : memref<16x128xf32, #tpu.memory_space<vmem>>, vector<16x128xf32>
    tpu.vector_store %arg5[%c0_5, %c0_6], %6 {strides = array<i32>} : memref<16x128xf32, #tpu.memory_space<vmem>>, vector<16x128xf32>,
    return
  }
  func.func @transform_0(%arg0: i32, %arg1: i32) -> (i32, i32) {
    %c0_i32 = arith.constant 0 : i32
    %c0_i32_0 = arith.constant 0 : i32
    return %arg0, %c0_i32 : i32, i32
  }
  func.func @transform_1(%arg0: i32, %arg1: i32) -> (i32, i32) {
    %c0_i32 = arith.constant 0 : i32
    %c0_i32_0 = arith.constant 0 : i32
    return %c0_i32, %arg1 : i32, i32
  }
  func.func @transform_2(%arg0: i32, %arg1: i32) -> (i32, i32) {
    %c0_i32 = arith.constant 0 : i32
    %c0_i32_0 = arith.constant 0 : i32
    return %c0_i32, %arg1 : i32, i32
  }
  func.func @transform_3(%arg0: i32, %arg1: i32) -> (i32, i32) {
    %c0_i32 = arith.constant 0 : i32
    return %arg0, %arg1 : i32, i32
  }
}

</mosaic_0001>

<llo_original>
// kernel: lyrics_generator_forward.5
$region0: #{lyrics_generator_forward.5}
  #allocation0 [shape = 'u32[]', space=smem, size = 0x4, offset = 0x4, fixed_abs, tag = 'smem constant byte address 0x4 - core index']
  #allocation1 [shape = 'u32[72,128]{1,0:T(1,128)}', space=vmem, size = 0x9000, scoped, tag = 'internal scratch']
  %s0 = inlined_call_operand.vmem [shape: f32[8,50], index: 0, kind: input, shape index: {}]
  %s1 = inlined_call_operand.vmem [shape: bf16[50,512], index: 1, kind: input, shape index: {}]
  %s2 = inlined_call_operand.vmem [shape: f32[1,512], index: 2, kind: input, shape index: {}]
  %s3 = inlined_call_operand.vmem [shape: f32[8,512], index: 3, kind: output, shape index: {}]
  %s4 = sld [smem:[#allocation0]]
  $region22: #{lyrics_generator_forward.5} parent=0
    _
  %s6 = ssub.s32 1, %s4
  %s7 = scalar_select 0, %s6, %s4
  // Predicated region
  $region2: #{lyrics_generator_forward.5} parent=0 // pred_check
    _
  $region3: #{lyrics_generator_forward.5} parent=0 // pred_check_branch
    %9 = sbr.rel (0) target = $region5
  $region4: #{lyrics_generator_forward.5} parent=0 // pred_region
    _
  $region5: #{lyrics_generator_forward.5} parent=0 // pred_fallthru
    _
  // Predicated region
  $region6: #{lyrics_generator_forward.5} parent=0 // pred_check
    _
  $region7: #{lyrics_generator_forward.5} parent=0 // pred_check_branch
    %11 = sbr.rel (0) target = $region9
  $region8: #{lyrics_generator_forward.5} parent=0 // pred_region
    _
  $region9: #{lyrics_generator_forward.5} parent=0 // pred_fallthru
    _
  // Predicated region
  $region10: #{lyrics_generator_forward.5} parent=0 // pred_check
    _
  $region11: #{lyrics_generator_forward.5} parent=0 // pred_check_branch
    %13 = sbr.rel (0) target = $region13
  $region12: #{lyrics_generator_forward.5} parent=0 // pred_region
    _
  $region13: #{lyrics_generator_forward.5} parent=0 // pred_fallthru
    _
  %v14 = vld [vmem:[%s0] sm:$0xff]
  %v15 = vld [vmem:[%s1] sm:$0xff]
  %v16 = vld [vmem:[%s1 + $0x8] sm:$0xff]
  %v17 = vld [vmem:[%s1 + $0x10] sm:$0xff]
  %v18 = vld [vmem:[%s1 + $0x18] sm:$0xff]
  %v19 = vld [vmem:[%s1 + $0x20] sm:$0xff]
  %v20 = vld [vmem:[%s1 + $0x28] sm:$0xff]
  %v21 = vld [vmem:[%s1 + $0x30] sm:$0xff]
  %v22 = vld [vmem:[%s1 + $0x38] sm:$0xff]
  %v23 = vld [vmem:[%s1 + $0x40] sm:$0xff]
  %v24 = vld [vmem:[%s1 + $0x48] sm:$0xff]
  %v25 = vld [vmem:[%s1 + $0x50] sm:$0xff]
  %v26 = vld [vmem:[%s1 + $0x58] sm:$0xff]
  %v27 = vld [vmem:[%s1 + $0x60] sm:$0x11]
  %v28 = vld [vmem:[%s1 + $0x68] sm:$0x11]
  %v29 = vunpack.c.l.bf16 %v15
  %v30 = vunpack.c.h.bf16 %v15
  %v31 = vunpack.c.l.bf16 %v16
  %v32 = vunpack.c.h.bf16 %v16
  %v33 = vunpack.c.l.bf16 %v17
  %v34 = vunpack.c.h.bf16 %v17
  %v35 = vunpack.c.l.bf16 %v18
  %v36 = vunpack.c.h.bf16 %v18
  %v37 = vunpack.c.l.bf16 %v19
  %v38 = vunpack.c.h.bf16 %v19
  %v39 = vunpack.c.l.bf16 %v20
  %v40 = vunpack.c.h.bf16 %v20
  %v41 = vunpack.c.l.bf16 %v21
  %v42 = vunpack.c.h.bf16 %v21
  %v43 = vunpack.c.l.bf16 %v22
  %v44 = vunpack.c.h.bf16 %v22
  %v45 = vunpack.c.l.bf16 %v23
  %v46 = vunpack.c.h.bf16 %v23
  %v47 = vunpack.c.l.bf16 %v24
  %v48 = vunpack.c.h.bf16 %v24
  %v49 = vunpack.c.l.bf16 %v25
  %v50 = vunpack.c.h.bf16 %v25
  %v51 = vunpack.c.l.bf16 %v26
  %v52 = vunpack.c.h.bf16 %v26
  %v53 = vunpack.c.l.bf16 %v27
  %v54 = vunpack.c.h.bf16 %v27
  %v55 = vunpack.c.l.bf16 %v28
  %v56 = vunpack.c.h.bf16 %v28
  %v57 = vld [vmem:[%s2] sm:$0xf]
  %v59 = vperm.slane %v57, 0
  %v60 = vperm.slane %v57, 1
  %v61 = vperm.slane %v57, 2
  %v62 = vperm.slane %v57, 3
  %vm67 = vcmask 408576
  %v69 = vsel %vm67, %v14, 0
  %vm71 = vcmask 1041408
  %v73 = vsel %vm71, %v53, 0
  %v76 = vsel %vm71, %v54, 0
  %v79 = vsel %vm71, %v55, 0
  %v82 = vsel %vm71, %v56, 0
  %84 = vmatpush.msra.mxu0 0.0
  %85 = vmatpush.msra.mxu0 0.0
  %86 = vmatpush.msra.mxu0 0.0
  %87 = vmatpush.msra.mxu0 0.0
  %88 = vmatpush.msra.mxu0 0.0
  %89 = vmatpush.msra.mxu0 0.0
  %90 = vmatpush.msra.mxu0 0.0
  %91 = vmatpush.msra.mxu0 0.0
  %92 = vmatpush.msra.mxu0 0.0
  %93 = vmatpush.msra.mxu0 %v73
  %94 = vmatpush.msra.mxu0 %v49
  %95 = vmatpush.msra.mxu0 %v45
  %96 = vmatpush.msra.mxu0 %v41
  %97 = vmatpush.msra.mxu0 %v37
  %98 = vmatpush.msra.mxu0 %v33
  %99 = vmatpush.msra.mxu0 %v29
  %100 = vmatmul.f32.gmra.mxu0 %v69
  %v101 = vpop.f32.mrf.mxu0
  %v102 = vadd.f32 %v59, %v101
  %103 = vdwg.mxu0
  %104 = vmatpush.msra.mxu0 0.0
  %105 = vmatpush.msra.mxu0 0.0
  %106 = vmatpush.msra.mxu0 0.0
  %107 = vmatpush.msra.mxu0 0.0
  %108 = vmatpush.msra.mxu0 0.0
  %109 = vmatpush.msra.mxu0 0.0
  %110 = vmatpush.msra.mxu0 0.0
  %111 = vmatpush.msra.mxu0 0.0
  %112 = vmatpush.msra.mxu0 0.0
  %113 = vmatpush.msra.mxu0 %v76
  %114 = vmatpush.msra.mxu0 %v50
  %115 = vmatpush.msra.mxu0 %v46
  %116 = vmatpush.msra.mxu0 %v42
  %117 = vmatpush.msra.mxu0 %v38
  %118 = vmatpush.msra.mxu0 %v34
  %119 = vmatpush.msra.mxu0 %v30
  %120 = vmatmul.f32.gmra.mxu0 %v69
  %v121 = vpop.f32.mrf.mxu0
  %v122 = vadd.f32 %v60, %v121
  %123 = vdwg.mxu0
  %124 = vmatpush.msra.mxu0 0.0
  %125 = vmatpush.msra.mxu0 0.0
  %126 = vmatpush.msra.mxu0 0.0
  %127 = vmatpush.msra.mxu0 0.0
  %128 = vmatpush.msra.mxu0 0.0
  %129 = vmatpush.msra.mxu0 0.0
  %130 = vmatpush.msra.mxu0 0.0
  %131 = vmatpush.msra.mxu0 0.0
  %132 = vmatpush.msra.mxu0 0.0
  %133 = vmatpush.msra.mxu0 %v79
  %134 = vmatpush.msra.mxu0 %v51
  %135 = vmatpush.msra.mxu0 %v47
  %136 = vmatpush.msra.mxu0 %v43
  %137 = vmatpush.msra.mxu0 %v39
  %138 = vmatpush.msra.mxu0 %v35
  %139 = vmatpush.msra.mxu0 %v31
  %140 = vmatmul.f32.gmra.mxu0 %v69
  %v141 = vpop.f32.mrf.mxu0
  %v142 = vadd.f32 %v61, %v141
  %143 = vdwg.mxu0
  %144 = vmatpush.msra.mxu0 0.0
  %145 = vmatpush.msra.mxu0 0.0
  %146 = vmatpush.msra.mxu0 0.0
  %147 = vmatpush.msra.mxu0 0.0
  %148 = vmatpush.msra.mxu0 0.0
  %149 = vmatpush.msra.mxu0 0.0
  %150 = vmatpush.msra.mxu0 0.0
  %151 = vmatpush.msra.mxu0 0.0
  %152 = vmatpush.msra.mxu0 0.0
  %153 = vmatpush.msra.mxu0 %v82
  %154 = vmatpush.msra.mxu0 %v52
  %155 = vmatpush.msra.mxu0 %v48
  %156 = vmatpush.msra.mxu0 %v44
  %157 = vmatpush.msra.mxu0 %v40
  %158 = vmatpush.msra.mxu0 %v36
  %159 = vmatpush.msra.mxu0 %v32
  %160 = vmatmul.f32.gmra.mxu0 %v69
  %v161 = vpop.f32.mrf.mxu0
  %v162 = vadd.f32 %v62, %v161
  %163 = vdwg.mxu0
  %164 = vst [vmem:[%s3] sm:$0xff] %v102
  %165 = vst [vmem:[%s3 + $0x8] sm:$0xff] %v122
  %166 = vst [vmem:[%s3 + $0x10] sm:$0xff] %v142
  %167 = vst [vmem:[%s3 + $0x18] sm:$0xff] %v162
  // Predicated region
  $region14: #{lyrics_generator_forward.5} parent=0 // pred_check
    _
  $region15: #{lyrics_generator_forward.5} parent=0 // pred_check_branch
    %169 = sbr.rel (0) target = $region17
  $region16: #{lyrics_generator_forward.5} parent=0 // pred_region
    _
  $region17: #{lyrics_generator_forward.5} parent=0 // pred_fallthru
    _
  // Predicated region
  $region18: #{lyrics_generator_forward.5} parent=0 // pred_check
    _
  $region19: #{lyrics_generator_forward.5} parent=0 // pred_check_branch
    %171 = sbr.rel (0) target = $region21
  $region20: #{lyrics_generator_forward.5} parent=0 // pred_region
    _
  $region21: #{lyrics_generator_forward.5} parent=0 // pred_fallthru
    _

// kernel: lyrics_generator_forward.4
$region0: #{lyrics_generator_forward.4}
  #allocation0 [shape = 'u32[]', space=smem, size = 0x4, offset = 0x4, fixed_abs, tag = 'smem constant byte address 0x4 - core index']
  #allocation1 [shape = 'u32[72,128]{1,0:T(1,128)}', space=vmem, size = 0x9000, scoped, tag = 'internal scratch']
  %s0 = inlined_call_operand.vmem [shape: f32[16,32], index: 0, kind: input, shape index: {}]
  %s1 = inlined_call_operand.vmem [shape: bf16[32,512], index: 1, kind: input, shape index: {}]
  %s2 = inlined_call_operand.vmem [shape: f32[1,512], index: 2, kind: input, shape index: {}]
  %s3 = inlined_call_operand.vmem [shape: f32[16,512], index: 3, kind: output, shape index: {}]
  %s4 = sld [smem:[#allocation0]]
  $region22: #{lyrics_generator_forward.4} parent=0
    _
  %s6 = ssub.s32 1, %s4
  %s7 = scalar_select 0, %s6, %s4
  // Predicated region
  $region2: #{lyrics_generator_forward.4} parent=0 // pred_check
    _
  $region3: #{lyrics_generator_forward.4} parent=0 // pred_check_branch
    %9 = sbr.rel (0) target = $region5
  $region4: #{lyrics_generator_forward.4} parent=0 // pred_region
    _
  $region5: #{lyrics_generator_forward.4} parent=0 // pred_fallthru
    _
  // Predicated region
  $region6: #{lyrics_generator_forward.4} parent=0 // pred_check
    _
  $region7: #{lyrics_generator_forward.4} parent=0 // pred_check_branch
    %11 = sbr.rel (0) target = $region9
  $region8: #{lyrics_generator_forward.4} parent=0 // pred_region
    _
  $region9: #{lyrics_generator_forward.4} parent=0 // pred_fallthru
    _
  // Predicated region
  $region10: #{lyrics_generator_forward.4} parent=0 // pred_check
    _
  $region11: #{lyrics_generator_forward.4} parent=0 // pred_check_branch
    %13 = sbr.rel (0) target = $region13
  $region12: #{lyrics_generator_forward.4} parent=0 // pred_region
    _
  $region13: #{lyrics_generator_forward.4} parent=0 // pred_fallthru
    _
  %v14 = vld [vmem:[%s0] sm:$0xff]
  %v15 = vld [vmem:[%s0 + $0x8] sm:$0xff]
  %v16 = vld [vmem:[%s1] sm:$0xff]
  %v17 = vld [vmem:[%s1 + $0x8] sm:$0xff]
  %v18 = vld [vmem:[%s1 + $0x10] sm:$0xff]
  %v19 = vld [vmem:[%s1 + $0x18] sm:$0xff]
  %v20 = vld [vmem:[%s1 + $0x20] sm:$0xff]
  %v21 = vld [vmem:[%s1 + $0x28] sm:$0xff]
  %v22 = vld [vmem:[%s1 + $0x30] sm:$0xff]
  %v23 = vld [vmem:[%s1 + $0x38] sm:$0xff]
  %v24 = vunpack.c.l.bf16 %v16
  %v25 = vunpack.c.h.bf16 %v16
  %v26 = vunpack.c.l.bf16 %v17
  %v27 = vunpack.c.h.bf16 %v17
  %v28 = vunpack.c.l.bf16 %v18
  %v29 = vunpack.c.h.bf16 %v18
  %v30 = vunpack.c.l.bf16 %v19
  %v31 = vunpack.c.h.bf16 %v19
  %v32 = vunpack.c.l.bf16 %v20
  %v33 = vunpack.c.h.bf16 %v20
  %v34 = vunpack.c.l.bf16 %v21
  %v35 = vunpack.c.h.bf16 %v21
  %v36 = vunpack.c.l.bf16 %v22
  %v37 = vunpack.c.h.bf16 %v22
  %v38 = vunpack.c.l.bf16 %v23
  %v39 = vunpack.c.h.bf16 %v23
  %v40 = vld [vmem:[%s2] sm:$0xf]
  %v42 = vperm.slane %v40, 0
  %v43 = vperm.slane %v40, 1
  %v44 = vperm.slane %v40, 2
  %v45 = vperm.slane %v40, 3
  %vm50 = vcmask 261120
  %v52 = vsel %vm50, %v14, 0
  %v55 = vsel %vm50, %v15, 0
  %57 = vmatpush.msra.mxu0 0.0
  %58 = vmatpush.msra.mxu0 0.0
  %59 = vmatpush.msra.mxu0 0.0
  %60 = vmatpush.msra.mxu0 0.0
  %61 = vmatpush.msra.mxu0 0.0
  %62 = vmatpush.msra.mxu0 0.0
  %63 = vmatpush.msra.mxu0 0.0
  %64 = vmatpush.msra.mxu0 0.0
  %65 = vmatpush.msra.mxu0 0.0
  %66 = vmatpush.msra.mxu0 0.0
  %67 = vmatpush.msra.mxu0 0.0
  %68 = vmatpush.msra.mxu0 0.0
  %69 = vmatpush.msra.mxu0 %v36
  %70 = vmatpush.msra.mxu0 %v32
  %71 = vmatpush.msra.mxu0 %v28
  %72 = vmatpush.msra.mxu0 %v24
  %73 = vmatmul.f32.gmra.mxu0 %v52
  %v74 = vpop.f32.mrf.mxu0
  %v75 = vadd.f32 %v42, %v74
  %76 = vmatmul.f32.gmra.mxu0 %v55
  %v77 = vpop.f32.mrf.mxu0
  %v78 = vadd.f32 %v42, %v77
  %79 = vdwg.mxu0
  %80 = vmatpush.msra.mxu0 0.0
  %81 = vmatpush.msra.mxu0 0.0
  %82 = vmatpush.msra.mxu0 0.0
  %83 = vmatpush.msra.mxu0 0.0
  %84 = vmatpush.msra.mxu0 0.0
  %85 = vmatpush.msra.mxu0 0.0
  %86 = vmatpush.msra.mxu0 0.0
  %87 = vmatpush.msra.mxu0 0.0
  %88 = vmatpush.msra.mxu0 0.0
  %89 = vmatpush.msra.mxu0 0.0
  %90 = vmatpush.msra.mxu0 0.0
  %91 = vmatpush.msra.mxu0 0.0
  %92 = vmatpush.msra.mxu0 %v37
  %93 = vmatpush.msra.mxu0 %v33
  %94 = vmatpush.msra.mxu0 %v29
  %95 = vmatpush.msra.mxu0 %v25
  %96 = vmatmul.f32.gmra.mxu0 %v52
  %v97 = vpop.f32.mrf.mxu0
  %v98 = vadd.f32 %v43, %v97
  %99 = vmatmul.f32.gmra.mxu0 %v55
  %v100 = vpop.f32.mrf.mxu0
  %v101 = vadd.f32 %v43, %v100
  %102 = vdwg.mxu0
  %103 = vmatpush.msra.mxu0 0.0
  %104 = vmatpush.msra.mxu0 0.0
  %105 = vmatpush.msra.mxu0 0.0
  %106 = vmatpush.msra.mxu0 0.0
  %107 = vmatpush.msra.mxu0 0.0
  %108 = vmatpush.msra.mxu0 0.0
  %109 = vmatpush.msra.mxu0 0.0
  %110 = vmatpush.msra.mxu0 0.0
  %111 = vmatpush.msra.mxu0 0.0
  %112 = vmatpush.msra.mxu0 0.0
  %113 = vmatpush.msra.mxu0 0.0
  %114 = vmatpush.msra.mxu0 0.0
  %115 = vmatpush.msra.mxu0 %v38
  %116 = vmatpush.msra.mxu0 %v34
  %117 = vmatpush.msra.mxu0 %v30
  %118 = vmatpush.msra.mxu0 %v26
  %119 = vmatmul.f32.gmra.mxu0 %v52
  %v120 = vpop.f32.mrf.mxu0
  %v121 = vadd.f32 %v44, %v120
  %122 = vmatmul.f32.gmra.mxu0 %v55
  %v123 = vpop.f32.mrf.mxu0
  %v124 = vadd.f32 %v44, %v123
  %125 = vdwg.mxu0
  %126 = vmatpush.msra.mxu0 0.0
  %127 = vmatpush.msra.mxu0 0.0
  %128 = vmatpush.msra.mxu0 0.0
  %129 = vmatpush.msra.mxu0 0.0
  %130 = vmatpush.msra.mxu0 0.0
  %131 = vmatpush.msra.mxu0 0.0
  %132 = vmatpush.msra.mxu0 0.0
  %133 = vmatpush.msra.mxu0 0.0
  %134 = vmatpush.msra.mxu0 0.0
  %135 = vmatpush.msra.mxu0 0.0
  %136 = vmatpush.msra.mxu0 0.0
  %137 = vmatpush.msra.mxu0 0.0
  %138 = vmatpush.msra.mxu0 %v39
  %139 = vmatpush.msra.mxu0 %v35
  %140 = vmatpush.msra.mxu0 %v31
  %141 = vmatpush.msra.mxu0 %v27
  %142 = vmatmul.f32.gmra.mxu0 %v52
  %v143 = vpop.f32.mrf.mxu0
  %v144 = vadd.f32 %v45, %v143
  %145 = vmatmul.f32.gmra.mxu0 %v55
  %v146 = vpop.f32.mrf.mxu0
  %v147 = vadd.f32 %v45, %v146
  %148 = vdwg.mxu0
  %149 = vst [vmem:[%s3] sm:$0xff] %v75
  %150 = vst [vmem:[%s3 + $0x8] sm:$0xff] %v98
  %151 = vst [vmem:[%s3 + $0x10] sm:$0xff] %v121
  %152 = vst [vmem:[%s3 + $0x18] sm:$0xff] %v144
  %153 = vst [vmem:[%s3 + $0x20] sm:$0xff] %v78
  %154 = vst [vmem:[%s3 + $0x28] sm:$0xff] %v101
  %155 = vst [vmem:[%s3 + $0x30] sm:$0xff] %v124
  %156 = vst [vmem:[%s3 + $0x38] sm:$0xff] %v147
  // Predicated region
  $region14: #{lyrics_generator_forward.4} parent=0 // pred_check
    _
  $region15: #{lyrics_generator_forward.4} parent=0 // pred_check_branch
    %158 = sbr.rel (0) target = $region17
  $region16: #{lyrics_generator_forward.4} parent=0 // pred_region
    _
  $region17: #{lyrics_generator_forward.4} parent=0 // pred_fallthru
    _
  // Predicated region
  $region18: #{lyrics_generator_forward.4} parent=0 // pred_check
    _
  $region19: #{lyrics_generator_forward.4} parent=0 // pred_check_branch
    %160 = sbr.rel (0) target = $region21
  $region20: #{lyrics_generator_forward.4} parent=0 // pred_region
    _
  $region21: #{lyrics_generator_forward.4} parent=0 // pred_fallthru
    _

// kernel: lyrics_generator_forward.7
$region0: #{lyrics_generator_forward.7}
  #allocation0 [shape = 'u32[]', space=smem, size = 0x4, offset = 0x4, fixed_abs, tag = 'smem constant byte address 0x4 - core index']
  #allocation1 [shape = 'u32[72,128]{1,0:T(1,128)}', space=vmem, size = 0x9000, scoped, tag = 'internal scratch']
  %s0 = inlined_call_operand.vmem [shape: f32[16,128], index: 0, kind: input, shape index: {}]
  %s1 = inlined_call_operand.vmem [shape: bf16[128,128], index: 1, kind: input, shape index: {}]
  %s2 = inlined_call_operand.vmem [shape: f32[1,128], index: 2, kind: input, shape index: {}]
  %s3 = inlined_call_operand.vmem [shape: f32[16,128], index: 3, kind: output, shape index: {}]
  %s4 = sld [smem:[#allocation0]]
  $region22: #{lyrics_generator_forward.7} parent=0
    _
  %s6 = ssub.s32 1, %s4
  %s7 = scalar_select 0, %s6, %s4
  // Predicated region
  $region2: #{lyrics_generator_forward.7} parent=0 // pred_check
    _
  $region3: #{lyrics_generator_forward.7} parent=0 // pred_check_branch
    %9 = sbr.rel (0) target = $region5
  $region4: #{lyrics_generator_forward.7} parent=0 // pred_region
    _
  $region5: #{lyrics_generator_forward.7} parent=0 // pred_fallthru
    _
  // Predicated region
  $region6: #{lyrics_generator_forward.7} parent=0 // pred_check
    _
  $region7: #{lyrics_generator_forward.7} parent=0 // pred_check_branch
    %11 = sbr.rel (0) target = $region9
  $region8: #{lyrics_generator_forward.7} parent=0 // pred_region
    _
  $region9: #{lyrics_generator_forward.7} parent=0 // pred_fallthru
    _
  // Predicated region
  $region10: #{lyrics_generator_forward.7} parent=0 // pred_check
    _
  $region11: #{lyrics_generator_forward.7} parent=0 // pred_check_branch
    %13 = sbr.rel (0) target = $region13
  $region12: #{lyrics_generator_forward.7} parent=0 // pred_region
    _
  $region13: #{lyrics_generator_forward.7} parent=0 // pred_fallthru
    _
  %v14 = vld [vmem:[%s0] sm:$0xff]
  %v15 = vld [vmem:[%s0 + $0x8] sm:$0xff]
  %v16 = vld [vmem:[%s1] sm:$0xf]
  %v17 = vld [vmem:[%s1 + $0x4] sm:$0xf]
  %v18 = vld [vmem:[%s1 + $0x8] sm:$0xf]
  %v19 = vld [vmem:[%s1 + $0xc] sm:$0xf]
  %v20 = vld [vmem:[%s1 + $0x10] sm:$0xf]
  %v21 = vld [vmem:[%s1 + $0x14] sm:$0xf]
  %v22 = vld [vmem:[%s1 + $0x18] sm:$0xf]
  %v23 = vld [vmem:[%s1 + $0x1c] sm:$0xf]
  %v24 = vld [vmem:[%s1 + $0x20] sm:$0xf]
  %v25 = vld [vmem:[%s1 + $0x24] sm:$0xf]
  %v26 = vld [vmem:[%s1 + $0x28] sm:$0xf]
  %v27 = vld [vmem:[%s1 + $0x2c] sm:$0xf]
  %v28 = vld [vmem:[%s1 + $0x30] sm:$0xf]
  %v29 = vld [vmem:[%s1 + $0x34] sm:$0xf]
  %v30 = vld [vmem:[%s1 + $0x38] sm:$0xf]
  %v31 = vld [vmem:[%s1 + $0x3c] sm:$0xf]
  %v32 = vunpack.c.l.bf16 %v16
  %v33 = vunpack.c.l.bf16 %v17
  %v34 = vunpack.c.l.bf16 %v18
  %v35 = vunpack.c.l.bf16 %v19
  %v36 = vunpack.c.l.bf16 %v20
  %v37 = vunpack.c.l.bf16 %v21
  %v38 = vunpack.c.l.bf16 %v22
  %v39 = vunpack.c.l.bf16 %v23
  %v40 = vunpack.c.l.bf16 %v24
  %v41 = vunpack.c.l.bf16 %v25
  %v42 = vunpack.c.l.bf16 %v26
  %v43 = vunpack.c.l.bf16 %v27
  %v44 = vunpack.c.l.bf16 %v28
  %v45 = vunpack.c.l.bf16 %v29
  %v46 = vunpack.c.l.bf16 %v30
  %v47 = vunpack.c.l.bf16 %v31
  %v48 = vld [vmem:[%s2] sm:$0x1]
  %v50 = vperm.slane %v48, 0
  %52 = vmatpush.msra.mxu0 %v47
  %53 = vmatpush.msra.mxu0 %v46
  %54 = vmatpush.msra.mxu0 %v45
  %55 = vmatpush.msra.mxu0 %v44
  %56 = vmatpush.msra.mxu0 %v43
  %57 = vmatpush.msra.mxu0 %v42
  %58 = vmatpush.msra.mxu0 %v41
  %59 = vmatpush.msra.mxu0 %v40
  %60 = vmatpush.msra.mxu0 %v39
  %61 = vmatpush.msra.mxu0 %v38
  %62 = vmatpush.msra.mxu0 %v37
  %63 = vmatpush.msra.mxu0 %v36
  %64 = vmatpush.msra.mxu0 %v35
  %65 = vmatpush.msra.mxu0 %v34
  %66 = vmatpush.msra.mxu0 %v33
  %67 = vmatpush.msra.mxu0 %v32
  %68 = vmatmul.f32.gmra.mxu0 %v14
  %v69 = vpop.f32.mrf.mxu0
  %v70 = vadd.f32 %v50, %v69
  %71 = vmatmul.f32.gmra.mxu0 %v15
  %v72 = vpop.f32.mrf.mxu0
  %v73 = vadd.f32 %v50, %v72
  %74 = vdwg.mxu0
  %75 = vst [vmem:[%s3] sm:$0xff] %v70
  %76 = vst [vmem:[%s3 + $0x8] sm:$0xff] %v73
  // Predicated region
  $region14: #{lyrics_generator_forward.7} parent=0 // pred_check
    _
  $region15: #{lyrics_generator_forward.7} parent=0 // pred_check_branch
    %78 = sbr.rel (0) target = $region17
  $region16: #{lyrics_generator_forward.7} parent=0 // pred_region
    _
  $region17: #{lyrics_generator_forward.7} parent=0 // pred_fallthru
    _
  // Predicated region
  $region18: #{lyrics_generator_forward.7} parent=0 // pred_check
    _
  $region19: #{lyrics_generator_forward.7} parent=0 // pred_check_branch
    %80 = sbr.rel (0) target = $region21
  $region20: #{lyrics_generator_forward.7} parent=0 // pred_region
    _
  $region21: #{lyrics_generator_forward.7} parent=0 // pred_fallthru
    _

// kernel: lyrics_generator_forward.6
$region0: #{lyrics_generator_forward.6}
  #allocation0 [shape = 'u32[]', space=smem, size = 0x4, offset = 0x4, fixed_abs, tag = 'smem constant byte address 0x4 - core index']
  #allocation1 [shape = 'u32[72,128]{1,0:T(1,128)}', space=vmem, size = 0x9000, scoped, tag = 'internal scratch']
  %s0 = inlined_call_operand.vmem [shape: f32[8,8,512], index: 0, kind: input, shape index: {}]
  %s1 = inlined_call_operand.vmem [shape: f32[8,512], index: 1, kind: input, shape index: {}]
  %s2 = inlined_call_operand.vmem [shape: f32[2,8,128], index: 2, kind: input, shape index: {}]
  %s3 = inlined_call_operand.vmem [shape: f32[2,8,128], index: 3, kind: input, shape index: {}]
  %s4 = inlined_call_operand.vmem [shape: f32[128,512], index: 4, kind: input, shape index: {}]
  %s5 = inlined_call_operand.vmem [shape: f32[256,512], index: 5, kind: input, shape index: {}]
  %s6 = inlined_call_operand.vmem [shape: f32[1,512], index: 6, kind: input, shape index: {}]
  %s7 = inlined_call_operand.vmem [shape: f32[8,8,128], index: 7, kind: output, shape index: {0}]
  %s8 = inlined_call_operand.vmem [shape: f32[2,8,128], index: 8, kind: output, shape index: {1}]
  %s9 = inlined_call_operand.vmem [shape: f32[2,8,128], index: 9, kind: output, shape index: {2}]
  %10 = xla_tuple %s7, %s8, %s9
  %s11 = sld [smem:[#allocation0]]
  $region81: #{lyrics_generator_forward.6} parent=0
    _
  %s13 = ssub.s32 1, %s11
  %s14 = scalar_select 0, %s13, %s11
  loop: start=0, step=1, limit=4
  $region2: #{lyrics_generator_forward.6} parent=0 // loop_pre_header
    _
  $region3: #{lyrics_generator_forward.6} parent=0 // loop_header
    %s16 = sphi 0, %s20
    %p17 = scmp.ge.s32.totalorder %s16, 4
    %s26 = sphi 0, %s28
    %s29 = sphi 0, %s26
    %s30 = sphi 0, %s29
    %s46 = sphi 0, %s30
    %s50 = sphi 0, %s50
    %s52 = sphi 0, %s50
    %s53 = sphi 0, %s52
    %s67 = sphi 0, %s53
    %s71 = sphi 0, %s71
    %s73 = sphi 0, %s71
    %s74 = sphi 0, %s73
    %s88 = sphi 0, %s74
    %s92 = sphi 0, %s92
    %s94 = sphi 0, %s92
    %s95 = sphi 0, %s94
    %s109 = sphi 0, %s95
    %s113 = sphi 0, %s113
    %s115 = sphi 0, %s113
    %s116 = sphi 0, %s115
    %s130 = sphi 0, %s116
    %s134 = sphi 0, %s134
    %s136 = sphi 0, %s134
    %s137 = sphi 0, %s136
    %s151 = sphi 0, %s137
    %s155 = sphi 0, %s155
    %s157 = sphi 0, %s155
    %s158 = sphi 0, %s157
    %s172 = sphi 0, %s158
    %s178 = sphi 0, %s180
    %s181 = sphi 0, %s178
    %s182 = sphi 0, %s181
    %s198 = sphi 0, %s182
    %s202 = sphi 0, %s202
    %s204 = sphi 0, %s202
    %s205 = sphi 0, %s204
    %s219 = sphi 0, %s205
    %s223 = sphi 0, %s223
    %s225 = sphi 0, %s223
    %s226 = sphi 0, %s225
    %s240 = sphi 0, %s226
  $region4: #{lyrics_generator_forward.6} parent=0 // loop_header_branch
    %19 = sbr.rel (%p17) target = $region8
  $region5: #{lyrics_generator_forward.6} parent=0 // loop_body
    %s21 = ssub.s32 %s16, 1
    %s22 = ssub.s32 %s16, 2
    %s23 = sadd.s32 %s16, 1
    %s24 = ssub.s32 %s16, %s23
    %p25 = scmp.eq.s32.totalorder %s24, 0
    %s27 = sadd.s32 %s26, 1
    %s28 = scalar_select %p25, %s26, %s27
    %p31 = pneg %p25
    %p32 = scmp.eq.s32.totalorder %s16, 1
    %p33 = por %p31, %p32
    %p34 = scmp.ne.s32.totalorder %s26, %s29
    %p35 = scmp.eq.s32.totalorder %s16, 0
    %p36 = por %p34, %p35
    %p37 = scmp.ne.s32.totalorder %s26, %s29
    %p38 = scmp.eq.s32.totalorder %s21, 1
    %p39 = por %p37, %p38
    %p40 = scmp.ne.s32.totalorder %s29, %s30
    %p41 = scmp.eq.s32.totalorder %s21, 0
    %p42 = por %p40, %p41
    %p43 = scmp.ne.s32.totalorder %s29, %s30
    %p44 = scmp.eq.s32.totalorder %s22, 1
    %p45 = por %p43, %p44
    %p47 = scmp.ne.s32.totalorder %s30, %s46
    %p48 = scmp.eq.s32.totalorder %s22, 0
    %p49 = por %p47, %p48
    %s51 = sadd.s32 %s50, 1
    %p54 = scmp.eq.s32.totalorder %s16, 1
    %p55 = scmp.ne.s32.totalorder %s50, %s52
    %p56 = scmp.eq.s32.totalorder %s16, 0
    %p57 = por %p55, %p56
    %p58 = scmp.ne.s32.totalorder %s50, %s52
    %p59 = scmp.eq.s32.totalorder %s21, 1
    %p60 = por %p58, %p59
    %p61 = scmp.ne.s32.totalorder %s52, %s53
    %p62 = scmp.eq.s32.totalorder %s21, 0
    %p63 = por %p61, %p62
    %p64 = scmp.ne.s32.totalorder %s52, %s53
    %p65 = scmp.eq.s32.totalorder %s22, 1
    %p66 = por %p64, %p65
    %p68 = scmp.ne.s32.totalorder %s53, %s67
    %p69 = scmp.eq.s32.totalorder %s22, 0
    %p70 = por %p68, %p69
    %s72 = sadd.s32 %s71, 1
    %p75 = scmp.eq.s32.totalorder %s16, 1
    %p76 = scmp.ne.s32.totalorder %s71, %s73
    %p77 = scmp.eq.s32.totalorder %s16, 0
    %p78 = por %p76, %p77
    %p79 = scmp.ne.s32.totalorder %s71, %s73
    %p80 = scmp.eq.s32.totalorder %s21, 1
    %p81 = por %p79, %p80
    %p82 = scmp.ne.s32.totalorder %s73, %s74
    %p83 = scmp.eq.s32.totalorder %s21, 0
    %p84 = por %p82, %p83
    %p85 = scmp.ne.s32.totalorder %s73, %s74
    %p86 = scmp.eq.s32.totalorder %s22, 1
    %p87 = por %p85, %p86
    %p89 = scmp.ne.s32.totalorder %s74, %s88
    %p90 = scmp.eq.s32.totalorder %s22, 0
    %p91 = por %p89, %p90
    %s93 = sadd.s32 %s92, 1
    %p96 = scmp.eq.s32.totalorder %s16, 1
    %p97 = scmp.ne.s32.totalorder %s92, %s94
    %p98 = scmp.eq.s32.totalorder %s16, 0
    %p99 = por %p97, %p98
    %p100 = scmp.ne.s32.totalorder %s92, %s94
    %p101 = scmp.eq.s32.totalorder %s21, 1
    %p102 = por %p100, %p101
    %p103 = scmp.ne.s32.totalorder %s94, %s95
    %p104 = scmp.eq.s32.totalorder %s21, 0
    %p105 = por %p103, %p104
    %p106 = scmp.ne.s32.totalorder %s94, %s95
    %p107 = scmp.eq.s32.totalorder %s22, 1
    %p108 = por %p106, %p107
    %p110 = scmp.ne.s32.totalorder %s95, %s109
    %p111 = scmp.eq.s32.totalorder %s22, 0
    %p112 = por %p110, %p111
    %s114 = sadd.s32 %s113, 1
    %p117 = scmp.eq.s32.totalorder %s16, 1
    %p118 = scmp.ne.s32.totalorder %s113, %s115
    %p119 = scmp.eq.s32.totalorder %s16, 0
    %p120 = por %p118, %p119
    %p121 = scmp.ne.s32.totalorder %s113, %s115
    %p122 = scmp.eq.s32.totalorder %s21, 1
    %p123 = por %p121, %p122
    %p124 = scmp.ne.s32.totalorder %s115, %s116
    %p125 = scmp.eq.s32.totalorder %s21, 0
    %p126 = por %p124, %p125
    %p127 = scmp.ne.s32.totalorder %s115, %s116
    %p128 = scmp.eq.s32.totalorder %s22, 1
    %p129 = por %p127, %p128
    %p131 = scmp.ne.s32.totalorder %s116, %s130
    %p132 = scmp.eq.s32.totalorder %s22, 0
    %p133 = por %p131, %p132
    %s135 = sadd.s32 %s134, 1
    %p138 = scmp.eq.s32.totalorder %s16, 1
    %p139 = scmp.ne.s32.totalorder %s134, %s136
    %p140 = scmp.eq.s32.totalorder %s16, 0
    %p141 = por %p139, %p140
    %p142 = scmp.ne.s32.totalorder %s134, %s136
    %p143 = scmp.eq.s32.totalorder %s21, 1
    %p144 = por %p142, %p143
    %p145 = scmp.ne.s32.totalorder %s136, %s137
    %p146 = scmp.eq.s32.totalorder %s21, 0
    %p147 = por %p145, %p146
    %p148 = scmp.ne.s32.totalorder %s136, %s137
    %p149 = scmp.eq.s32.totalorder %s22, 1
    %p150 = por %p148, %p149
    %p152 = scmp.ne.s32.totalorder %s137, %s151
    %p153 = scmp.eq.s32.totalorder %s22, 0
    %p154 = por %p152, %p153
    %s156 = sadd.s32 %s155, 1
    %p159 = scmp.eq.s32.totalorder %s16, 1
    %p160 = scmp.ne.s32.totalorder %s155, %s157
    %p161 = scmp.eq.s32.totalorder %s16, 0
    %p162 = por %p160, %p161
    %p163 = scmp.ne.s32.totalorder %s155, %s157
    %p164 = scmp.eq.s32.totalorder %s21, 1
    %p165 = por %p163, %p164
    %p166 = scmp.ne.s32.totalorder %s157, %s158
    %p167 = scmp.eq.s32.totalorder %s21, 0
    %p168 = por %p166, %p167
    %p169 = scmp.ne.s32.totalorder %s157, %s158
    %p170 = scmp.eq.s32.totalorder %s22, 1
    %p171 = por %p169, %p170
    %p173 = scmp.ne.s32.totalorder %s158, %s172
    %p174 = scmp.eq.s32.totalorder %s22, 0
    %p175 = por %p173, %p174
    %s176 = ssub.s32 %s16, %s23
    %p177 = scmp.eq.s32.totalorder %s176, 0
    %s179 = sadd.s32 %s178, 1
    %s180 = scalar_select %p177, %s178, %s179
    %p183 = pneg %p177
    %p184 = scmp.eq.s32.totalorder %s16, 1
    %p185 = por %p183, %p184
    %p186 = scmp.ne.s32.totalorder %s178, %s181
    %p187 = scmp.eq.s32.totalorder %s16, 0
    %p188 = por %p186, %p187
    %p189 = scmp.ne.s32.totalorder %s178, %s181
    %p190 = scmp.eq.s32.totalorder %s21, 1
    %p191 = por %p189, %p190
    %p192 = scmp.ne.s32.totalorder %s181, %s182
    %p193 = scmp.eq.s32.totalorder %s21, 0
    %p194 = por %p192, %p193
    %p195 = scmp.ne.s32.totalorder %s181, %s182
    %p196 = scmp.eq.s32.totalorder %s22, 1
    %p197 = por %p195, %p196
    %p199 = scmp.ne.s32.totalorder %s182, %s198
    %p200 = scmp.eq.s32.totalorder %s22, 0
    %p201 = por %p199, %p200
    %s203 = sadd.s32 %s202, 1
    %p206 = scmp.eq.s32.totalorder %s16, 1
    %p207 = scmp.ne.s32.totalorder %s202, %s204
    %p208 = scmp.eq.s32.totalorder %s16, 0
    %p209 = por %p207, %p208
    %p210 = scmp.ne.s32.totalorder %s202, %s204
    %p211 = scmp.eq.s32.totalorder %s21, 1
    %p212 = por %p210, %p211
    %p213 = scmp.ne.s32.totalorder %s204, %s205
    %p214 = scmp.eq.s32.totalorder %s21, 0
    %p215 = por %p213, %p214
    %p216 = scmp.ne.s32.totalorder %s204, %s205
    %p217 = scmp.eq.s32.totalorder %s22, 1
    %p218 = por %p216, %p217
    %p220 = scmp.ne.s32.totalorder %s205, %s219
    %p221 = scmp.eq.s32.totalorder %s22, 0
    %p222 = por %p220, %p221
    %s224 = sadd.s32 %s223, 1
    %p227 = scmp.eq.s32.totalorder %s16, 1
    %p228 = scmp.ne.s32.totalorder %s223, %s225
    %p229 = scmp.eq.s32.totalorder %s16, 0
    %p230 = por %p228, %p229
    %p231 = scmp.ne.s32.totalorder %s223, %s225
    %p232 = scmp.eq.s32.totalorder %s21, 1
    %p233 = por %p231, %p232
    %p234 = scmp.ne.s32.totalorder %s225, %s226
    %p235 = scmp.eq.s32.totalorder %s21, 0
    %p236 = por %p234, %p235
    %p237 = scmp.ne.s32.totalorder %s225, %s226
    %p238 = scmp.eq.s32.totalorder %s22, 1
    %p239 = por %p237, %p238
    %p241 = scmp.ne.s32.totalorder %s226, %s240
    %p242 = scmp.eq.s32.totalorder %s22, 0
    %p243 = por %p241, %p242
    %p244 = scmp.le.s32.totalorder 1, %s16
    %p245 = scmp.lt.s32.totalorder %s16, 3
    %p246 = pnand %p244, %p245
    %p247 = pneg %p246
    // Predicated region
    $region9: #{lyrics_generator_forward.6} parent=5 // pred_check
      _
    $region10: #{lyrics_generator_forward.6} parent=5 // pred_check_branch
      %249 = sbr.rel (%p246) target = $region12
    $region11: #{lyrics_generator_forward.6} parent=5 // pred_region
      %s250 = ssub.s32 %s16, 1
      // Predicated region
      $region13: #{lyrics_generator_forward.6} parent=11 // pred_check
        %p251 = pneg %p63
      $region14: #{lyrics_generator_forward.6} parent=11 // pred_check_branch
        %253 = sbr.rel (%p251) target = $region16
      $region15: #{lyrics_generator_forward.6} parent=11 // pred_region
        _
      $region16: #{lyrics_generator_forward.6} parent=11 // pred_fallthru
        _
      // Predicated region
      $region17: #{lyrics_generator_forward.6} parent=11 // pred_check
        %p254 = pneg %p84
      $region18: #{lyrics_generator_forward.6} parent=11 // pred_check_branch
        %256 = sbr.rel (%p254) target = $region20
      $region19: #{lyrics_generator_forward.6} parent=11 // pred_region
        _
      $region20: #{lyrics_generator_forward.6} parent=11 // pred_fallthru
        _
      // Predicated region
      $region21: #{lyrics_generator_forward.6} parent=11 // pred_check
        %p257 = pneg %p105
      $region22: #{lyrics_generator_forward.6} parent=11 // pred_check_branch
        %259 = sbr.rel (%p257) target = $region24
      $region23: #{lyrics_generator_forward.6} parent=11 // pred_region
        _
      $region24: #{lyrics_generator_forward.6} parent=11 // pred_fallthru
        _
      // Predicated region
      $region25: #{lyrics_generator_forward.6} parent=11 // pred_check
        %p260 = pneg %p126
      $region26: #{lyrics_generator_forward.6} parent=11 // pred_check_branch
        %262 = sbr.rel (%p260) target = $region28
      $region27: #{lyrics_generator_forward.6} parent=11 // pred_region
        _
      $region28: #{lyrics_generator_forward.6} parent=11 // pred_fallthru
        _
      // Predicated region
      $region29: #{lyrics_generator_forward.6} parent=11 // pred_check
        %p263 = pneg %p147
      $region30: #{lyrics_generator_forward.6} parent=11 // pred_check_branch
        %265 = sbr.rel (%p263) target = $region32
      $region31: #{lyrics_generator_forward.6} parent=11 // pred_region
        _
      $region32: #{lyrics_generator_forward.6} parent=11 // pred_fallthru
        _
      // Predicated region
      $region33: #{lyrics_generator_forward.6} parent=11 // pred_check
        %p266 = pneg %p168
      $region34: #{lyrics_generator_forward.6} parent=11 // pred_check_branch
        %268 = sbr.rel (%p266) target = $region36
      $region35: #{lyrics_generator_forward.6} parent=11 // pred_region
        _
      $region36: #{lyrics_generator_forward.6} parent=11 // pred_fallthru
        _
    $region12: #{lyrics_generator_forward.6} parent=5 // pred_fallthru
      _
    %p269 = scmp.lt.s32.totalorder %s16, 2
    // Predicated region
    $region37: #{lyrics_generator_forward.6} parent=5 // pred_check
      %p270 = pneg %p269
    $region38: #{lyrics_generator_forward.6} parent=5 // pred_check_branch
      %272 = sbr.rel (%p270) target = $region40
    $region39: #{lyrics_generator_forward.6} parent=5 // pred_region
      // Predicated region
      $region41: #{lyrics_generator_forward.6} parent=39 // pred_check
        %p273 = pneg %p36
      $region42: #{lyrics_generator_forward.6} parent=39 // pred_check_branch
        %275 = sbr.rel (%p273) target = $region44
      $region43: #{lyrics_generator_forward.6} parent=39 // pred_region
        %s276 = smul.u32 4, %s16
        %p277 = scmp.lt.s32.totalorder %s276, 7
        %s278 = scalar_select %p277, %s276, 7
        %s279 = smul.addr %s278, 4
        %s280 = smul.addr %s279, 8
        %s281 = scalar_lea.vmem %s0, %s280
        %s282 = smul.u32 4, %s16
      $region44: #{lyrics_generator_forward.6} parent=39 // pred_fallthru
        _
    $region40: #{lyrics_generator_forward.6} parent=5 // pred_fallthru
      _
    %p283 = scmp.le.s32.totalorder 1, %s16
    %p284 = scmp.lt.s32.totalorder %s16, 3
    %p285 = pnand %p283, %p284
    %p286 = pneg %p285
    // Predicated region
    $region45: #{lyrics_generator_forward.6} parent=5 // pred_check
      _
    $region46: #{lyrics_generator_forward.6} parent=5 // pred_check_branch
      %288 = sbr.rel (%p285) target = $region48
    $region47: #{lyrics_generator_forward.6} parent=5 // pred_region
      %s289 = ssub.s32 %s16, 1
      %s290 = smul.u32 4, %s21
      %p291 = scmp.lt.s32.totalorder %s290, 7
      %s292 = scalar_select %p291, %s290, 7
      %s293 = smul.addr %s292, 4
      %s294 = smul.addr %s293, 8
      %s295 = scalar_lea.vmem %s0, %s294
      %p296 = pneg %p42
      %p297 = pneg %p39
      %p298 = pneg %p63
      %p299 = pneg %p60
      %p300 = pneg %p84
      %p301 = pneg %p81
      %p302 = pneg %p105
      %p303 = pneg %p102
      %p304 = pneg %p126
      %p305 = pneg %p123
      %p306 = pneg %p147
      %p307 = pneg %p144
      %p308 = pneg %p168
      %p309 = pneg %p165
      %p310 = pneg %p194
      %p311 = pneg %p191
      %s312 = smul.u32 4, %s21
      %p313 = scmp.lt.s32.totalorder %s312, 7
      %s314 = scalar_select %p313, %s312, 7
      %s315 = smul.addr %s314, 8
      %s316 = scalar_lea.vmem %s7, %s315
      %p317 = pneg %p215
      %p318 = pneg %p212
      %p319 = pneg %p236
      %p320 = pneg %p233
      %s321 = smul.u32 4, %s21
      %p322 = scmp.lt.s32.totalorder %s321, 7
      %s323 = scalar_select %p322, %s321, 7
      %s324 = smul.addr %s323, 4
      %s325 = smul.addr %s324, 8
      %s326 = scalar_lea.vmem %s0, %s325
      %s327 = smul.u32 4, %s21
      %s328 = smul.u32 4, %s21
      %p329 = scmp.lt.s32.totalorder %s328, 7
      %s330 = scalar_select %p329, %s328, 7
      %s331 = smul.addr %s330, 8
      %s332 = scalar_lea.vmem %s7, %s331
      %s333 = smul.u32 4, %s21
      %p334 = scmp.eq.s32.totalorder %s21, 0
      // Predicated region
      $region49: #{lyrics_generator_forward.6} parent=47 // pred_check
        %p335 = pneg %p334
      $region50: #{lyrics_generator_forward.6} parent=47 // pred_check_branch
        %337 = sbr.rel (%p335) target = $region52
      $region51: #{lyrics_generator_forward.6} parent=47 // pred_region
        %v338 = vld [vmem:[%s2] sm:$0xff]
        %v339 = vld [vmem:[%s2 + $0x8] sm:$0xff]
        %340 = vst [vmem:[%s8] sm:$0xff] %v338
        %341 = vst [vmem:[%s8 + $0x8] sm:$0xff] %v339
        %v342 = vld [vmem:[%s3] sm:$0xff]
        %v343 = vld [vmem:[%s3 + $0x8] sm:$0xff]
        %344 = vst [vmem:[%s9] sm:$0xff] %v342
        %345 = vst [vmem:[%s9 + $0x8] sm:$0xff] %v343
      $region52: #{lyrics_generator_forward.6} parent=47 // pred_fallthru
        _
      %v346 = vld [vmem:[%s326] sm:$0xff]
      %v347 = vld [vmem:[%s326 + $0x8] sm:$0xff]
      %v348 = vld [vmem:[%s326 + $0x10] sm:$0xff]
      %v349 = vld [vmem:[%s326 + $0x18] sm:$0xff]
      %v350 = vld [vmem:[%s1] sm:$0xff]
      %v351 = vld [vmem:[%s1 + $0x8] sm:$0xff]
      %v352 = vld [vmem:[%s1 + $0x10] sm:$0xff]
      %v353 = vld [vmem:[%s1 + $0x18] sm:$0xff]
      %v354 = vadd.f32 %v346, %v350
      %v355 = vadd.f32 %v347, %v351
      %v356 = vadd.f32 %v348, %v352
      %v357 = vadd.f32 %v349, %v353
      %v358 = vld [vmem:[%s8] sm:$0xff]
      %v359 = vld [vmem:[%s9] sm:$0xff]
      %v360 = vld [vmem:[%s4] sm:$0xff]
      %v361 = vld [vmem:[%s4 + $0x8] sm:$0xff]
      %v362 = vld [vmem:[%s4 + $0x10] sm:$0xff]
      %v363 = vld [vmem:[%s4 + $0x18] sm:$0xff]
      %v364 = vld [vmem:[%s4 + $0x20] sm:$0xff]
      %v365 = vld [vmem:[%s4 + $0x28] sm:$0xff]
      %v366 = vld [vmem:[%s4 + $0x30] sm:$0xff]
      %v367 = vld [vmem:[%s4 + $0x38] sm:$0xff]
      %v368 = vld [vmem:[%s4 + $0x40] sm:$0xff]
      %v369 = vld [vmem:[%s4 + $0x48] sm:$0xff]
      %v370 = vld [vmem:[%s4 + $0x50] sm:$0xff]
      %v371 = vld [vmem:[%s4 + $0x58] sm:$0xff]
      %v372 = vld [vmem:[%s4 + $0x60] sm:$0xff]
      %v373 = vld [vmem:[%s4 + $0x68] sm:$0xff]
      %v374 = vld [vmem:[%s4 + $0x70] sm:$0xff]
      %v375 = vld [vmem:[%s4 + $0x78] sm:$0xff]
      %v376 = vld [vmem:[%s4 + $0x80] sm:$0xff]
      %v377 = vld [vmem:[%s4 + $0x88] sm:$0xff]
      %v378 = vld [vmem:[%s4 + $0x90] sm:$0xff]
      %v379 = vld [vmem:[%s4 + $0x98] sm:$0xff]
      %v380 = vld [vmem:[%s4 + $0xa0] sm:$0xff]
      %v381 = vld [vmem:[%s4 + $0xa8] sm:$0xff]
      %v382 = vld [vmem:[%s4 + $0xb0] sm:$0xff]
      %v383 = vld [vmem:[%s4 + $0xb8] sm:$0xff]
      %v384 = vld [vmem:[%s4 + $0xc0] sm:$0xff]
      %v385 = vld [vmem:[%s4 + $0xc8] sm:$0xff]
      %v386 = vld [vmem:[%s4 + $0xd0] sm:$0xff]
      %v387 = vld [vmem:[%s4 + $0xd8] sm:$0xff]
      %v388 = vld [vmem:[%s4 + $0xe0] sm:$0xff]
      %v389 = vld [vmem:[%s4 + $0xe8] sm:$0xff]
      %v390 = vld [vmem:[%s4 + $0xf0] sm:$0xff]
      %v391 = vld [vmem:[%s4 + $0xf8] sm:$0xff]
      %v392 = vld [vmem:[%s4 + $0x100] sm:$0xff]
      %v393 = vld [vmem:[%s4 + $0x108] sm:$0xff]
      %v394 = vld [vmem:[%s4 + $0x110] sm:$0xff]
      %v395 = vld [vmem:[%s4 + $0x118] sm:$0xff]
      %v396 = vld [vmem:[%s4 + $0x120] sm:$0xff]
      %v397 = vld [vmem:[%s4 + $0x128] sm:$0xff]
      %v398 = vld [vmem:[%s4 + $0x130] sm:$0xff]
      %v399 = vld [vmem:[%s4 + $0x138] sm:$0xff]
      %v400 = vld [vmem:[%s4 + $0x140] sm:$0xff]
      %v401 = vld [vmem:[%s4 + $0x148] sm:$0xff]
      %v402 = vld [vmem:[%s4 + $0x150] sm:$0xff]
      %v403 = vld [vmem:[%s4 + $0x158] sm:$0xff]
      %v404 = vld [vmem:[%s4 + $0x160] sm:$0xff]
      %v405 = vld [vmem:[%s4 + $0x168] sm:$0xff]
      %v406 = vld [vmem:[%s4 + $0x170] sm:$0xff]
      %v407 = vld [vmem:[%s4 + $0x178] sm:$0xff]
      %v408 = vld [vmem:[%s4 + $0x180] sm:$0xff]
      %v409 = vld [vmem:[%s4 + $0x188] sm:$0xff]
      %v410 = vld [vmem:[%s4 + $0x190] sm:$0xff]
      %v411 = vld [vmem:[%s4 + $0x198] sm:$0xff]
      %v412 = vld [vmem:[%s4 + $0x1a0] sm:$0xff]
      %v413 = vld [vmem:[%s4 + $0x1a8] sm:$0xff]
      %v414 = vld [vmem:[%s4 + $0x1b0] sm:$0xff]
      %v415 = vld [vmem:[%s4 + $0x1b8] sm:$0xff]
      %v416 = vld [vmem:[%s4 + $0x1c0] sm:$0xff]
      %v417 = vld [vmem:[%s4 + $0x1c8] sm:$0xff]
      %v418 = vld [vmem:[%s4 + $0x1d0] sm:$0xff]
      %v419 = vld [vmem:[%s4 + $0x1d8] sm:$0xff]
      %v420 = vld [vmem:[%s4 + $0x1e0] sm:$0xff]
      %v421 = vld [vmem:[%s4 + $0x1e8] sm:$0xff]
      %v422 = vld [vmem:[%s4 + $0x1f0] sm:$0xff]
      %v423 = vld [vmem:[%s4 + $0x1f8] sm:$0xff]
      %424 = vmatpush.msra.mxu0 %v420
      %425 = vmatpush.msra.mxu0 %v416
      %426 = vmatpush.msra.mxu0 %v412
      %427 = vmatpush.msra.mxu0 %v408
      %428 = vmatpush.msra.mxu0 %v404
      %429 = vmatpush.msra.mxu0 %v400
      %430 = vmatpush.msra.mxu0 %v396
      %431 = vmatpush.msra.mxu0 %v392
      %432 = vmatpush.msra.mxu0 %v388
      %433 = vmatpush.msra.mxu0 %v384
      %434 = vmatpush.msra.mxu0 %v380
      %435 = vmatpush.msra.mxu0 %v376
      %436 = vmatpush.msra.mxu0 %v372
      %437 = vmatpush.msra.mxu0 %v368
      %438 = vmatpush.msra.mxu0 %v364
      %439 = vmatpush.msra.mxu0 %v360
      %440 = vmatmul.f32.gmra.mxu0 %v358
      %v441 = vpop.f32.mrf.mxu0
      %v442 = vadd.f32 0.0, %v441
      %443 = vdwg.mxu0
      %444 = vmatpush.msra.mxu0 %v421
      %445 = vmatpush.msra.mxu0 %v417
      %446 = vmatpush.msra.mxu0 %v413
      %447 = vmatpush.msra.mxu0 %v409
      %448 = vmatpush.msra.mxu0 %v405
      %449 = vmatpush.msra.mxu0 %v401
      %450 = vmatpush.msra.mxu0 %v397
      %451 = vmatpush.msra.mxu0 %v393
      %452 = vmatpush.msra.mxu0 %v389
      %453 = vmatpush.msra.mxu0 %v385
      %454 = vmatpush.msra.mxu0 %v381
      %455 = vmatpush.msra.mxu0 %v377
      %456 = vmatpush.msra.mxu0 %v373
      %457 = vmatpush.msra.mxu0 %v369
      %458 = vmatpush.msra.mxu0 %v365
      %459 = vmatpush.msra.mxu0 %v361
      %460 = vmatmul.f32.gmra.mxu0 %v358
      %v461 = vpop.f32.mrf.mxu0
      %v462 = vadd.f32 0.0, %v461
      %463 = vdwg.mxu0
      %464 = vmatpush.msra.mxu0 %v422
      %465 = vmatpush.msra.mxu0 %v418
      %466 = vmatpush.msra.mxu0 %v414
      %467 = vmatpush.msra.mxu0 %v410
      %468 = vmatpush.msra.mxu0 %v406
      %469 = vmatpush.msra.mxu0 %v402
      %470 = vmatpush.msra.mxu0 %v398
      %471 = vmatpush.msra.mxu0 %v394
      %472 = vmatpush.msra.mxu0 %v390
      %473 = vmatpush.msra.mxu0 %v386
      %474 = vmatpush.msra.mxu0 %v382
      %475 = vmatpush.msra.mxu0 %v378
      %476 = vmatpush.msra.mxu0 %v374
      %477 = vmatpush.msra.mxu0 %v370
      %478 = vmatpush.msra.mxu0 %v366
      %479 = vmatpush.msra.mxu0 %v362
      %480 = vmatmul.f32.gmra.mxu0 %v358
      %v481 = vpop.f32.mrf.mxu0
      %v482 = vadd.f32 0.0, %v481
      %483 = vdwg.mxu0
      %484 = vmatpush.msra.mxu0 %v423
      %485 = vmatpush.msra.mxu0 %v419
      %486 = vmatpush.msra.mxu0 %v415
      %487 = vmatpush.msra.mxu0 %v411
      %488 = vmatpush.msra.mxu0 %v407
      %489 = vmatpush.msra.mxu0 %v403
      %490 = vmatpush.msra.mxu0 %v399
      %491 = vmatpush.msra.mxu0 %v395
      %492 = vmatpush.msra.mxu0 %v391
      %493 = vmatpush.msra.mxu0 %v387
      %494 = vmatpush.msra.mxu0 %v383
      %495 = vmatpush.msra.mxu0 %v379
      %496 = vmatpush.msra.mxu0 %v375
      %497 = vmatpush.msra.mxu0 %v371
      %498 = vmatpush.msra.mxu0 %v367
      %499 = vmatpush.msra.mxu0 %v363
      %500 = vmatmul.f32.gmra.mxu0 %v358
      %v501 = vpop.f32.mrf.mxu0
      %v502 = vadd.f32 0.0, %v501
      %503 = vdwg.mxu0
      %v504 = vadd.f32 %v354, %v442
      %v505 = vadd.f32 %v355, %v462
      %v506 = vadd.f32 %v356, %v482
      %v507 = vadd.f32 %v357, %v502
      %v508 = vxor.u32 %v504, 2147483648
      %v509 = vmul.f32 %v508, 1.442695
      %v510 = vpow.pop %v509
      %v511 = vadd.f32 %v510, 1.0
      %v512 = vrcp.pop %v511
      %v513 = vmul.f32 %v511, %v512
      %v514 = vsub.f32 1.0, %v513
      %v515 = vmul.f32 %v512, %v514
      %v516 = vadd.f32 %v512, %v515
      %vm517 = vweird.f32 %v511
      %vm518 = vweird.f32 %v512
      %vm519 = vmor %vm517, %vm518
      %v520 = vsel %vm519, %v512, %v516
      %v521 = vand.u32 2147483647, %v511
      %vm522 = vcmp.eq.f32.partialorder %v521, 8.507059e+37
      %v523 = vand.u32 %v511, 2147483648
      %v524 = vor.u32 1.1754944e-38, %v523
      %v525 = vsel %vm522, %v524, %v520
      %v526 = vmul.f32 1.0, %v525
      %v527 = vxor.u32 %v505, 2147483648
      %v528 = vmul.f32 %v527, 1.442695
      %v529 = vpow.pop %v528
      %v530 = vadd.f32 %v529, 1.0
      %v531 = vrcp.pop %v530
      %v532 = vmul.f32 %v530, %v531
      %v533 = vsub.f32 1.0, %v532
      %v534 = vmul.f32 %v531, %v533
      %v535 = vadd.f32 %v531, %v534
      %vm536 = vweird.f32 %v530
      %vm537 = vweird.f32 %v531
      %vm538 = vmor %vm536, %vm537
      %v539 = vsel %vm538, %v531, %v535
      %v540 = vand.u32 2147483647, %v530
      %vm541 = vcmp.eq.f32.partialorder %v540, 8.507059e+37
      %v542 = vand.u32 %v530, 2147483648
      %v543 = vor.u32 1.1754944e-38, %v542
      %v544 = vsel %vm541, %v543, %v539
      %v545 = vmul.f32 1.0, %v544
      %v546 = vtanh.pop %v506
      %v547 = vxor.u32 %v507, 2147483648
      %v548 = vmul.f32 %v547, 1.442695
      %v549 = vpow.pop %v548
      %v550 = vadd.f32 %v549, 1.0
      %v551 = vrcp.pop %v550
      %v552 = vmul.f32 %v550, %v551
      %v553 = vsub.f32 1.0, %v552
      %v554 = vmul.f32 %v551, %v553
      %v555 = vadd.f32 %v551, %v554
      %vm556 = vweird.f32 %v550
      %vm557 = vweird.f32 %v551
      %vm558 = vmor %vm556, %vm557
      %v559 = vsel %vm558, %v551, %v555
      %v560 = vand.u32 2147483647, %v550
      %vm561 = vcmp.eq.f32.partialorder %v560, 8.507059e+37
      %v562 = vand.u32 %v550, 2147483648
      %v563 = vor.u32 1.1754944e-38, %v562
      %v564 = vsel %vm561, %v563, %v559
      %v565 = vmul.f32 1.0, %v564
      %v566 = vmul.f32 %v545, %v359
      %v567 = vmul.f32 %v526, %v546
      %v568 = vadd.f32 %v566, %v567
      %v569 = vtanh.pop %v568
      %v570 = vmul.f32 %v565, %v569
      %s571 = scalar_lea.vmem %s8, 8
      %v572 = vld [vmem:[%s571] sm:$0xff]
      %s573 = scalar_lea.vmem %s9, 8
      %v574 = vld [vmem:[%s573] sm:$0xff]
      %v575 = vld [vmem:[%s5] sm:$0xff]
      %v576 = vld [vmem:[%s5 + $0x8] sm:$0xff]
      %v577 = vld [vmem:[%s5 + $0x10] sm:$0xff]
      %v578 = vld [vmem:[%s5 + $0x18] sm:$0xff]
      %v579 = vld [vmem:[%s5 + $0x20] sm:$0xff]
      %v580 = vld [vmem:[%s5 + $0x28] sm:$0xff]
      %v581 = vld [vmem:[%s5 + $0x30] sm:$0xff]
      %v582 = vld [vmem:[%s5 + $0x38] sm:$0xff]
      %v583 = vld [vmem:[%s5 + $0x40] sm:$0xff]
      %v584 = vld [vmem:[%s5 + $0x48] sm:$0xff]
      %v585 = vld [vmem:[%s5 + $0x50] sm:$0xff]
      %v586 = vld [vmem:[%s5 + $0x58] sm:$0xff]
      %v587 = vld [vmem:[%s5 + $0x60] sm:$0xff]
      %v588 = vld [vmem:[%s5 + $0x68] sm:$0xff]
      %v589 = vld [vmem:[%s5 + $0x70] sm:$0xff]
      %v590 = vld [vmem:[%s5 + $0x78] sm:$0xff]
      %v591 = vld [vmem:[%s5 + $0x80] sm:$0xff]
      %v592 = vld [vmem:[%s5 + $0x88] sm:$0xff]
      %v593 = vld [vmem:[%s5 + $0x90] sm:$0xff]
      %v594 = vld [vmem:[%s5 + $0x98] sm:$0xff]
      %v595 = vld [vmem:[%s5 + $0xa0] sm:$0xff]
      %v596 = vld [vmem:[%s5 + $0xa8] sm:$0xff]
      %v597 = vld [vmem:[%s5 + $0xb0] sm:$0xff]
      %v598 = vld [vmem:[%s5 + $0xb8] sm:$0xff]
      %v599 = vld [vmem:[%s5 + $0xc0] sm:$0xff]
      %v600 = vld [vmem:[%s5 + $0xc8] sm:$0xff]
      %v601 = vld [vmem:[%s5 + $0xd0] sm:$0xff]
      %v602 = vld [vmem:[%s5 + $0xd8] sm:$0xff]
      %v603 = vld [vmem:[%s5 + $0xe0] sm:$0xff]
      %v604 = vld [vmem:[%s5 + $0xe8] sm:$0xff]
      %v605 = vld [vmem:[%s5 + $0xf0] sm:$0xff]
      %v606 = vld [vmem:[%s5 + $0xf8] sm:$0xff]
      %v607 = vld [vmem:[%s5 + $0x100] sm:$0xff]
      %v608 = vld [vmem:[%s5 + $0x108] sm:$0xff]
      %v609 = vld [vmem:[%s5 + $0x110] sm:$0xff]
      %v610 = vld [vmem:[%s5 + $0x118] sm:$0xff]
      %v611 = vld [vmem:[%s5 + $0x120] sm:$0xff]
      %v612 = vld [vmem:[%s5 + $0x128] sm:$0xff]
      %v613 = vld [vmem:[%s5 + $0x130] sm:$0xff]
      %v614 = vld [vmem:[%s5 + $0x138] sm:$0xff]
      %v615 = vld [vmem:[%s5 + $0x140] sm:$0xff]
      %v616 = vld [vmem:[%s5 + $0x148] sm:$0xff]
      %v617 = vld [vmem:[%s5 + $0x150] sm:$0xff]
      %v618 = vld [vmem:[%s5 + $0x158] sm:$0xff]
      %v619 = vld [vmem:[%s5 + $0x160] sm:$0xff]
      %v620 = vld [vmem:[%s5 + $0x168] sm:$0xff]
      %v621 = vld [vmem:[%s5 + $0x170] sm:$0xff]
      %v622 = vld [vmem:[%s5 + $0x178] sm:$0xff]
      %v623 = vld [vmem:[%s5 + $0x180] sm:$0xff]
      %v624 = vld [vmem:[%s5 + $0x188] sm:$0xff]
      %v625 = vld [vmem:[%s5 + $0x190] sm:$0xff]
      %v626 = vld [vmem:[%s5 + $0x198] sm:$0xff]
      %v627 = vld [vmem:[%s5 + $0x1a0] sm:$0xff]
      %v628 = vld [vmem:[%s5 + $0x1a8] sm:$0xff]
      %v629 = vld [vmem:[%s5 + $0x1b0] sm:$0xff]
      %v630 = vld [vmem:[%s5 + $0x1b8] sm:$0xff]
      %v631 = vld [vmem:[%s5 + $0x1c0] sm:$0xff]
      %v632 = vld [vmem:[%s5 + $0x1c8] sm:$0xff]
      %v633 = vld [vmem:[%s5 + $0x1d0] sm:$0xff]
      %v634 = vld [vmem:[%s5 + $0x1d8] sm:$0xff]
      %v635 = vld [vmem:[%s5 + $0x1e0] sm:$0xff]
      %v636 = vld [vmem:[%s5 + $0x1e8] sm:$0xff]
      %v637 = vld [vmem:[%s5 + $0x1f0] sm:$0xff]
      %v638 = vld [vmem:[%s5 + $0x1f8] sm:$0xff]
      %v639 = vld [vmem:[%s5 + $0x200] sm:$0xff]
      %v640 = vld [vmem:[%s5 + $0x208] sm:$0xff]
      %v641 = vld [vmem:[%s5 + $0x210] sm:$0xff]
      %v642 = vld [vmem:[%s5 + $0x218] sm:$0xff]
      %v643 = vld [vmem:[%s5 + $0x220] sm:$0xff]
      %v644 = vld [vmem:[%s5 + $0x228] sm:$0xff]
      %v645 = vld [vmem:[%s5 + $0x230] sm:$0xff]
      %v646 = vld [vmem:[%s5 + $0x238] sm:$0xff]
      %v647 = vld [vmem:[%s5 + $0x240] sm:$0xff]
      %v648 = vld [vmem:[%s5 + $0x248] sm:$0xff]
      %v649 = vld [vmem:[%s5 + $0x250] sm:$0xff]
      %v650 = vld [vmem:[%s5 + $0x258] sm:$0xff]
      %v651 = vld [vmem:[%s5 + $0x260] sm:$0xff]
      %v652 = vld [vmem:[%s5 + $0x268] sm:$0xff]
      %v653 = vld [vmem:[%s5 + $0x270] sm:$0xff]
      %v654 = vld [vmem:[%s5 + $0x278] sm:$0xff]
      %v655 = vld [vmem:[%s5 + $0x280] sm:$0xff]
      %v656 = vld [vmem:[%s5 + $0x288] sm:$0xff]
      %v657 = vld [vmem:[%s5 + $0x290] sm:$0xff]
      %v658 = vld [vmem:[%s5 + $0x298] sm:$0xff]
      %v659 = vld [vmem:[%s5 + $0x2a0] sm:$0xff]
      %v660 = vld [vmem:[%s5 + $0x2a8] sm:$0xff]
      %v661 = vld [vmem:[%s5 + $0x2b0] sm:$0xff]
      %v662 = vld [vmem:[%s5 + $0x2b8] sm:$0xff]
      %v663 = vld [vmem:[%s5 + $0x2c0] sm:$0xff]
      %v664 = vld [vmem:[%s5 + $0x2c8] sm:$0xff]
      %v665 = vld [vmem:[%s5 + $0x2d0] sm:$0xff]
      %v666 = vld [vmem:[%s5 + $0x2d8] sm:$0xff]
      %v667 = vld [vmem:[%s5 + $0x2e0] sm:$0xff]
      %v668 = vld [vmem:[%s5 + $0x2e8] sm:$0xff]
      %v669 = vld [vmem:[%s5 + $0x2f0] sm:$0xff]
      %v670 = vld [vmem:[%s5 + $0x2f8] sm:$0xff]
      %v671 = vld [vmem:[%s5 + $0x300] sm:$0xff]
      %v672 = vld [vmem:[%s5 + $0x308] sm:$0xff]
      %v673 = vld [vmem:[%s5 + $0x310] sm:$0xff]
      %v674 = vld [vmem:[%s5 + $0x318] sm:$0xff]
      %v675 = vld [vmem:[%s5 + $0x320] sm:$0xff]
      %v676 = vld [vmem:[%s5 + $0x328] sm:$0xff]
      %v677 = vld [vmem:[%s5 + $0x330] sm:$0xff]
      %v678 = vld [vmem:[%s5 + $0x338] sm:$0xff]
      %v679 = vld [vmem:[%s5 + $0x340] sm:$0xff]
      %v680 = vld [vmem:[%s5 + $0x348] sm:$0xff]
      %v681 = vld [vmem:[%s5 + $0x350] sm:$0xff]
      %v682 = vld [vmem:[%s5 + $0x358] sm:$0xff]
      %v683 = vld [vmem:[%s5 + $0x360] sm:$0xff]
      %v684 = vld [vmem:[%s5 + $0x368] sm:$0xff]
      %v685 = vld [vmem:[%s5 + $0x370] sm:$0xff]
      %v686 = vld [vmem:[%s5 + $0x378] sm:$0xff]
      %v687 = vld [vmem:[%s5 + $0x380] sm:$0xff]
      %v688 = vld [vmem:[%s5 + $0x388] sm:$0xff]
      %v689 = vld [vmem:[%s5 + $0x390] sm:$0xff]
      %v690 = vld [vmem:[%s5 + $0x398] sm:$0xff]
      %v691 = vld [vmem:[%s5 + $0x3a0] sm:$0xff]
      %v692 = vld [vmem:[%s5 + $0x3a8] sm:$0xff]
      %v693 = vld [vmem:[%s5 + $0x3b0] sm:$0xff]
      %v694 = vld [vmem:[%s5 + $0x3b8] sm:$0xff]
      %v695 = vld [vmem:[%s5 + $0x3c0] sm:$0xff]
      %v696 = vld [vmem:[%s5 + $0x3c8] sm:$0xff]
      %v697 = vld [vmem:[%s5 + $0x3d0] sm:$0xff]
      %v698 = vld [vmem:[%s5 + $0x3d8] sm:$0xff]
      %v699 = vld [vmem:[%s5 + $0x3e0] sm:$0xff]
      %v700 = vld [vmem:[%s5 + $0x3e8] sm:$0xff]
      %v701 = vld [vmem:[%s5 + $0x3f0] sm:$0xff]
      %v702 = vld [vmem:[%s5 + $0x3f8] sm:$0xff]
      %v703 = vld [vmem:[%s6] sm:$0xf]
      %v705 = vperm.slane %v703, 0
      %v706 = vperm.slane %v703, 1
      %v707 = vperm.slane %v703, 2
      %v708 = vperm.slane %v703, 3
      %713 = vmatpush.msra.mxu0 %v635
      %714 = vmatpush.msra.mxu0 %v631
      %715 = vmatpush.msra.mxu0 %v627
      %716 = vmatpush.msra.mxu0 %v623
      %717 = vmatpush.msra.mxu0 %v619
      %718 = vmatpush.msra.mxu0 %v615
      %719 = vmatpush.msra.mxu0 %v611
      %720 = vmatpush.msra.mxu0 %v607
      %721 = vmatpush.msra.mxu0 %v603
      %722 = vmatpush.msra.mxu0 %v599
      %723 = vmatpush.msra.mxu0 %v595
      %724 = vmatpush.msra.mxu0 %v591
      %725 = vmatpush.msra.mxu0 %v587
      %726 = vmatpush.msra.mxu0 %v583
      %727 = vmatpush.msra.mxu0 %v579
      %728 = vmatpush.msra.mxu0 %v575
      %729 = vmatmul.f32.gmra.mxu0 %v570
      %v730 = vpop.f32.mrf.mxu0
      %v731 = vadd.f32 %v705, %v730
      %732 = vdwg.mxu0
      %733 = vmatpush.msra.mxu0 %v699
      %734 = vmatpush.msra.mxu0 %v695
      %735 = vmatpush.msra.mxu0 %v691
      %736 = vmatpush.msra.mxu0 %v687
      %737 = vmatpush.msra.mxu0 %v683
      %738 = vmatpush.msra.mxu0 %v679
      %739 = vmatpush.msra.mxu0 %v675
      %740 = vmatpush.msra.mxu0 %v671
      %741 = vmatpush.msra.mxu0 %v667
      %742 = vmatpush.msra.mxu0 %v663
      %743 = vmatpush.msra.mxu0 %v659
      %744 = vmatpush.msra.mxu0 %v655
      %745 = vmatpush.msra.mxu0 %v651
      %746 = vmatpush.msra.mxu0 %v647
      %747 = vmatpush.msra.mxu0 %v643
      %748 = vmatpush.msra.mxu0 %v639
      %749 = vmatmul.f32.gmra.mxu0 %v572
      %v750 = vpop.f32.mrf.mxu0
      %v751 = vadd.f32 %v731, %v750
      %752 = vdwg.mxu0
      %753 = vmatpush.msra.mxu0 %v636
      %754 = vmatpush.msra.mxu0 %v632
      %755 = vmatpush.msra.mxu0 %v628
      %756 = vmatpush.msra.mxu0 %v624
      %757 = vmatpush.msra.mxu0 %v620
      %758 = vmatpush.msra.mxu0 %v616
      %759 = vmatpush.msra.mxu0 %v612
      %760 = vmatpush.msra.mxu0 %v608
      %761 = vmatpush.msra.mxu0 %v604
      %762 = vmatpush.msra.mxu0 %v600
      %763 = vmatpush.msra.mxu0 %v596
      %764 = vmatpush.msra.mxu0 %v592
      %765 = vmatpush.msra.mxu0 %v588
      %766 = vmatpush.msra.mxu0 %v584
      %767 = vmatpush.msra.mxu0 %v580
      %768 = vmatpush.msra.mxu0 %v576
      %769 = vmatmul.f32.gmra.mxu0 %v570
      %v770 = vpop.f32.mrf.mxu0
      %v771 = vadd.f32 %v706, %v770
      %772 = vdwg.mxu0
      %773 = vmatpush.msra.mxu0 %v700
      %774 = vmatpush.msra.mxu0 %v696
      %775 = vmatpush.msra.mxu0 %v692
      %776 = vmatpush.msra.mxu0 %v688
      %777 = vmatpush.msra.mxu0 %v684
      %778 = vmatpush.msra.mxu0 %v680
      %779 = vmatpush.msra.mxu0 %v676
      %780 = vmatpush.msra.mxu0 %v672
      %781 = vmatpush.msra.mxu0 %v668
      %782 = vmatpush.msra.mxu0 %v664
      %783 = vmatpush.msra.mxu0 %v660
      %784 = vmatpush.msra.mxu0 %v656
      %785 = vmatpush.msra.mxu0 %v652
      %786 = vmatpush.msra.mxu0 %v648
      %787 = vmatpush.msra.mxu0 %v644
      %788 = vmatpush.msra.mxu0 %v640
      %789 = vmatmul.f32.gmra.mxu0 %v572
      %v790 = vpop.f32.mrf.mxu0
      %v791 = vadd.f32 %v771, %v790
      %792 = vdwg.mxu0
      %793 = vmatpush.msra.mxu0 %v637
      %794 = vmatpush.msra.mxu0 %v633
      %795 = vmatpush.msra.mxu0 %v629
      %796 = vmatpush.msra.mxu0 %v625
      %797 = vmatpush.msra.mxu0 %v621
      %798 = vmatpush.msra.mxu0 %v617
      %799 = vmatpush.msra.mxu0 %v613
      %800 = vmatpush.msra.mxu0 %v609
      %801 = vmatpush.msra.mxu0 %v605
      %802 = vmatpush.msra.mxu0 %v601
      %803 = vmatpush.msra.mxu0 %v597
      %804 = vmatpush.msra.mxu0 %v593
      %805 = vmatpush.msra.mxu0 %v589
      %806 = vmatpush.msra.mxu0 %v585
      %807 = vmatpush.msra.mxu0 %v581
      %808 = vmatpush.msra.mxu0 %v577
      %809 = vmatmul.f32.gmra.mxu0 %v570
      %v810 = vpop.f32.mrf.mxu0
      %v811 = vadd.f32 %v707, %v810
      %812 = vdwg.mxu0
      %813 = vmatpush.msra.mxu0 %v701
      %814 = vmatpush.msra.mxu0 %v697
      %815 = vmatpush.msra.mxu0 %v693
      %816 = vmatpush.msra.mxu0 %v689
      %817 = vmatpush.msra.mxu0 %v685
      %818 = vmatpush.msra.mxu0 %v681
      %819 = vmatpush.msra.mxu0 %v677
      %820 = vmatpush.msra.mxu0 %v673
      %821 = vmatpush.msra.mxu0 %v669
      %822 = vmatpush.msra.mxu0 %v665
      %823 = vmatpush.msra.mxu0 %v661
      %824 = vmatpush.msra.mxu0 %v657
      %825 = vmatpush.msra.mxu0 %v653
      %826 = vmatpush.msra.mxu0 %v649
      %827 = vmatpush.msra.mxu0 %v645
      %828 = vmatpush.msra.mxu0 %v641
      %829 = vmatmul.f32.gmra.mxu0 %v572
      %v830 = vpop.f32.mrf.mxu0
      %v831 = vadd.f32 %v811, %v830
      %832 = vdwg.mxu0
      %833 = vmatpush.msra.mxu0 %v638
      %834 = vmatpush.msra.mxu0 %v634
      %835 = vmatpush.msra.mxu0 %v630
      %836 = vmatpush.msra.mxu0 %v626
      %837 = vmatpush.msra.mxu0 %v622
      %838 = vmatpush.msra.mxu0 %v618
      %839 = vmatpush.msra.mxu0 %v614
      %840 = vmatpush.msra.mxu0 %v610
      %841 = vmatpush.msra.mxu0 %v606
      %842 = vmatpush.msra.mxu0 %v602
      %843 = vmatpush.msra.mxu0 %v598
      %844 = vmatpush.msra.mxu0 %v594
      %845 = vmatpush.msra.mxu0 %v590
      %846 = vmatpush.msra.mxu0 %v586
      %847 = vmatpush.msra.mxu0 %v582
      %848 = vmatpush.msra.mxu0 %v578
      %849 = vmatmul.f32.gmra.mxu0 %v570
      %v850 = vpop.f32.mrf.mxu0
      %v851 = vadd.f32 %v708, %v850
      %852 = vdwg.mxu0
      %853 = vmatpush.msra.mxu0 %v702
      %854 = vmatpush.msra.mxu0 %v698
      %855 = vmatpush.msra.mxu0 %v694
      %856 = vmatpush.msra.mxu0 %v690
      %857 = vmatpush.msra.mxu0 %v686
      %858 = vmatpush.msra.mxu0 %v682
      %859 = vmatpush.msra.mxu0 %v678
      %860 = vmatpush.msra.mxu0 %v674
      %861 = vmatpush.msra.mxu0 %v670
      %862 = vmatpush.msra.mxu0 %v666
      %863 = vmatpush.msra.mxu0 %v662
      %864 = vmatpush.msra.mxu0 %v658
      %865 = vmatpush.msra.mxu0 %v654
      %866 = vmatpush.msra.mxu0 %v650
      %867 = vmatpush.msra.mxu0 %v646
      %868 = vmatpush.msra.mxu0 %v642
      %869 = vmatmul.f32.gmra.mxu0 %v572
      %v870 = vpop.f32.mrf.mxu0
      %v871 = vadd.f32 %v851, %v870
      %872 = vdwg.mxu0
      %v873 = vxor.u32 %v751, 2147483648
      %v874 = vmul.f32 %v873, 1.442695
      %v875 = vpow.pop %v874
      %v876 = vadd.f32 %v875, 1.0
      %v877 = vrcp.pop %v876
      %v878 = vmul.f32 %v876, %v877
      %v879 = vsub.f32 1.0, %v878
      %v880 = vmul.f32 %v877, %v879
      %v881 = vadd.f32 %v877, %v880
      %vm882 = vweird.f32 %v876
      %vm883 = vweird.f32 %v877
      %vm884 = vmor %vm882, %vm883
      %v885 = vsel %vm884, %v877, %v881
      %v886 = vand.u32 2147483647, %v876
      %vm887 = vcmp.eq.f32.partialorder %v886, 8.507059e+37
      %v888 = vand.u32 %v876, 2147483648
      %v889 = vor.u32 1.1754944e-38, %v888
      %v890 = vsel %vm887, %v889, %v885
      %v891 = vmul.f32 1.0, %v890
      %v892 = vxor.u32 %v791, 2147483648
      %v893 = vmul.f32 %v892, 1.442695
      %v894 = vpow.pop %v893
      %v895 = vadd.f32 %v894, 1.0
      %v896 = vrcp.pop %v895
      %v897 = vmul.f32 %v895, %v896
      %v898 = vsub.f32 1.0, %v897
      %v899 = vmul.f32 %v896, %v898
      %v900 = vadd.f32 %v896, %v899
      %vm901 = vweird.f32 %v895
      %vm902 = vweird.f32 %v896
      %vm903 = vmor %vm901, %vm902
      %v904 = vsel %vm903, %v896, %v900
      %v905 = vand.u32 2147483647, %v895
      %vm906 = vcmp.eq.f32.partialorder %v905, 8.507059e+37
      %v907 = vand.u32 %v895, 2147483648
      %v908 = vor.u32 1.1754944e-38, %v907
      %v909 = vsel %vm906, %v908, %v904
      %v910 = vmul.f32 1.0, %v909
      %v911 = vtanh.pop %v831
      %v912 = vxor.u32 %v871, 2147483648
      %v913 = vmul.f32 %v912, 1.442695
      %v914 = vpow.pop %v913
      %v915 = vadd.f32 %v914, 1.0
      %v916 = vrcp.pop %v915
      %v917 = vmul.f32 %v915, %v916
      %v918 = vsub.f32 1.0, %v917
      %v919 = vmul.f32 %v916, %v918
      %v920 = vadd.f32 %v916, %v919
      %vm921 = vweird.f32 %v915
      %vm922 = vweird.f32 %v916
      %vm923 = vmor %vm921, %vm922
      %v924 = vsel %vm923, %v916, %v920
      %v925 = vand.u32 2147483647, %v915
      %vm926 = vcmp.eq.f32.partialorder %v925, 8.507059e+37
      %v927 = vand.u32 %v915, 2147483648
      %v928 = vor.u32 1.1754944e-38, %v927
      %v929 = vsel %vm926, %v928, %v924
      %v930 = vmul.f32 1.0, %v929
      %v931 = vmul.f32 %v910, %v574
      %v932 = vmul.f32 %v891, %v911
      %v933 = vadd.f32 %v931, %v932
      %v934 = vtanh.pop %v933
      %v935 = vmul.f32 %v930, %v934
      %936 = vst [vmem:[%s332] sm:$0xff] %v935
      %937 = vst [vmem:[%s8] sm:$0xff] %v570
      %938 = vst [vmem:[%s9] sm:$0xff] %v568
      %939 = vst [vmem:[%s571] sm:$0xff] %v935
      %940 = vst [vmem:[%s573] sm:$0xff] %v933
      %s941 = scalar_lea.vmem %s326, 32
      %v942 = vld [vmem:[%s941] sm:$0xff]
      %v943 = vld [vmem:[%s941 + $0x8] sm:$0xff]
      %v944 = vld [vmem:[%s941 + $0x10] sm:$0xff]
      %v945 = vld [vmem:[%s941 + $0x18] sm:$0xff]
      %v946 = vld [vmem:[%s1] sm:$0xff]
      %v947 = vld [vmem:[%s1 + $0x8] sm:$0xff]
      %v948 = vld [vmem:[%s1 + $0x10] sm:$0xff]
      %v949 = vld [vmem:[%s1 + $0x18] sm:$0xff]
      %v950 = vadd.f32 %v942, %v946
      %v951 = vadd.f32 %v943, %v947
      %v952 = vadd.f32 %v944, %v948
      %v953 = vadd.f32 %v945, %v949
      %v954 = vld [vmem:[%s8] sm:$0xff]
      %v955 = vld [vmem:[%s9] sm:$0xff]
      %v956 = vld [vmem:[%s4] sm:$0xff]
      %v957 = vld [vmem:[%s4 + $0x8] sm:$0xff]
      %v958 = vld [vmem:[%s4 + $0x10] sm:$0xff]
      %v959 = vld [vmem:[%s4 + $0x18] sm:$0xff]
      %v960 = vld [vmem:[%s4 + $0x20] sm:$0xff]
      %v961 = vld [vmem:[%s4 + $0x28] sm:$0xff]
      %v962 = vld [vmem:[%s4 + $0x30] sm:$0xff]
      %v963 = vld [vmem:[%s4 + $0x38] sm:$0xff]
      %v964 = vld [vmem:[%s4 + $0x40] sm:$0xff]
      %v965 = vld [vmem:[%s4 + $0x48] sm:$0xff]
      %v966 = vld [vmem:[%s4 + $0x50] sm:$0xff]
      %v967 = vld [vmem:[%s4 + $0x58] sm:$0xff]
      %v968 = vld [vmem:[%s4 + $0x60] sm:$0xff]
      %v969 = vld [vmem:[%s4 + $0x68] sm:$0xff]
      %v970 = vld [vmem:[%s4 + $0x70] sm:$0xff]
      %v971 = vld [vmem:[%s4 + $0x78] sm:$0xff]
      %v972 = vld [vmem:[%s4 + $0x80] sm:$0xff]
      %v973 = vld [vmem:[%s4 + $0x88] sm:$0xff]
      %v974 = vld [vmem:[%s4 + $0x90] sm:$0xff]
      %v975 = vld [vmem:[%s4 + $0x98] sm:$0xff]
      %v976 = vld [vmem:[%s4 + $0xa0] sm:$0xff]
      %v977 = vld [vmem:[%s4 + $0xa8] sm:$0xff]
      %v978 = vld [vmem:[%s4 + $0xb0] sm:$0xff]
      %v979 = vld [vmem:[%s4 + $0xb8] sm:$0xff]
      %v980 = vld [vmem:[%s4 + $0xc0] sm:$0xff]
      %v981 = vld [vmem:[%s4 + $0xc8] sm:$0xff]
      %v982 = vld [vmem:[%s4 + $0xd0] sm:$0xff]
      %v983 = vld [vmem:[%s4 + $0xd8] sm:$0xff]
      %v984 = vld [vmem:[%s4 + $0xe0] sm:$0xff]
      %v985 = vld [vmem:[%s4 + $0xe8] sm:$0xff]
      %v986 = vld [vmem:[%s4 + $0xf0] sm:$0xff]
      %v987 = vld [vmem:[%s4 + $0xf8] sm:$0xff]
      %v988 = vld [vmem:[%s4 + $0x100] sm:$0xff]
      %v989 = vld [vmem:[%s4 + $0x108] sm:$0xff]
      %v990 = vld [vmem:[%s4 + $0x110] sm:$0xff]
      %v991 = vld [vmem:[%s4 + $0x118] sm:$0xff]
      %v992 = vld [vmem:[%s4 + $0x120] sm:$0xff]
      %v993 = vld [vmem:[%s4 + $0x128] sm:$0xff]
      %v994 = vld [vmem:[%s4 + $0x130] sm:$0xff]
      %v995 = vld [vmem:[%s4 + $0x138] sm:$0xff]
      %v996 = vld [vmem:[%s4 + $0x140] sm:$0xff]
      %v997 = vld [vmem:[%s4 + $0x148] sm:$0xff]
      %v998 = vld [vmem:[%s4 + $0x150] sm:$0xff]
      %v999 = vld [vmem:[%s4 + $0x158] sm:$0xff]
      %v1000 = vld [vmem:[%s4 + $0x160] sm:$0xff]
      %v1001 = vld [vmem:[%s4 + $0x168] sm:$0xff]
      %v1002 = vld [vmem:[%s4 + $0x170] sm:$0xff]
      %v1003 = vld [vmem:[%s4 + $0x178] sm:$0xff]
      %v1004 = vld [vmem:[%s4 + $0x180] sm:$0xff]
      %v1005 = vld [vmem:[%s4 + $0x188] sm:$0xff]
      %v1006 = vld [vmem:[%s4 + $0x190] sm:$0xff]
      %v1007 = vld [vmem:[%s4 + $0x198] sm:$0xff]
      %v1008 = vld [vmem:[%s4 + $0x1a0] sm:$0xff]
      %v1009 = vld [vmem:[%s4 + $0x1a8] sm:$0xff]
      %v1010 = vld [vmem:[%s4 + $0x1b0] sm:$0xff]
      %v1011 = vld [vmem:[%s4 + $0x1b8] sm:$0xff]
      %v1012 = vld [vmem:[%s4 + $0x1c0] sm:$0xff]
      %v1013 = vld [vmem:[%s4 + $0x1c8] sm:$0xff]
      %v1014 = vld [vmem:[%s4 + $0x1d0] sm:$0xff]
      %v1015 = vld [vmem:[%s4 + $0x1d8] sm:$0xff]
      %v1016 = vld [vmem:[%s4 + $0x1e0] sm:$0xff]
      %v1017 = vld [vmem:[%s4 + $0x1e8] sm:$0xff]
      %v1018 = vld [vmem:[%s4 + $0x1f0] sm:$0xff]
      %v1019 = vld [vmem:[%s4 + $0x1f8] sm:$0xff]
      %1020 = vmatpush.msra.mxu0 %v1016
      %1021 = vmatpush.msra.mxu0 %v1012
      %1022 = vmatpush.msra.mxu0 %v1008
      %1023 = vmatpush.msra.mxu0 %v1004
      %1024 = vmatpush.msra.mxu0 %v1000
      %1025 = vmatpush.msra.mxu0 %v996
      %1026 = vmatpush.msra.mxu0 %v992
      %1027 = vmatpush.msra.mxu0 %v988
      %1028 = vmatpush.msra.mxu0 %v984
      %1029 = vmatpush.msra.mxu0 %v980
      %1030 = vmatpush.msra.mxu0 %v976
      %1031 = vmatpush.msra.mxu0 %v972
      %1032 = vmatpush.msra.mxu0 %v968
      %1033 = vmatpush.msra.mxu0 %v964
      %1034 = vmatpush.msra.mxu0 %v960
      %1035 = vmatpush.msra.mxu0 %v956
      %1036 = vmatmul.f32.gmra.mxu0 %v954
      %v1037 = vpop.f32.mrf.mxu0
      %v1038 = vadd.f32 0.0, %v1037
      %1039 = vdwg.mxu0
      %1040 = vmatpush.msra.mxu0 %v1017
      %1041 = vmatpush.msra.mxu0 %v1013
      %1042 = vmatpush.msra.mxu0 %v1009
      %1043 = vmatpush.msra.mxu0 %v1005
      %1044 = vmatpush.msra.mxu0 %v1001
      %1045 = vmatpush.msra.mxu0 %v997
      %1046 = vmatpush.msra.mxu0 %v993
      %1047 = vmatpush.msra.mxu0 %v989
      %1048 = vmatpush.msra.mxu0 %v985
      %1049 = vmatpush.msra.mxu0 %v981
      %1050 = vmatpush.msra.mxu0 %v977
      %1051 = vmatpush.msra.mxu0 %v973
      %1052 = vmatpush.msra.mxu0 %v969
      %1053 = vmatpush.msra.mxu0 %v965
      %1054 = vmatpush.msra.mxu0 %v961
      %1055 = vmatpush.msra.mxu0 %v957
      %1056 = vmatmul.f32.gmra.mxu0 %v954
      %v1057 = vpop.f32.mrf.mxu0
      %v1058 = vadd.f32 0.0, %v1057
      %1059 = vdwg.mxu0
      %1060 = vmatpush.msra.mxu0 %v1018
      %1061 = vmatpush.msra.mxu0 %v1014
      %1062 = vmatpush.msra.mxu0 %v1010
      %1063 = vmatpush.msra.mxu0 %v1006
      %1064 = vmatpush.msra.mxu0 %v1002
      %1065 = vmatpush.msra.mxu0 %v998
      %1066 = vmatpush.msra.mxu0 %v994
      %1067 = vmatpush.msra.mxu0 %v990
      %1068 = vmatpush.msra.mxu0 %v986
      %1069 = vmatpush.msra.mxu0 %v982
      %1070 = vmatpush.msra.mxu0 %v978
      %1071 = vmatpush.msra.mxu0 %v974
      %1072 = vmatpush.msra.mxu0 %v970
      %1073 = vmatpush.msra.mxu0 %v966
      %1074 = vmatpush.msra.mxu0 %v962
      %1075 = vmatpush.msra.mxu0 %v958
      %1076 = vmatmul.f32.gmra.mxu0 %v954
      %v1077 = vpop.f32.mrf.mxu0
      %v1078 = vadd.f32 0.0, %v1077
      %1079 = vdwg.mxu0
      %1080 = vmatpush.msra.mxu0 %v1019
      %1081 = vmatpush.msra.mxu0 %v1015
      %1082 = vmatpush.msra.mxu0 %v1011
      %1083 = vmatpush.msra.mxu0 %v1007
      %1084 = vmatpush.msra.mxu0 %v1003
      %1085 = vmatpush.msra.mxu0 %v999
      %1086 = vmatpush.msra.mxu0 %v995
      %1087 = vmatpush.msra.mxu0 %v991
      %1088 = vmatpush.msra.mxu0 %v987
      %1089 = vmatpush.msra.mxu0 %v983
      %1090 = vmatpush.msra.mxu0 %v979
      %1091 = vmatpush.msra.mxu0 %v975
      %1092 = vmatpush.msra.mxu0 %v971
      %1093 = vmatpush.msra.mxu0 %v967
      %1094 = vmatpush.msra.mxu0 %v963
      %1095 = vmatpush.msra.mxu0 %v959
      %1096 = vmatmul.f32.gmra.mxu0 %v954
      %v1097 = vpop.f32.mrf.mxu0
      %v1098 = vadd.f32 0.0, %v1097
      %1099 = vdwg.mxu0
      %v1100 = vadd.f32 %v950, %v1038
      %v1101 = vadd.f32 %v951, %v1058
      %v1102 = vadd.f32 %v952, %v1078
      %v1103 = vadd.f32 %v953, %v1098
      %v1104 = vxor.u32 %v1100, 2147483648
      %v1105 = vmul.f32 %v1104, 1.442695
      %v1106 = vpow.pop %v1105
      %v1107 = vadd.f32 %v1106, 1.0
      %v1108 = vrcp.pop %v1107
      %v1109 = vmul.f32 %v1107, %v1108
      %v1110 = vsub.f32 1.0, %v1109
      %v1111 = vmul.f32 %v1108, %v1110
      %v1112 = vadd.f32 %v1108, %v1111
      %vm1113 = vweird.f32 %v1107
      %vm1114 = vweird.f32 %v1108
      %vm1115 = vmor %vm1113, %vm1114
      %v1116 = vsel %vm1115, %v1108, %v1112
      %v1117 = vand.u32 2147483647, %v1107
      %vm1118 = vcmp.eq.f32.partialorder %v1117, 8.507059e+37
      %v1119 = vand.u32 %v1107, 2147483648
      %v1120 = vor.u32 1.1754944e-38, %v1119
      %v1121 = vsel %vm1118, %v1120, %v1116
      %v1122 = vmul.f32 1.0, %v1121
      %v1123 = vxor.u32 %v1101, 2147483648
      %v1124 = vmul.f32 %v1123, 1.442695
      %v1125 = vpow.pop %v1124
      %v1126 = vadd.f32 %v1125, 1.0
      %v1127 = vrcp.pop %v1126
      %v1128 = vmul.f32 %v1126, %v1127
      %v1129 = vsub.f32 1.0, %v1128
      %v1130 = vmul.f32 %v1127, %v1129
      %v1131 = vadd.f32 %v1127, %v1130
      %vm1132 = vweird.f32 %v1126
      %vm1133 = vweird.f32 %v1127
      %vm1134 = vmor %vm1132, %vm1133
      %v1135 = vsel %vm1134, %v1127, %v1131
      %v1136 = vand.u32 2147483647, %v1126
      %vm1137 = vcmp.eq.f32.partialorder %v1136, 8.507059e+37
      %v1138 = vand.u32 %v1126, 2147483648
      %v1139 = vor.u32 1.1754944e-38, %v1138
      %v1140 = vsel %vm1137, %v1139, %v1135
      %v1141 = vmul.f32 1.0, %v1140
      %v1142 = vtanh.pop %v1102
      %v1143 = vxor.u32 %v1103, 2147483648
      %v1144 = vmul.f32 %v1143, 1.442695
      %v1145 = vpow.pop %v1144
      %v1146 = vadd.f32 %v1145, 1.0
      %v1147 = vrcp.pop %v1146
      %v1148 = vmul.f32 %v1146, %v1147
      %v1149 = vsub.f32 1.0, %v1148
      %v1150 = vmul.f32 %v1147, %v1149
      %v1151 = vadd.f32 %v1147, %v1150
      %vm1152 = vweird.f32 %v1146
      %vm1153 = vweird.f32 %v1147
      %vm1154 = vmor %vm1152, %vm1153
      %v1155 = vsel %vm1154, %v1147, %v1151
      %v1156 = vand.u32 2147483647, %v1146
      %vm1157 = vcmp.eq.f32.partialorder %v1156, 8.507059e+37
      %v1158 = vand.u32 %v1146, 2147483648
      %v1159 = vor.u32 1.1754944e-38, %v1158
      %v1160 = vsel %vm1157, %v1159, %v1155
      %v1161 = vmul.f32 1.0, %v1160
      %v1162 = vmul.f32 %v1141, %v955
      %v1163 = vmul.f32 %v1122, %v1142
      %v1164 = vadd.f32 %v1162, %v1163
      %v1165 = vtanh.pop %v1164
      %v1166 = vmul.f32 %v1161, %v1165
      %v1167 = vld [vmem:[%s571] sm:$0xff]
      %v1168 = vld [vmem:[%s573] sm:$0xff]
      %v1169 = vld [vmem:[%s5] sm:$0xff]
      %v1170 = vld [vmem:[%s5 + $0x8] sm:$0xff]
      %v1171 = vld [vmem:[%s5 + $0x10] sm:$0xff]
      %v1172 = vld [vmem:[%s5 + $0x18] sm:$0xff]
      %v1173 = vld [vmem:[%s5 + $0x20] sm:$0xff]
      %v1174 = vld [vmem:[%s5 + $0x28] sm:$0xff]
      %v1175 = vld [vmem:[%s5 + $0x30] sm:$0xff]
      %v1176 = vld [vmem:[%s5 + $0x38] sm:$0xff]
      %v1177 = vld [vmem:[%s5 + $0x40] sm:$0xff]
      %v1178 = vld [vmem:[%s5 + $0x48] sm:$0xff]
      %v1179 = vld [vmem:[%s5 + $0x50] sm:$0xff]
      %v1180 = vld [vmem:[%s5 + $0x58] sm:$0xff]
      %v1181 = vld [vmem:[%s5 + $0x60] sm:$0xff]
      %v1182 = vld [vmem:[%s5 + $0x68] sm:$0xff]
      %v1183 = vld [vmem:[%s5 + $0x70] sm:$0xff]
      %v1184 = vld [vmem:[%s5 + $0x78] sm:$0xff]
      %v1185 = vld [vmem:[%s5 + $0x80] sm:$0xff]
      %v1186 = vld [vmem:[%s5 + $0x88] sm:$0xff]
      %v1187 = vld [vmem:[%s5 + $0x90] sm:$0xff]
      %v1188 = vld [vmem:[%s5 + $0x98] sm:$0xff]
      %v1189 = vld [vmem:[%s5 + $0xa0] sm:$0xff]
      %v1190 = vld [vmem:[%s5 + $0xa8] sm:$0xff]
      %v1191 = vld [vmem:[%s5 + $0xb0] sm:$0xff]
      %v1192 = vld [vmem:[%s5 + $0xb8] sm:$0xff]
      %v1193 = vld [vmem:[%s5 + $0xc0] sm:$0xff]
      %v1194 = vld [vmem:[%s5 + $0xc8] sm:$0xff]
      %v1195 = vld [vmem:[%s5 + $0xd0] sm:$0xff]
      %v1196 = vld [vmem:[%s5 + $0xd8] sm:$0xff]
      %v1197 = vld [vmem:[%s5 + $0xe0] sm:$0xff]
      %v1198 = vld [vmem:[%s5 + $0xe8] sm:$0xff]
      %v1199 = vld [vmem:[%s5 + $0xf0] sm:$0xff]
      %v1200 = vld [vmem:[%s5 + $0xf8] sm:$0xff]
      %v1201 = vld [vmem:[%s5 + $0x100] sm:$0xff]
      %v1202 = vld [vmem:[%s5 + $0x108] sm:$0xff]
      %v1203 = vld [vmem:[%s5 + $0x110] sm:$0xff]
      %v1204 = vld [vmem:[%s5 + $0x118] sm:$0xff]
      %v1205 = vld [vmem:[%s5 + $0x120] sm:$0xff]
      %v1206 = vld [vmem:[%s5 + $0x128] sm:$0xff]
      %v1207 = vld [vmem:[%s5 + $0x130] sm:$0xff]
      %v1208 = vld [vmem:[%s5 + $0x138] sm:$0xff]
      %v1209 = vld [vmem:[%s5 + $0x140] sm:$0xff]
      %v1210 = vld [vmem:[%s5 + $0x148] sm:$0xff]
      %v1211 = vld [vmem:[%s5 + $0x150] sm:$0xff]
      %v1212 = vld [vmem:[%s5 + $0x158] sm:$0xff]
      %v1213 = vld [vmem:[%s5 + $0x160] sm:$0xff]
      %v1214 = vld [vmem:[%s5 + $0x168] sm:$0xff]
      %v1215 = vld [vmem:[%s5 + $0x170] sm:$0xff]
      %v1216 = vld [vmem:[%s5 + $0x178] sm:$0xff]
      %v1217 = vld [vmem:[%s5 + $0x180] sm:$0xff]
      %v1218 = vld [vmem:[%s5 + $0x188] sm:$0xff]
      %v1219 = vld [vmem:[%s5 + $0x190] sm:$0xff]
      %v1220 = vld [vmem:[%s5 + $0x198] sm:$0xff]
      %v1221 = vld [vmem:[%s5 + $0x1a0] sm:$0xff]
      %v1222 = vld [vmem:[%s5 + $0x1a8] sm:$0xff]
      %v1223 = vld [vmem:[%s5 + $0x1b0] sm:$0xff]
      %v1224 = vld [vmem:[%s5 + $0x1b8] sm:$0xff]
      %v1225 = vld [vmem:[%s5 + $0x1c0] sm:$0xff]
      %v1226 = vld [vmem:[%s5 + $0x1c8] sm:$0xff]
      %v1227 = vld [vmem:[%s5 + $0x1d0] sm:$0xff]
      %v1228 = vld [vmem:[%s5 + $0x1d8] sm:$0xff]
      %v1229 = vld [vmem:[%s5 + $0x1e0] sm:$0xff]
      %v1230 = vld [vmem:[%s5 + $0x1e8] sm:$0xff]
      %v1231 = vld [vmem:[%s5 + $0x1f0] sm:$0xff]
      %v1232 = vld [vmem:[%s5 + $0x1f8] sm:$0xff]
      %v1233 = vld [vmem:[%s5 + $0x200] sm:$0xff]
      %v1234 = vld [vmem:[%s5 + $0x208] sm:$0xff]
      %v1235 = vld [vmem:[%s5 + $0x210] sm:$0xff]
      %v1236 = vld [vmem:[%s5 + $0x218] sm:$0xff]
      %v1237 = vld [vmem:[%s5 + $0x220] sm:$0xff]
      %v1238 = vld [vmem:[%s5 + $0x228] sm:$0xff]
      %v1239 = vld [vmem:[%s5 + $0x230] sm:$0xff]
      %v1240 = vld [vmem:[%s5 + $0x238] sm:$0xff]
      %v1241 = vld [vmem:[%s5 + $0x240] sm:$0xff]
      %v1242 = vld [vmem:[%s5 + $0x248] sm:$0xff]
      %v1243 = vld [vmem:[%s5 + $0x250] sm:$0xff]
      %v1244 = vld [vmem:[%s5 + $0x258] sm:$0xff]
      %v1245 = vld [vmem:[%s5 + $0x260] sm:$0xff]
      %v1246 = vld [vmem:[%s5 + $0x268] sm:$0xff]
      %v1247 = vld [vmem:[%s5 + $0x270] sm:$0xff]
      %v1248 = vld [vmem:[%s5 + $0x278] sm:$0xff]
      %v1249 = vld [vmem:[%s5 + $0x280] sm:$0xff]
      %v1250 = vld [vmem:[%s5 + $0x288] sm:$0xff]
      %v1251 = vld [vmem:[%s5 + $0x290] sm:$0xff]
      %v1252 = vld [vmem:[%s5 + $0x298] sm:$0xff]
      %v1253 = vld [vmem:[%s5 + $0x2a0] sm:$0xff]
      %v1254 = vld [vmem:[%s5 + $0x2a8] sm:$0xff]
      %v1255 = vld [vmem:[%s5 + $0x2b0] sm:$0xff]
      %v1256 = vld [vmem:[%s5 + $0x2b8] sm:$0xff]
      %v1257 = vld [vmem:[%s5 + $0x2c0] sm:$0xff]
      %v1258 = vld [vmem:[%s5 + $0x2c8] sm:$0xff]
      %v1259 = vld [vmem:[%s5 + $0x2d0] sm:$0xff]
      %v1260 = vld [vmem:[%s5 + $0x2d8] sm:$0xff]
      %v1261 = vld [vmem:[%s5 + $0x2e0] sm:$0xff]
      %v1262 = vld [vmem:[%s5 + $0x2e8] sm:$0xff]
      %v1263 = vld [vmem:[%s5 + $0x2f0] sm:$0xff]
      %v1264 = vld [vmem:[%s5 + $0x2f8] sm:$0xff]
      %v1265 = vld [vmem:[%s5 + $0x300] sm:$0xff]
      %v1266 = vld [vmem:[%s5 + $0x308] sm:$0xff]
      %v1267 = vld [vmem:[%s5 + $0x310] sm:$0xff]
      %v1268 = vld [vmem:[%s5 + $0x318] sm:$0xff]
      %v1269 = vld [vmem:[%s5 + $0x320] sm:$0xff]
      %v1270 = vld [vmem:[%s5 + $0x328] sm:$0xff]
      %v1271 = vld [vmem:[%s5 + $0x330] sm:$0xff]
      %v1272 = vld [vmem:[%s5 + $0x338] sm:$0xff]
      %v1273 = vld [vmem:[%s5 + $0x340] sm:$0xff]
      %v1274 = vld [vmem:[%s5 + $0x348] sm:$0xff]
      %v1275 = vld [vmem:[%s5 + $0x350] sm:$0xff]
      %v1276 = vld [vmem:[%s5 + $0x358] sm:$0xff]
      %v1277 = vld [vmem:[%s5 + $0x360] sm:$0xff]
      %v1278 = vld [vmem:[%s5 + $0x368] sm:$0xff]
      %v1279 = vld [vmem:[%s5 + $0x370] sm:$0xff]
      %v1280 = vld [vmem:[%s5 + $0x378] sm:$0xff]
      %v1281 = vld [vmem:[%s5 + $0x380] sm:$0xff]
      %v1282 = vld [vmem:[%s5 + $0x388] sm:$0xff]
      %v1283 = vld [vmem:[%s5 + $0x390] sm:$0xff]
      %v1284 = vld [vmem:[%s5 + $0x398] sm:$0xff]
      %v1285 = vld [vmem:[%s5 + $0x3a0] sm:$0xff]
      %v1286 = vld [vmem:[%s5 + $0x3a8] sm:$0xff]
      %v1287 = vld [vmem:[%s5 + $0x3b0] sm:$0xff]
      %v1288 = vld [vmem:[%s5 + $0x3b8] sm:$0xff]
      %v1289 = vld [vmem:[%s5 + $0x3c0] sm:$0xff]
      %v1290 = vld [vmem:[%s5 + $0x3c8] sm:$0xff]
      %v1291 = vld [vmem:[%s5 + $0x3d0] sm:$0xff]
      %v1292 = vld [vmem:[%s5 + $0x3d8] sm:$0xff]
      %v1293 = vld [vmem:[%s5 + $0x3e0] sm:$0xff]
      %v1294 = vld [vmem:[%s5 + $0x3e8] sm:$0xff]
      %v1295 = vld [vmem:[%s5 + $0x3f0] sm:$0xff]
      %v1296 = vld [vmem:[%s5 + $0x3f8] sm:$0xff]
      %v1297 = vld [vmem:[%s6] sm:$0xf]
      %v1299 = vperm.slane %v1297, 0
      %v1300 = vperm.slane %v1297, 1
      %v1301 = vperm.slane %v1297, 2
      %v1302 = vperm.slane %v1297, 3
      %1307 = vmatpush.msra.mxu0 %v1229
      %1308 = vmatpush.msra.mxu0 %v1225
      %1309 = vmatpush.msra.mxu0 %v1221
      %1310 = vmatpush.msra.mxu0 %v1217
      %1311 = vmatpush.msra.mxu0 %v1213
      %1312 = vmatpush.msra.mxu0 %v1209
      %1313 = vmatpush.msra.mxu0 %v1205
      %1314 = vmatpush.msra.mxu0 %v1201
      %1315 = vmatpush.msra.mxu0 %v1197
      %1316 = vmatpush.msra.mxu0 %v1193
      %1317 = vmatpush.msra.mxu0 %v1189
      %1318 = vmatpush.msra.mxu0 %v1185
      %1319 = vmatpush.msra.mxu0 %v1181
      %1320 = vmatpush.msra.mxu0 %v1177
      %1321 = vmatpush.msra.mxu0 %v1173
      %1322 = vmatpush.msra.mxu0 %v1169
      %1323 = vmatmul.f32.gmra.mxu0 %v1166
      %v1324 = vpop.f32.mrf.mxu0
      %v1325 = vadd.f32 %v1299, %v1324
      %1326 = vdwg.mxu0
      %1327 = vmatpush.msra.mxu0 %v1293
      %1328 = vmatpush.msra.mxu0 %v1289
      %1329 = vmatpush.msra.mxu0 %v1285
      %1330 = vmatpush.msra.mxu0 %v1281
      %1331 = vmatpush.msra.mxu0 %v1277
      %1332 = vmatpush.msra.mxu0 %v1273
      %1333 = vmatpush.msra.mxu0 %v1269
      %1334 = vmatpush.msra.mxu0 %v1265
      %1335 = vmatpush.msra.mxu0 %v1261
      %1336 = vmatpush.msra.mxu0 %v1257
      %1337 = vmatpush.msra.mxu0 %v1253
      %1338 = vmatpush.msra.mxu0 %v1249
      %1339 = vmatpush.msra.mxu0 %v1245
      %1340 = vmatpush.msra.mxu0 %v1241
      %1341 = vmatpush.msra.mxu0 %v1237
      %1342 = vmatpush.msra.mxu0 %v1233
      %1343 = vmatmul.f32.gmra.mxu0 %v1167
      %v1344 = vpop.f32.mrf.mxu0
      %v1345 = vadd.f32 %v1325, %v1344
      %1346 = vdwg.mxu0
      %1347 = vmatpush.msra.mxu0 %v1230
      %1348 = vmatpush.msra.mxu0 %v1226
      %1349 = vmatpush.msra.mxu0 %v1222
      %1350 = vmatpush.msra.mxu0 %v1218
      %1351 = vmatpush.msra.mxu0 %v1214
      %1352 = vmatpush.msra.mxu0 %v1210
      %1353 = vmatpush.msra.mxu0 %v1206
      %1354 = vmatpush.msra.mxu0 %v1202
      %1355 = vmatpush.msra.mxu0 %v1198
      %1356 = vmatpush.msra.mxu0 %v1194
      %1357 = vmatpush.msra.mxu0 %v1190
      %1358 = vmatpush.msra.mxu0 %v1186
      %1359 = vmatpush.msra.mxu0 %v1182
      %1360 = vmatpush.msra.mxu0 %v1178
      %1361 = vmatpush.msra.mxu0 %v1174
      %1362 = vmatpush.msra.mxu0 %v1170
      %1363 = vmatmul.f32.gmra.mxu0 %v1166
      %v1364 = vpop.f32.mrf.mxu0
      %v1365 = vadd.f32 %v1300, %v1364
      %1366 = vdwg.mxu0
      %1367 = vmatpush.msra.mxu0 %v1294
      %1368 = vmatpush.msra.mxu0 %v1290
      %1369 = vmatpush.msra.mxu0 %v1286
      %1370 = vmatpush.msra.mxu0 %v1282
      %1371 = vmatpush.msra.mxu0 %v1278
      %1372 = vmatpush.msra.mxu0 %v1274
      %1373 = vmatpush.msra.mxu0 %v1270
      %1374 = vmatpush.msra.mxu0 %v1266
      %1375 = vmatpush.msra.mxu0 %v1262
      %1376 = vmatpush.msra.mxu0 %v1258
      %1377 = vmatpush.msra.mxu0 %v1254
      %1378 = vmatpush.msra.mxu0 %v1250
      %1379 = vmatpush.msra.mxu0 %v1246
      %1380 = vmatpush.msra.mxu0 %v1242
      %1381 = vmatpush.msra.mxu0 %v1238
      %1382 = vmatpush.msra.mxu0 %v1234
      %1383 = vmatmul.f32.gmra.mxu0 %v1167
      %v1384 = vpop.f32.mrf.mxu0
      %v1385 = vadd.f32 %v1365, %v1384
      %1386 = vdwg.mxu0
      %1387 = vmatpush.msra.mxu0 %v1231
      %1388 = vmatpush.msra.mxu0 %v1227
      %1389 = vmatpush.msra.mxu0 %v1223
      %1390 = vmatpush.msra.mxu0 %v1219
      %1391 = vmatpush.msra.mxu0 %v1215
      %1392 = vmatpush.msra.mxu0 %v1211
      %1393 = vmatpush.msra.mxu0 %v1207
      %1394 = vmatpush.msra.mxu0 %v1203
      %1395 = vmatpush.msra.mxu0 %v1199
      %1396 = vmatpush.msra.mxu0 %v1195
      %1397 = vmatpush.msra.mxu0 %v1191
      %1398 = vmatpush.msra.mxu0 %v1187
      %1399 = vmatpush.msra.mxu0 %v1183
      %1400 = vmatpush.msra.mxu0 %v1179
      %1401 = vmatpush.msra.mxu0 %v1175
      %1402 = vmatpush.msra.mxu0 %v1171
      %1403 = vmatmul.f32.gmra.mxu0 %v1166
      %v1404 = vpop.f32.mrf.mxu0
      %v1405 = vadd.f32 %v1301, %v1404
      %1406 = vdwg.mxu0
      %1407 = vmatpush.msra.mxu0 %v1295
      %1408 = vmatpush.msra.mxu0 %v1291
      %1409 = vmatpush.msra.mxu0 %v1287
      %1410 = vmatpush.msra.mxu0 %v1283
      %1411 = vmatpush.msra.mxu0 %v1279
      %1412 = vmatpush.msra.mxu0 %v1275
      %1413 = vmatpush.msra.mxu0 %v1271
      %1414 = vmatpush.msra.mxu0 %v1267
      %1415 = vmatpush.msra.mxu0 %v1263
      %1416 = vmatpush.msra.mxu0 %v1259
      %1417 = vmatpush.msra.mxu0 %v1255
      %1418 = vmatpush.msra.mxu0 %v1251
      %1419 = vmatpush.msra.mxu0 %v1247
      %1420 = vmatpush.msra.mxu0 %v1243
      %1421 = vmatpush.msra.mxu0 %v1239
      %1422 = vmatpush.msra.mxu0 %v1235
      %1423 = vmatmul.f32.gmra.mxu0 %v1167
      %v1424 = vpop.f32.mrf.mxu0
      %v1425 = vadd.f32 %v1405, %v1424
      %1426 = vdwg.mxu0
      %1427 = vmatpush.msra.mxu0 %v1232
      %1428 = vmatpush.msra.mxu0 %v1228
      %1429 = vmatpush.msra.mxu0 %v1224
      %1430 = vmatpush.msra.mxu0 %v1220
      %1431 = vmatpush.msra.mxu0 %v1216
      %1432 = vmatpush.msra.mxu0 %v1212
      %1433 = vmatpush.msra.mxu0 %v1208
      %1434 = vmatpush.msra.mxu0 %v1204
      %1435 = vmatpush.msra.mxu0 %v1200
      %1436 = vmatpush.msra.mxu0 %v1196
      %1437 = vmatpush.msra.mxu0 %v1192
      %1438 = vmatpush.msra.mxu0 %v1188
      %1439 = vmatpush.msra.mxu0 %v1184
      %1440 = vmatpush.msra.mxu0 %v1180
      %1441 = vmatpush.msra.mxu0 %v1176
      %1442 = vmatpush.msra.mxu0 %v1172
      %1443 = vmatmul.f32.gmra.mxu0 %v1166
      %v1444 = vpop.f32.mrf.mxu0
      %v1445 = vadd.f32 %v1302, %v1444
      %1446 = vdwg.mxu0
      %1447 = vmatpush.msra.mxu0 %v1296
      %1448 = vmatpush.msra.mxu0 %v1292
      %1449 = vmatpush.msra.mxu0 %v1288
      %1450 = vmatpush.msra.mxu0 %v1284
      %1451 = vmatpush.msra.mxu0 %v1280
      %1452 = vmatpush.msra.mxu0 %v1276
      %1453 = vmatpush.msra.mxu0 %v1272
      %1454 = vmatpush.msra.mxu0 %v1268
      %1455 = vmatpush.msra.mxu0 %v1264
      %1456 = vmatpush.msra.mxu0 %v1260
      %1457 = vmatpush.msra.mxu0 %v1256
      %1458 = vmatpush.msra.mxu0 %v1252
      %1459 = vmatpush.msra.mxu0 %v1248
      %1460 = vmatpush.msra.mxu0 %v1244
      %1461 = vmatpush.msra.mxu0 %v1240
      %1462 = vmatpush.msra.mxu0 %v1236
      %1463 = vmatmul.f32.gmra.mxu0 %v1167
      %v1464 = vpop.f32.mrf.mxu0
      %v1465 = vadd.f32 %v1445, %v1464
      %1466 = vdwg.mxu0
      %v1467 = vxor.u32 %v1345, 2147483648
      %v1468 = vmul.f32 %v1467, 1.442695
      %v1469 = vpow.pop %v1468
      %v1470 = vadd.f32 %v1469, 1.0
      %v1471 = vrcp.pop %v1470
      %v1472 = vmul.f32 %v1470, %v1471
      %v1473 = vsub.f32 1.0, %v1472
      %v1474 = vmul.f32 %v1471, %v1473
      %v1475 = vadd.f32 %v1471, %v1474
      %vm1476 = vweird.f32 %v1470
      %vm1477 = vweird.f32 %v1471
      %vm1478 = vmor %vm1476, %vm1477
      %v1479 = vsel %vm1478, %v1471, %v1475
      %v1480 = vand.u32 2147483647, %v1470
      %vm1481 = vcmp.eq.f32.partialorder %v1480, 8.507059e+37
      %v1482 = vand.u32 %v1470, 2147483648
      %v1483 = vor.u32 1.1754944e-38, %v1482
      %v1484 = vsel %vm1481, %v1483, %v1479
      %v1485 = vmul.f32 1.0, %v1484
      %v1486 = vxor.u32 %v1385, 2147483648
      %v1487 = vmul.f32 %v1486, 1.442695
      %v1488 = vpow.pop %v1487
      %v1489 = vadd.f32 %v1488, 1.0
      %v1490 = vrcp.pop %v1489
      %v1491 = vmul.f32 %v1489, %v1490
      %v1492 = vsub.f32 1.0, %v1491
      %v1493 = vmul.f32 %v1490, %v1492
      %v1494 = vadd.f32 %v1490, %v1493
      %vm1495 = vweird.f32 %v1489
      %vm1496 = vweird.f32 %v1490
      %vm1497 = vmor %vm1495, %vm1496
      %v1498 = vsel %vm1497, %v1490, %v1494
      %v1499 = vand.u32 2147483647, %v1489
      %vm1500 = vcmp.eq.f32.partialorder %v1499, 8.507059e+37
      %v1501 = vand.u32 %v1489, 2147483648
      %v1502 = vor.u32 1.1754944e-38, %v1501
      %v1503 = vsel %vm1500, %v1502, %v1498
      %v1504 = vmul.f32 1.0, %v1503
      %v1505 = vtanh.pop %v1425
      %v1506 = vxor.u32 %v1465, 2147483648
      %v1507 = vmul.f32 %v1506, 1.442695
      %v1508 = vpow.pop %v1507
      %v1509 = vadd.f32 %v1508, 1.0
      %v1510 = vrcp.pop %v1509
      %v1511 = vmul.f32 %v1509, %v1510
      %v1512 = vsub.f32 1.0, %v1511
      %v1513 = vmul.f32 %v1510, %v1512
      %v1514 = vadd.f32 %v1510, %v1513
      %vm1515 = vweird.f32 %v1509
      %vm1516 = vweird.f32 %v1510
      %vm1517 = vmor %vm1515, %vm1516
      %v1518 = vsel %vm1517, %v1510, %v1514
      %v1519 = vand.u32 2147483647, %v1509
      %vm1520 = vcmp.eq.f32.partialorder %v1519, 8.507059e+37
      %v1521 = vand.u32 %v1509, 2147483648
      %v1522 = vor.u32 1.1754944e-38, %v1521
      %v1523 = vsel %vm1520, %v1522, %v1518
      %v1524 = vmul.f32 1.0, %v1523
      %v1525 = vmul.f32 %v1504, %v1168
      %v1526 = vmul.f32 %v1485, %v1505
      %v1527 = vadd.f32 %v1525, %v1526
      %v1528 = vtanh.pop %v1527
      %v1529 = vmul.f32 %v1524, %v1528
      %s1530 = scalar_lea.vmem %s332, 8
      %1531 = vst [vmem:[%s1530] sm:$0xff] %v1529
      %1532 = vst [vmem:[%s8] sm:$0xff] %v1166
      %1533 = vst [vmem:[%s9] sm:$0xff] %v1164
      %1534 = vst [vmem:[%s571] sm:$0xff] %v1529
      %1535 = vst [vmem:[%s573] sm:$0xff] %v1527
      %s1536 = scalar_lea.vmem %s326, 64
      %v1537 = vld [vmem:[%s1536] sm:$0xff]
      %v1538 = vld [vmem:[%s1536 + $0x8] sm:$0xff]
      %v1539 = vld [vmem:[%s1536 + $0x10] sm:$0xff]
      %v1540 = vld [vmem:[%s1536 + $0x18] sm:$0xff]
      %v1541 = vld [vmem:[%s1] sm:$0xff]
      %v1542 = vld [vmem:[%s1 + $0x8] sm:$0xff]
      %v1543 = vld [vmem:[%s1 + $0x10] sm:$0xff]
      %v1544 = vld [vmem:[%s1 + $0x18] sm:$0xff]
      %v1545 = vadd.f32 %v1537, %v1541
      %v1546 = vadd.f32 %v1538, %v1542
      %v1547 = vadd.f32 %v1539, %v1543
      %v1548 = vadd.f32 %v1540, %v1544
      %v1549 = vld [vmem:[%s8] sm:$0xff]
      %v1550 = vld [vmem:[%s9] sm:$0xff]
      %v1551 = vld [vmem:[%s4] sm:$0xff]
      %v1552 = vld [vmem:[%s4 + $0x8] sm:$0xff]
      %v1553 = vld [vmem:[%s4 + $0x10] sm:$0xff]
      %v1554 = vld [vmem:[%s4 + $0x18] sm:$0xff]
      %v1555 = vld [vmem:[%s4 + $0x20] sm:$0xff]
      %v1556 = vld [vmem:[%s4 + $0x28] sm:$0xff]
      %v1557 = vld [vmem:[%s4 + $0x30] sm:$0xff]
      %v1558 = vld [vmem:[%s4 + $0x38] sm:$0xff]
      %v1559 = vld [vmem:[%s4 + $0x40] sm:$0xff]
      %v1560 = vld [vmem:[%s4 + $0x48] sm:$0xff]
      %v1561 = vld [vmem:[%s4 + $0x50] sm:$0xff]
      %v1562 = vld [vmem:[%s4 + $0x58] sm:$0xff]
      %v1563 = vld [vmem:[%s4 + $0x60] sm:$0xff]
      %v1564 = vld [vmem:[%s4 + $0x68] sm:$0xff]
      %v1565 = vld [vmem:[%s4 + $0x70] sm:$0xff]
      %v1566 = vld [vmem:[%s4 + $0x78] sm:$0xff]
      %v1567 = vld [vmem:[%s4 + $0x80] sm:$0xff]
      %v1568 = vld [vmem:[%s4 + $0x88] sm:$0xff]
      %v1569 = vld [vmem:[%s4 + $0x90] sm:$0xff]
      %v1570 = vld [vmem:[%s4 + $0x98] sm:$0xff]
      %v1571 = vld [vmem:[%s4 + $0xa0] sm:$0xff]
      %v1572 = vld [vmem:[%s4 + $0xa8] sm:$0xff]
      %v1573 = vld [vmem:[%s4 + $0xb0] sm:$0xff]
      %v1574 = vld [vmem:[%s4 + $0xb8] sm:$0xff]
      %v1575 = vld [vmem:[%s4 + $0xc0] sm:$0xff]
      %v1576 = vld [vmem:[%s4 + $0xc8] sm:$0xff]
      %v1577 = vld [vmem:[%s4 + $0xd0] sm:$0xff]
      %v1578 = vld [vmem:[%s4 + $0xd8] sm:$0xff]
      %v1579 = vld [vmem:[%s4 + $0xe0] sm:$0xff]
      %v1580 = vld [vmem:[%s4 + $0xe8] sm:$0xff]
      %v1581 = vld [vmem:[%s4 + $0xf0] sm:$0xff]
      %v1582 = vld [vmem:[%s4 + $0xf8] sm:$0xff]
      %v1583 = vld [vmem:[%s4 + $0x100] sm:$0xff]
      %v1584 = vld [vmem:[%s4 + $0x108] sm:$0xff]
      %v1585 = vld [vmem:[%s4 + $0x110] sm:$0xff]
      %v1586 = vld [vmem:[%s4 + $0x118] sm:$0xff]
      %v1587 = vld [vmem:[%s4 + $0x120] sm:$0xff]
      %v1588 = vld [vmem:[%s4 + $0x128] sm:$0xff]
      %v1589 = vld [vmem:[%s4 + $0x130] sm:$0xff]
      %v1590 = vld [vmem:[%s4 + $0x138] sm:$0xff]
      %v1591 = vld [vmem:[%s4 + $0x140] sm:$0xff]
      %v1592 = vld [vmem:[%s4 + $0x148] sm:$0xff]
      %v1593 = vld [vmem:[%s4 + $0x150] sm:$0xff]
      %v1594 = vld [vmem:[%s4 + $0x158] sm:$0xff]
      %v1595 = vld [vmem:[%s4 + $0x160] sm:$0xff]
      %v1596 = vld [vmem:[%s4 + $0x168] sm:$0xff]
      %v1597 = vld [vmem:[%s4 + $0x170] sm:$0xff]
      %v1598 = vld [vmem:[%s4 + $0x178] sm:$0xff]
      %v1599 = vld [vmem:[%s4 + $0x180] sm:$0xff]
      %v1600 = vld [vmem:[%s4 + $0x188] sm:$0xff]
      %v1601 = vld [vmem:[%s4 + $0x190] sm:$0xff]
      %v1602 = vld [vmem:[%s4 + $0x198] sm:$0xff]
      %v1603 = vld [vmem:[%s4 + $0x1a0] sm:$0xff]
      %v1604 = vld [vmem:[%s4 + $0x1a8] sm:$0xff]
      %v1605 = vld [vmem:[%s4 + $0x1b0] sm:$0xff]
      %v1606 = vld [vmem:[%s4 + $0x1b8] sm:$0xff]
      %v1607 = vld [vmem:[%s4 + $0x1c0] sm:$0xff]
      %v1608 = vld [vmem:[%s4 + $0x1c8] sm:$0xff]
      %v1609 = vld [vmem:[%s4 + $0x1d0] sm:$0xff]
      %v1610 = vld [vmem:[%s4 + $0x1d8] sm:$0xff]
      %v1611 = vld [vmem:[%s4 + $0x1e0] sm:$0xff]
      %v1612 = vld [vmem:[%s4 + $0x1e8] sm:$0xff]
      %v1613 = vld [vmem:[%s4 + $0x1f0] sm:$0xff]
      %v1614 = vld [vmem:[%s4 + $0x1f8] sm:$0xff]
      %1615 = vmatpush.msra.mxu0 %v1611
      %1616 = vmatpush.msra.mxu0 %v1607
      %1617 = vmatpush.msra.mxu0 %v1603
      %1618 = vmatpush.msra.mxu0 %v1599
      %1619 = vmatpush.msra.mxu0 %v1595
      %1620 = vmatpush.msra.mxu0 %v1591
      %1621 = vmatpush.msra.mxu0 %v1587
      %1622 = vmatpush.msra.mxu0 %v1583
      %1623 = vmatpush.msra.mxu0 %v1579
      %1624 = vmatpush.msra.mxu0 %v1575
      %1625 = vmatpush.msra.mxu0 %v1571
      %1626 = vmatpush.msra.mxu0 %v1567
      %1627 = vmatpush.msra.mxu0 %v1563
      %1628 = vmatpush.msra.mxu0 %v1559
      %1629 = vmatpush.msra.mxu0 %v1555
      %1630 = vmatpush.msra.mxu0 %v1551
      %1631 = vmatmul.f32.gmra.mxu0 %v1549
      %v1632 = vpop.f32.mrf.mxu0
      %v1633 = vadd.f32 0.0, %v1632
      %1634 = vdwg.mxu0
      %1635 = vmatpush.msra.mxu0 %v1612
      %1636 = vmatpush.msra.mxu0 %v1608
      %1637 = vmatpush.msra.mxu0 %v1604
      %1638 = vmatpush.msra.mxu0 %v1600
      %1639 = vmatpush.msra.mxu0 %v1596
      %1640 = vmatpush.msra.mxu0 %v1592
      %1641 = vmatpush.msra.mxu0 %v1588
      %1642 = vmatpush.msra.mxu0 %v1584
      %1643 = vmatpush.msra.mxu0 %v1580
      %1644 = vmatpush.msra.mxu0 %v1576
      %1645 = vmatpush.msra.mxu0 %v1572
      %1646 = vmatpush.msra.mxu0 %v1568
      %1647 = vmatpush.msra.mxu0 %v1564
      %1648 = vmatpush.msra.mxu0 %v1560
      %1649 = vmatpush.msra.mxu0 %v1556
      %1650 = vmatpush.msra.mxu0 %v1552
      %1651 = vmatmul.f32.gmra.mxu0 %v1549
      %v1652 = vpop.f32.mrf.mxu0
      %v1653 = vadd.f32 0.0, %v1652
      %1654 = vdwg.mxu0
      %1655 = vmatpush.msra.mxu0 %v1613
      %1656 = vmatpush.msra.mxu0 %v1609
      %1657 = vmatpush.msra.mxu0 %v1605
      %1658 = vmatpush.msra.mxu0 %v1601
      %1659 = vmatpush.msra.mxu0 %v1597
      %1660 = vmatpush.msra.mxu0 %v1593
      %1661 = vmatpush.msra.mxu0 %v1589
      %1662 = vmatpush.msra.mxu0 %v1585
      %1663 = vmatpush.msra.mxu0 %v1581
      %1664 = vmatpush.msra.mxu0 %v1577
      %1665 = vmatpush.msra.mxu0 %v1573
      %1666 = vmatpush.msra.mxu0 %v1569
      %1667 = vmatpush.msra.mxu0 %v1565
      %1668 = vmatpush.msra.mxu0 %v1561
      %1669 = vmatpush.msra.mxu0 %v1557
      %1670 = vmatpush.msra.mxu0 %v1553
      %1671 = vmatmul.f32.gmra.mxu0 %v1549
      %v1672 = vpop.f32.mrf.mxu0
      %v1673 = vadd.f32 0.0, %v1672
      %1674 = vdwg.mxu0
      %1675 = vmatpush.msra.mxu0 %v1614
      %1676 = vmatpush.msra.mxu0 %v1610
      %1677 = vmatpush.msra.mxu0 %v1606
      %1678 = vmatpush.msra.mxu0 %v1602
      %1679 = vmatpush.msra.mxu0 %v1598
      %1680 = vmatpush.msra.mxu0 %v1594
      %1681 = vmatpush.msra.mxu0 %v1590
      %1682 = vmatpush.msra.mxu0 %v1586
      %1683 = vmatpush.msra.mxu0 %v1582
      %1684 = vmatpush.msra.mxu0 %v1578
      %1685 = vmatpush.msra.mxu0 %v1574
      %1686 = vmatpush.msra.mxu0 %v1570
      %1687 = vmatpush.msra.mxu0 %v1566
      %1688 = vmatpush.msra.mxu0 %v1562
      %1689 = vmatpush.msra.mxu0 %v1558
      %1690 = vmatpush.msra.mxu0 %v1554
      %1691 = vmatmul.f32.gmra.mxu0 %v1549
      %v1692 = vpop.f32.mrf.mxu0
      %v1693 = vadd.f32 0.0, %v1692
      %1694 = vdwg.mxu0
      %v1695 = vadd.f32 %v1545, %v1633
      %v1696 = vadd.f32 %v1546, %v1653
      %v1697 = vadd.f32 %v1547, %v1673
      %v1698 = vadd.f32 %v1548, %v1693
      %v1699 = vxor.u32 %v1695, 2147483648
      %v1700 = vmul.f32 %v1699, 1.442695
      %v1701 = vpow.pop %v1700
      %v1702 = vadd.f32 %v1701, 1.0
      %v1703 = vrcp.pop %v1702
      %v1704 = vmul.f32 %v1702, %v1703
      %v1705 = vsub.f32 1.0, %v1704
      %v1706 = vmul.f32 %v1703, %v1705
      %v1707 = vadd.f32 %v1703, %v1706
      %vm1708 = vweird.f32 %v1702
      %vm1709 = vweird.f32 %v1703
      %vm1710 = vmor %vm1708, %vm1709
      %v1711 = vsel %vm1710, %v1703, %v1707
      %v1712 = vand.u32 2147483647, %v1702
      %vm1713 = vcmp.eq.f32.partialorder %v1712, 8.507059e+37
      %v1714 = vand.u32 %v1702, 2147483648
      %v1715 = vor.u32 1.1754944e-38, %v1714
      %v1716 = vsel %vm1713, %v1715, %v1711
      %v1717 = vmul.f32 1.0, %v1716
      %v1718 = vxor.u32 %v1696, 2147483648
      %v1719 = vmul.f32 %v1718, 1.442695
      %v1720 = vpow.pop %v1719
      %v1721 = vadd.f32 %v1720, 1.0
      %v1722 = vrcp.pop %v1721
      %v1723 = vmul.f32 %v1721, %v1722
      %v1724 = vsub.f32 1.0, %v1723
      %v1725 = vmul.f32 %v1722, %v1724
      %v1726 = vadd.f32 %v1722, %v1725
      %vm1727 = vweird.f32 %v1721
      %vm1728 = vweird.f32 %v1722
      %vm1729 = vmor %vm1727, %vm1728
      %v1730 = vsel %vm1729, %v1722, %v1726
      %v1731 = vand.u32 2147483647, %v1721
      %vm1732 = vcmp.eq.f32.partialorder %v1731, 8.507059e+37
      %v1733 = vand.u32 %v1721, 2147483648
      %v1734 = vor.u32 1.1754944e-38, %v1733
      %v1735 = vsel %vm1732, %v1734, %v1730
      %v1736 = vmul.f32 1.0, %v1735
      %v1737 = vtanh.pop %v1697
      %v1738 = vxor.u32 %v1698, 2147483648
      %v1739 = vmul.f32 %v1738, 1.442695
      %v1740 = vpow.pop %v1739
      %v1741 = vadd.f32 %v1740, 1.0
      %v1742 = vrcp.pop %v1741
      %v1743 = vmul.f32 %v1741, %v1742
      %v1744 = vsub.f32 1.0, %v1743
      %v1745 = vmul.f32 %v1742, %v1744
      %v1746 = vadd.f32 %v1742, %v1745
      %vm1747 = vweird.f32 %v1741
      %vm1748 = vweird.f32 %v1742
      %vm1749 = vmor %vm1747, %vm1748
      %v1750 = vsel %vm1749, %v1742, %v1746
      %v1751 = vand.u32 2147483647, %v1741
      %vm1752 = vcmp.eq.f32.partialorder %v1751, 8.507059e+37
      %v1753 = vand.u32 %v1741, 2147483648
      %v1754 = vor.u32 1.1754944e-38, %v1753
      %v1755 = vsel %vm1752, %v1754, %v1750
      %v1756 = vmul.f32 1.0, %v1755
      %v1757 = vmul.f32 %v1736, %v1550
      %v1758 = vmul.f32 %v1717, %v1737
      %v1759 = vadd.f32 %v1757, %v1758
      %v1760 = vtanh.pop %v1759
      %v1761 = vmul.f32 %v1756, %v1760
      %v1762 = vld [vmem:[%s571] sm:$0xff]
      %v1763 = vld [vmem:[%s573] sm:$0xff]
      %v1764 = vld [vmem:[%s5] sm:$0xff]
      %v1765 = vld [vmem:[%s5 + $0x8] sm:$0xff]
      %v1766 = vld [vmem:[%s5 + $0x10] sm:$0xff]
      %v1767 = vld [vmem:[%s5 + $0x18] sm:$0xff]
      %v1768 = vld [vmem:[%s5 + $0x20] sm:$0xff]
      %v1769 = vld [vmem:[%s5 + $0x28] sm:$0xff]
      %v1770 = vld [vmem:[%s5 + $0x30] sm:$0xff]
      %v1771 = vld [vmem:[%s5 + $0x38] sm:$0xff]
      %v1772 = vld [vmem:[%s5 + $0x40] sm:$0xff]
      %v1773 = vld [vmem:[%s5 + $0x48] sm:$0xff]
      %v1774 = vld [vmem:[%s5 + $0x50] sm:$0xff]
      %v1775 = vld [vmem:[%s5 + $0x58] sm:$0xff]
      %v1776 = vld [vmem:[%s5 + $0x60] sm:$0xff]
      %v1777 = vld [vmem:[%s5 + $0x68] sm:$0xff]
      %v1778 = vld [vmem:[%s5 + $0x70] sm:$0xff]
      %v1779 = vld [vmem:[%s5 + $0x78] sm:$0xff]
      %v1780 = vld [vmem:[%s5 + $0x80] sm:$0xff]
      %v1781 = vld [vmem:[%s5 + $0x88] sm:$0xff]
      %v1782 = vld [vmem:[%s5 + $0x90] sm:$0xff]
      %v1783 = vld [vmem:[%s5 + $0x98] sm:$0xff]
      %v1784 = vld [vmem:[%s5 + $0xa0] sm:$0xff]
      %v1785 = vld [vmem:[%s5 + $0xa8] sm:$0xff]
      %v1786 = vld [vmem:[%s5 + $0xb0] sm:$0xff]
      %v1787 = vld [vmem:[%s5 + $0xb8] sm:$0xff]
      %v1788 = vld [vmem:[%s5 + $0xc0] sm:$0xff]
      %v1789 = vld [vmem:[%s5 + $0xc8] sm:$0xff]
      %v1790 = vld [vmem:[%s5 + $0xd0] sm:$0xff]
      %v1791 = vld [vmem:[%s5 + $0xd8] sm:$0xff]
      %v1792 = vld [vmem:[%s5 + $0xe0] sm:$0xff]
      %v1793 = vld [vmem:[%s5 + $0xe8] sm:$0xff]
      %v1794 = vld [vmem:[%s5 + $0xf0] sm:$0xff]
      %v1795 = vld [vmem:[%s5 + $0xf8] sm:$0xff]
      %v1796 = vld [vmem:[%s5 + $0x100] sm:$0xff]
      %v1797 = vld [vmem:[%s5 + $0x108] sm:$0xff]
      %v1798 = vld [vmem:[%s5 + $0x110] sm:$0xff]
      %v1799 = vld [vmem:[%s5 + $0x118] sm:$0xff]
      %v1800 = vld [vmem:[%s5 + $0x120] sm:$0xff]
      %v1801 = vld [vmem:[%s5 + $0x128] sm:$0xff]
      %v1802 = vld [vmem:[%s5 + $0x130] sm:$0xff]
      %v1803 = vld [vmem:[%s5 + $0x138] sm:$0xff]
      %v1804 = vld [vmem:[%s5 + $0x140] sm:$0xff]
      %v1805 = vld [vmem:[%s5 + $0x148] sm:$0xff]
      %v1806 = vld [vmem:[%s5 + $0x150] sm:$0xff]
      %v1807 = vld [vmem:[%s5 + $0x158] sm:$0xff]
      %v1808 = vld [vmem:[%s5 + $0x160] sm:$0xff]
      %v1809 = vld [vmem:[%s5 + $0x168] sm:$0xff]
      %v1810 = vld [vmem:[%s5 + $0x170] sm:$0xff]
      %v1811 = vld [vmem:[%s5 + $0x178] sm:$0xff]
      %v1812 = vld [vmem:[%s5 + $0x180] sm:$0xff]
      %v1813 = vld [vmem:[%s5 + $0x188] sm:$0xff]
      %v1814 = vld [vmem:[%s5 + $0x190] sm:$0xff]
      %v1815 = vld [vmem:[%s5 + $0x198] sm:$0xff]
      %v1816 = vld [vmem:[%s5 + $0x1a0] sm:$0xff]
      %v1817 = vld [vmem:[%s5 + $0x1a8] sm:$0xff]
      %v1818 = vld [vmem:[%s5 + $0x1b0] sm:$0xff]
      %v1819 = vld [vmem:[%s5 + $0x1b8] sm:$0xff]
      %v1820 = vld [vmem:[%s5 + $0x1c0] sm:$0xff]
      %v1821 = vld [vmem:[%s5 + $0x1c8] sm:$0xff]
      %v1822 = vld [vmem:[%s5 + $0x1d0] sm:$0xff]
      %v1823 = vld [vmem:[%s5 + $0x1d8] sm:$0xff]
      %v1824 = vld [vmem:[%s5 + $0x1e0] sm:$0xff]
      %v1825 = vld [vmem:[%s5 + $0x1e8] sm:$0xff]
      %v1826 = vld [vmem:[%s5 + $0x1f0] sm:$0xff]
      %v1827 = vld [vmem:[%s5 + $0x1f8] sm:$0xff]
      %v1828 = vld [vmem:[%s5 + $0x200] sm:$0xff]
      %v1829 = vld [vmem:[%s5 + $0x208] sm:$0xff]
      %v1830 = vld [vmem:[%s5 + $0x210] sm:$0xff]
      %v1831 = vld [vmem:[%s5 + $0x218] sm:$0xff]
      %v1832 = vld [vmem:[%s5 + $0x220] sm:$0xff]
      %v1833 = vld [vmem:[%s5 + $0x228] sm:$0xff]
      %v1834 = vld [vmem:[%s5 + $0x230] sm:$0xff]
      %v1835 = vld [vmem:[%s5 + $0x238] sm:$0xff]
      %v1836 = vld [vmem:[%s5 + $0x240] sm:$0xff]
      %v1837 = vld [vmem:[%s5 + $0x248] sm:$0xff]
      %v1838 = vld [vmem:[%s5 + $0x250] sm:$0xff]
      %v1839 = vld [vmem:[%s5 + $0x258] sm:$0xff]
      %v1840 = vld [vmem:[%s5 + $0x260] sm:$0xff]
      %v1841 = vld [vmem:[%s5 + $0x268] sm:$0xff]
      %v1842 = vld [vmem:[%s5 + $0x270] sm:$0xff]
      %v1843 = vld [vmem:[%s5 + $0x278] sm:$0xff]
      %v1844 = vld [vmem:[%s5 + $0x280] sm:$0xff]
      %v1845 = vld [vmem:[%s5 + $0x288] sm:$0xff]
      %v1846 = vld [vmem:[%s5 + $0x290] sm:$0xff]
      %v1847 = vld [vmem:[%s5 + $0x298] sm:$0xff]
      %v1848 = vld [vmem:[%s5 + $0x2a0] sm:$0xff]
      %v1849 = vld [vmem:[%s5 + $0x2a8] sm:$0xff]
      %v1850 = vld [vmem:[%s5 + $0x2b0] sm:$0xff]
      %v1851 = vld [vmem:[%s5 + $0x2b8] sm:$0xff]
      %v1852 = vld [vmem:[%s5 + $0x2c0] sm:$0xff]
      %v1853 = vld [vmem:[%s5 + $0x2c8] sm:$0xff]
      %v1854 = vld [vmem:[%s5 + $0x2d0] sm:$0xff]
      %v1855 = vld [vmem:[%s5 + $0x2d8] sm:$0xff]
      %v1856 = vld [vmem:[%s5 + $0x2e0] sm:$0xff]
      %v1857 = vld [vmem:[%s5 + $0x2e8] sm:$0xff]
      %v1858 = vld [vmem:[%s5 + $0x2f0] sm:$0xff]
      %v1859 = vld [vmem:[%s5 + $0x2f8] sm:$0xff]
      %v1860 = vld [vmem:[%s5 + $0x300] sm:$0xff]
      %v1861 = vld [vmem:[%s5 + $0x308] sm:$0xff]
      %v1862 = vld [vmem:[%s5 + $0x310] sm:$0xff]
      %v1863 = vld [vmem:[%s5 + $0x318] sm:$0xff]
      %v1864 = vld [vmem:[%s5 + $0x320] sm:$0xff]
      %v1865 = vld [vmem:[%s5 + $0x328] sm:$0xff]
      %v1866 = vld [vmem:[%s5 + $0x330] sm:$0xff]
      %v1867 = vld [vmem:[%s5 + $0x338] sm:$0xff]
      %v1868 = vld [vmem:[%s5 + $0x340] sm:$0xff]
      %v1869 = vld [vmem:[%s5 + $0x348] sm:$0xff]
      %v1870 = vld [vmem:[%s5 + $0x350] sm:$0xff]
      %v1871 = vld [vmem:[%s5 + $0x358] sm:$0xff]
      %v1872 = vld [vmem:[%s5 + $0x360] sm:$0xff]
      %v1873 = vld [vmem:[%s5 + $0x368] sm:$0xff]
      %v1874 = vld [vmem:[%s5 + $0x370] sm:$0xff]
      %v1875 = vld [vmem:[%s5 + $0x378] sm:$0xff]
      %v1876 = vld [vmem:[%s5 + $0x380] sm:$0xff]
      %v1877 = vld [vmem:[%s5 + $0x388] sm:$0xff]
      %v1878 = vld [vmem:[%s5 + $0x390] sm:$0xff]
      %v1879 = vld [vmem:[%s5 + $0x398] sm:$0xff]
      %v1880 = vld [vmem:[%s5 + $0x3a0] sm:$0xff]
      %v1881 = vld [vmem:[%s5 + $0x3a8] sm:$0xff]
      %v1882 = vld [vmem:[%s5 + $0x3b0] sm:$0xff]
      %v1883 = vld [vmem:[%s5 + $0x3b8] sm:$0xff]
      %v1884 = vld [vmem:[%s5 + $0x3c0] sm:$0xff]
      %v1885 = vld [vmem:[%s5 + $0x3c8] sm:$0xff]
      %v1886 = vld [vmem:[%s5 + $0x3d0] sm:$0xff]
      %v1887 = vld [vmem:[%s5 + $0x3d8] sm:$0xff]
      %v1888 = vld [vmem:[%s5 + $0x3e0] sm:$0xff]
      %v1889 = vld [vmem:[%s5 + $0x3e8] sm:$0xff]
      %v1890 = vld [vmem:[%s5 + $0x3f0] sm:$0xff]
      %v1891 = vld [vmem:[%s5 + $0x3f8] sm:$0xff]
      %v1892 = vld [vmem:[%s6] sm:$0xf]
      %v1894 = vperm.slane %v1892, 0
      %v1895 = vperm.slane %v1892, 1
      %v1896 = vperm.slane %v1892, 2
      %v1897 = vperm.slane %v1892, 3
      %1902 = vmatpush.msra.mxu0 %v1824
      %1903 = vmatpush.msra.mxu0 %v1820
      %1904 = vmatpush.msra.mxu0 %v1816
      %1905 = vmatpush.msra.mxu0 %v1812
      %1906 = vmatpush.msra.mxu0 %v1808
      %1907 = vmatpush.msra.mxu0 %v1804
      %1908 = vmatpush.msra.mxu0 %v1800
      %1909 = vmatpush.msra.mxu0 %v1796
      %1910 = vmatpush.msra.mxu0 %v1792
      %1911 = vmatpush.msra.mxu0 %v1788
      %1912 = vmatpush.msra.mxu0 %v1784
      %1913 = vmatpush.msra.mxu0 %v1780
      %1914 = vmatpush.msra.mxu0 %v1776
      %1915 = vmatpush.msra.mxu0 %v1772
      %1916 = vmatpush.msra.mxu0 %v1768
      %1917 = vmatpush.msra.mxu0 %v1764
      %1918 = vmatmul.f32.gmra.mxu0 %v1761
      %v1919 = vpop.f32.mrf.mxu0
      %v1920 = vadd.f32 %v1894, %v1919
      %1921 = vdwg.mxu0
      %1922 = vmatpush.msra.mxu0 %v1888
      %1923 = vmatpush.msra.mxu0 %v1884
      %1924 = vmatpush.msra.mxu0 %v1880
      %1925 = vmatpush.msra.mxu0 %v1876
      %1926 = vmatpush.msra.mxu0 %v1872
      %1927 = vmatpush.msra.mxu0 %v1868
      %1928 = vmatpush.msra.mxu0 %v1864
      %1929 = vmatpush.msra.mxu0 %v1860
      %1930 = vmatpush.msra.mxu0 %v1856
      %1931 = vmatpush.msra.mxu0 %v1852
      %1932 = vmatpush.msra.mxu0 %v1848
      %1933 = vmatpush.msra.mxu0 %v1844
      %1934 = vmatpush.msra.mxu0 %v1840
      %1935 = vmatpush.msra.mxu0 %v1836
      %1936 = vmatpush.msra.mxu0 %v1832
      %1937 = vmatpush.msra.mxu0 %v1828
      %1938 = vmatmul.f32.gmra.mxu0 %v1762
      %v1939 = vpop.f32.mrf.mxu0
      %v1940 = vadd.f32 %v1920, %v1939
      %1941 = vdwg.mxu0
      %1942 = vmatpush.msra.mxu0 %v1825
      %1943 = vmatpush.msra.mxu0 %v1821
      %1944 = vmatpush.msra.mxu0 %v1817
      %1945 = vmatpush.msra.mxu0 %v1813
      %1946 = vmatpush.msra.mxu0 %v1809
      %1947 = vmatpush.msra.mxu0 %v1805
      %1948 = vmatpush.msra.mxu0 %v1801
      %1949 = vmatpush.msra.mxu0 %v1797
      %1950 = vmatpush.msra.mxu0 %v1793
      %1951 = vmatpush.msra.mxu0 %v1789
      %1952 = vmatpush.msra.mxu0 %v1785
      %1953 = vmatpush.msra.mxu0 %v1781
      %1954 = vmatpush.msra.mxu0 %v1777
      %1955 = vmatpush.msra.mxu0 %v1773
      %1956 = vmatpush.msra.mxu0 %v1769
      %1957 = vmatpush.msra.mxu0 %v1765
      %1958 = vmatmul.f32.gmra.mxu0 %v1761
      %v1959 = vpop.f32.mrf.mxu0
      %v1960 = vadd.f32 %v1895, %v1959
      %1961 = vdwg.mxu0
      %1962 = vmatpush.msra.mxu0 %v1889
      %1963 = vmatpush.msra.mxu0 %v1885
      %1964 = vmatpush.msra.mxu0 %v1881
      %1965 = vmatpush.msra.mxu0 %v1877
      %1966 = vmatpush.msra.mxu0 %v1873
      %1967 = vmatpush.msra.mxu0 %v1869
      %1968 = vmatpush.msra.mxu0 %v1865
      %1969 = vmatpush.msra.mxu0 %v1861
      %1970 = vmatpush.msra.mxu0 %v1857
      %1971 = vmatpush.msra.mxu0 %v1853
      %1972 = vmatpush.msra.mxu0 %v1849
      %1973 = vmatpush.msra.mxu0 %v1845
      %1974 = vmatpush.msra.mxu0 %v1841
      %1975 = vmatpush.msra.mxu0 %v1837
      %1976 = vmatpush.msra.mxu0 %v1833
      %1977 = vmatpush.msra.mxu0 %v1829
      %1978 = vmatmul.f32.gmra.mxu0 %v1762
      %v1979 = vpop.f32.mrf.mxu0
      %v1980 = vadd.f32 %v1960, %v1979
      %1981 = vdwg.mxu0
      %1982 = vmatpush.msra.mxu0 %v1826
      %1983 = vmatpush.msra.mxu0 %v1822
      %1984 = vmatpush.msra.mxu0 %v1818
      %1985 = vmatpush.msra.mxu0 %v1814
      %1986 = vmatpush.msra.mxu0 %v1810
      %1987 = vmatpush.msra.mxu0 %v1806
      %1988 = vmatpush.msra.mxu0 %v1802
      %1989 = vmatpush.msra.mxu0 %v1798
      %1990 = vmatpush.msra.mxu0 %v1794
      %1991 = vmatpush.msra.mxu0 %v1790
      %1992 = vmatpush.msra.mxu0 %v1786
      %1993 = vmatpush.msra.mxu0 %v1782
      %1994 = vmatpush.msra.mxu0 %v1778
      %1995 = vmatpush.msra.mxu0 %v1774
      %1996 = vmatpush.msra.mxu0 %v1770
      %1997 = vmatpush.msra.mxu0 %v1766
      %1998 = vmatmul.f32.gmra.mxu0 %v1761
      %v1999 = vpop.f32.mrf.mxu0
      %v2000 = vadd.f32 %v1896, %v1999
      %2001 = vdwg.mxu0
      %2002 = vmatpush.msra.mxu0 %v1890
      %2003 = vmatpush.msra.mxu0 %v1886
      %2004 = vmatpush.msra.mxu0 %v1882
      %2005 = vmatpush.msra.mxu0 %v1878
      %2006 = vmatpush.msra.mxu0 %v1874
      %2007 = vmatpush.msra.mxu0 %v1870
      %2008 = vmatpush.msra.mxu0 %v1866
      %2009 = vmatpush.msra.mxu0 %v1862
      %2010 = vmatpush.msra.mxu0 %v1858
      %2011 = vmatpush.msra.mxu0 %v1854
      %2012 = vmatpush.msra.mxu0 %v1850
      %2013 = vmatpush.msra.mxu0 %v1846
      %2014 = vmatpush.msra.mxu0 %v1842
      %2015 = vmatpush.msra.mxu0 %v1838
      %2016 = vmatpush.msra.mxu0 %v1834
      %2017 = vmatpush.msra.mxu0 %v1830
      %2018 = vmatmul.f32.gmra.mxu0 %v1762
      %v2019 = vpop.f32.mrf.mxu0
      %v2020 = vadd.f32 %v2000, %v2019
      %2021 = vdwg.mxu0
      %2022 = vmatpush.msra.mxu0 %v1827
      %2023 = vmatpush.msra.mxu0 %v1823
      %2024 = vmatpush.msra.mxu0 %v1819
      %2025 = vmatpush.msra.mxu0 %v1815
      %2026 = vmatpush.msra.mxu0 %v1811
      %2027 = vmatpush.msra.mxu0 %v1807
      %2028 = vmatpush.msra.mxu0 %v1803
      %2029 = vmatpush.msra.mxu0 %v1799
      %2030 = vmatpush.msra.mxu0 %v1795
      %2031 = vmatpush.msra.mxu0 %v1791
      %2032 = vmatpush.msra.mxu0 %v1787
      %2033 = vmatpush.msra.mxu0 %v1783
      %2034 = vmatpush.msra.mxu0 %v1779
      %2035 = vmatpush.msra.mxu0 %v1775
      %2036 = vmatpush.msra.mxu0 %v1771
      %2037 = vmatpush.msra.mxu0 %v1767
      %2038 = vmatmul.f32.gmra.mxu0 %v1761
      %v2039 = vpop.f32.mrf.mxu0
      %v2040 = vadd.f32 %v1897, %v2039
      %2041 = vdwg.mxu0
      %2042 = vmatpush.msra.mxu0 %v1891
      %2043 = vmatpush.msra.mxu0 %v1887
      %2044 = vmatpush.msra.mxu0 %v1883
      %2045 = vmatpush.msra.mxu0 %v1879
      %2046 = vmatpush.msra.mxu0 %v1875
      %2047 = vmatpush.msra.mxu0 %v1871
      %2048 = vmatpush.msra.mxu0 %v1867
      %2049 = vmatpush.msra.mxu0 %v1863
      %2050 = vmatpush.msra.mxu0 %v1859
      %2051 = vmatpush.msra.mxu0 %v1855
      %2052 = vmatpush.msra.mxu0 %v1851
      %2053 = vmatpush.msra.mxu0 %v1847
      %2054 = vmatpush.msra.mxu0 %v1843
      %2055 = vmatpush.msra.mxu0 %v1839
      %2056 = vmatpush.msra.mxu0 %v1835
      %2057 = vmatpush.msra.mxu0 %v1831
      %2058 = vmatmul.f32.gmra.mxu0 %v1762
      %v2059 = vpop.f32.mrf.mxu0
      %v2060 = vadd.f32 %v2040, %v2059
      %2061 = vdwg.mxu0
      %v2062 = vxor.u32 %v1940, 2147483648
      %v2063 = vmul.f32 %v2062, 1.442695
      %v2064 = vpow.pop %v2063
      %v2065 = vadd.f32 %v2064, 1.0
      %v2066 = vrcp.pop %v2065
      %v2067 = vmul.f32 %v2065, %v2066
      %v2068 = vsub.f32 1.0, %v2067
      %v2069 = vmul.f32 %v2066, %v2068
      %v2070 = vadd.f32 %v2066, %v2069
      %vm2071 = vweird.f32 %v2065
      %vm2072 = vweird.f32 %v2066
      %vm2073 = vmor %vm2071, %vm2072
      %v2074 = vsel %vm2073, %v2066, %v2070
      %v2075 = vand.u32 2147483647, %v2065
      %vm2076 = vcmp.eq.f32.partialorder %v2075, 8.507059e+37
      %v2077 = vand.u32 %v2065, 2147483648
      %v2078 = vor.u32 1.1754944e-38, %v2077
      %v2079 = vsel %vm2076, %v2078, %v2074
      %v2080 = vmul.f32 1.0, %v2079
      %v2081 = vxor.u32 %v1980, 2147483648
      %v2082 = vmul.f32 %v2081, 1.442695
      %v2083 = vpow.pop %v2082
      %v2084 = vadd.f32 %v2083, 1.0
      %v2085 = vrcp.pop %v2084
      %v2086 = vmul.f32 %v2084, %v2085
      %v2087 = vsub.f32 1.0, %v2086
      %v2088 = vmul.f32 %v2085, %v2087
      %v2089 = vadd.f32 %v2085, %v2088
      %vm2090 = vweird.f32 %v2084
      %vm2091 = vweird.f32 %v2085
      %vm2092 = vmor %vm2090, %vm2091
      %v2093 = vsel %vm2092, %v2085, %v2089
      %v2094 = vand.u32 2147483647, %v2084
      %vm2095 = vcmp.eq.f32.partialorder %v2094, 8.507059e+37
      %v2096 = vand.u32 %v2084, 2147483648
      %v2097 = vor.u32 1.1754944e-38, %v2096
      %v2098 = vsel %vm2095, %v2097, %v2093
      %v2099 = vmul.f32 1.0, %v2098
      %v2100 = vtanh.pop %v2020
      %v2101 = vxor.u32 %v2060, 2147483648
      %v2102 = vmul.f32 %v2101, 1.442695
      %v2103 = vpow.pop %v2102
      %v2104 = vadd.f32 %v2103, 1.0
      %v2105 = vrcp.pop %v2104
      %v2106 = vmul.f32 %v2104, %v2105
      %v2107 = vsub.f32 1.0, %v2106
      %v2108 = vmul.f32 %v2105, %v2107
      %v2109 = vadd.f32 %v2105, %v2108
      %vm2110 = vweird.f32 %v2104
      %vm2111 = vweird.f32 %v2105
      %vm2112 = vmor %vm2110, %vm2111
      %v2113 = vsel %vm2112, %v2105, %v2109
      %v2114 = vand.u32 2147483647, %v2104
      %vm2115 = vcmp.eq.f32.partialorder %v2114, 8.507059e+37
      %v2116 = vand.u32 %v2104, 2147483648
      %v2117 = vor.u32 1.1754944e-38, %v2116
      %v2118 = vsel %vm2115, %v2117, %v2113
      %v2119 = vmul.f32 1.0, %v2118
      %v2120 = vmul.f32 %v2099, %v1763
      %v2121 = vmul.f32 %v2080, %v2100
      %v2122 = vadd.f32 %v2120, %v2121
      %v2123 = vtanh.pop %v2122
      %v2124 = vmul.f32 %v2119, %v2123
      %s2125 = scalar_lea.vmem %s332, 16
      %2126 = vst [vmem:[%s2125] sm:$0xff] %v2124
      %2127 = vst [vmem:[%s8] sm:$0xff] %v1761
      %2128 = vst [vmem:[%s9] sm:$0xff] %v1759
      %2129 = vst [vmem:[%s571] sm:$0xff] %v2124
      %2130 = vst [vmem:[%s573] sm:$0xff] %v2122
      %s2131 = scalar_lea.vmem %s326, 96
      %v2132 = vld [vmem:[%s2131] sm:$0xff]
      %v2133 = vld [vmem:[%s2131 + $0x8] sm:$0xff]
      %v2134 = vld [vmem:[%s2131 + $0x10] sm:$0xff]
      %v2135 = vld [vmem:[%s2131 + $0x18] sm:$0xff]
      %v2136 = vld [vmem:[%s1] sm:$0xff]
      %v2137 = vld [vmem:[%s1 + $0x8] sm:$0xff]
      %v2138 = vld [vmem:[%s1 + $0x10] sm:$0xff]
      %v2139 = vld [vmem:[%s1 + $0x18] sm:$0xff]
      %v2140 = vadd.f32 %v2132, %v2136
      %v2141 = vadd.f32 %v2133, %v2137
      %v2142 = vadd.f32 %v2134, %v2138
      %v2143 = vadd.f32 %v2135, %v2139
      %v2144 = vld [vmem:[%s8] sm:$0xff]
      %v2145 = vld [vmem:[%s9] sm:$0xff]
      %v2146 = vld [vmem:[%s4] sm:$0xff]
      %v2147 = vld [vmem:[%s4 + $0x8] sm:$0xff]
      %v2148 = vld [vmem:[%s4 + $0x10] sm:$0xff]
      %v2149 = vld [vmem:[%s4 + $0x18] sm:$0xff]
      %v2150 = vld [vmem:[%s4 + $0x20] sm:$0xff]
      %v2151 = vld [vmem:[%s4 + $0x28] sm:$0xff]
      %v2152 = vld [vmem:[%s4 + $0x30] sm:$0xff]
      %v2153 = vld [vmem:[%s4 + $0x38] sm:$0xff]
      %v2154 = vld [vmem:[%s4 + $0x40] sm:$0xff]
      %v2155 = vld [vmem:[%s4 + $0x48] sm:$0xff]
      %v2156 = vld [vmem:[%s4 + $0x50] sm:$0xff]
      %v2157 = vld [vmem:[%s4 + $0x58] sm:$0xff]
      %v2158 = vld [vmem:[%s4 + $0x60] sm:$0xff]
      %v2159 = vld [vmem:[%s4 + $0x68] sm:$0xff]
      %v2160 = vld [vmem:[%s4 + $0x70] sm:$0xff]
      %v2161 = vld [vmem:[%s4 + $0x78] sm:$0xff]
      %v2162 = vld [vmem:[%s4 + $0x80] sm:$0xff]
      %v2163 = vld [vmem:[%s4 + $0x88] sm:$0xff]
      %v2164 = vld [vmem:[%s4 + $0x90] sm:$0xff]
      %v2165 = vld [vmem:[%s4 + $0x98] sm:$0xff]
      %v2166 = vld [vmem:[%s4 + $0xa0] sm:$0xff]
      %v2167 = vld [vmem:[%s4 + $0xa8] sm:$0xff]
      %v2168 = vld [vmem:[%s4 + $0xb0] sm:$0xff]
      %v2169 = vld [vmem:[%s4 + $0xb8] sm:$0xff]
      %v2170 = vld [vmem:[%s4 + $0xc0] sm:$0xff]
      %v2171 = vld [vmem:[%s4 + $0xc8] sm:$0xff]
      %v2172 = vld [vmem:[%s4 + $0xd0] sm:$0xff]
      %v2173 = vld [vmem:[%s4 + $0xd8] sm:$0xff]
      %v2174 = vld [vmem:[%s4 + $0xe0] sm:$0xff]
      %v2175 = vld [vmem:[%s4 + $0xe8] sm:$0xff]
      %v2176 = vld [vmem:[%s4 + $0xf0] sm:$0xff]
      %v2177 = vld [vmem:[%s4 + $0xf8] sm:$0xff]
      %v2178 = vld [vmem:[%s4 + $0x100] sm:$0xff]
      %v2179 = vld [vmem:[%s4 + $0x108] sm:$0xff]
      %v2180 = vld [vmem:[%s4 + $0x110] sm:$0xff]
      %v2181 = vld [vmem:[%s4 + $0x118] sm:$0xff]
      %v2182 = vld [vmem:[%s4 + $0x120] sm:$0xff]
      %v2183 = vld [vmem:[%s4 + $0x128] sm:$0xff]
      %v2184 = vld [vmem:[%s4 + $0x130] sm:$0xff]
      %v2185 = vld [vmem:[%s4 + $0x138] sm:$0xff]
      %v2186 = vld [vmem:[%s4 + $0x140] sm:$0xff]
      %v2187 = vld [vmem:[%s4 + $0x148] sm:$0xff]
      %v2188 = vld [vmem:[%s4 + $0x150] sm:$0xff]
      %v2189 = vld [vmem:[%s4 + $0x158] sm:$0xff]
      %v2190 = vld [vmem:[%s4 + $0x160] sm:$0xff]
      %v2191 = vld [vmem:[%s4 + $0x168] sm:$0xff]
      %v2192 = vld [vmem:[%s4 + $0x170] sm:$0xff]
      %v2193 = vld [vmem:[%s4 + $0x178] sm:$0xff]
      %v2194 = vld [vmem:[%s4 + $0x180] sm:$0xff]
      %v2195 = vld [vmem:[%s4 + $0x188] sm:$0xff]
      %v2196 = vld [vmem:[%s4 + $0x190] sm:$0xff]
      %v2197 = vld [vmem:[%s4 + $0x198] sm:$0xff]
      %v2198 = vld [vmem:[%s4 + $0x1a0] sm:$0xff]
      %v2199 = vld [vmem:[%s4 + $0x1a8] sm:$0xff]
      %v2200 = vld [vmem:[%s4 + $0x1b0] sm:$0xff]
      %v2201 = vld [vmem:[%s4 + $0x1b8] sm:$0xff]
      %v2202 = vld [vmem:[%s4 + $0x1c0] sm:$0xff]
      %v2203 = vld [vmem:[%s4 + $0x1c8] sm:$0xff]
      %v2204 = vld [vmem:[%s4 + $0x1d0] sm:$0xff]
      %v2205 = vld [vmem:[%s4 + $0x1d8] sm:$0xff]
      %v2206 = vld [vmem:[%s4 + $0x1e0] sm:$0xff]
      %v2207 = vld [vmem:[%s4 + $0x1e8] sm:$0xff]
      %v2208 = vld [vmem:[%s4 + $0x1f0] sm:$0xff]
      %v2209 = vld [vmem:[%s4 + $0x1f8] sm:$0xff]
      %2210 = vmatpush.msra.mxu0 %v2206
      %2211 = vmatpush.msra.mxu0 %v2202
      %2212 = vmatpush.msra.mxu0 %v2198
      %2213 = vmatpush.msra.mxu0 %v2194
      %2214 = vmatpush.msra.mxu0 %v2190
      %2215 = vmatpush.msra.mxu0 %v2186
      %2216 = vmatpush.msra.mxu0 %v2182
      %2217 = vmatpush.msra.mxu0 %v2178
      %2218 = vmatpush.msra.mxu0 %v2174
      %2219 = vmatpush.msra.mxu0 %v2170
      %2220 = vmatpush.msra.mxu0 %v2166
      %2221 = vmatpush.msra.mxu0 %v2162
      %2222 = vmatpush.msra.mxu0 %v2158
      %2223 = vmatpush.msra.mxu0 %v2154
      %2224 = vmatpush.msra.mxu0 %v2150
      %2225 = vmatpush.msra.mxu0 %v2146
      %2226 = vmatmul.f32.gmra.mxu0 %v2144
      %v2227 = vpop.f32.mrf.mxu0
      %v2228 = vadd.f32 0.0, %v2227
      %2229 = vdwg.mxu0
      %2230 = vmatpush.msra.mxu0 %v2207
      %2231 = vmatpush.msra.mxu0 %v2203
      %2232 = vmatpush.msra.mxu0 %v2199
      %2233 = vmatpush.msra.mxu0 %v2195
      %2234 = vmatpush.msra.mxu0 %v2191
      %2235 = vmatpush.msra.mxu0 %v2187
      %2236 = vmatpush.msra.mxu0 %v2183
      %2237 = vmatpush.msra.mxu0 %v2179
      %2238 = vmatpush.msra.mxu0 %v2175
      %2239 = vmatpush.msra.mxu0 %v2171
      %2240 = vmatpush.msra.mxu0 %v2167
      %2241 = vmatpush.msra.mxu0 %v2163
      %2242 = vmatpush.msra.mxu0 %v2159
      %2243 = vmatpush.msra.mxu0 %v2155
      %2244 = vmatpush.msra.mxu0 %v2151
      %2245 = vmatpush.msra.mxu0 %v2147
      %2246 = vmatmul.f32.gmra.mxu0 %v2144
      %v2247 = vpop.f32.mrf.mxu0
      %v2248 = vadd.f32 0.0, %v2247
      %2249 = vdwg.mxu0
      %2250 = vmatpush.msra.mxu0 %v2208
      %2251 = vmatpush.msra.mxu0 %v2204
      %2252 = vmatpush.msra.mxu0 %v2200
      %2253 = vmatpush.msra.mxu0 %v2196
      %2254 = vmatpush.msra.mxu0 %v2192
      %2255 = vmatpush.msra.mxu0 %v2188
      %2256 = vmatpush.msra.mxu0 %v2184
      %2257 = vmatpush.msra.mxu0 %v2180
      %2258 = vmatpush.msra.mxu0 %v2176
      %2259 = vmatpush.msra.mxu0 %v2172
      %2260 = vmatpush.msra.mxu0 %v2168
      %2261 = vmatpush.msra.mxu0 %v2164
      %2262 = vmatpush.msra.mxu0 %v2160
      %2263 = vmatpush.msra.mxu0 %v2156
      %2264 = vmatpush.msra.mxu0 %v2152
      %2265 = vmatpush.msra.mxu0 %v2148
      %2266 = vmatmul.f32.gmra.mxu0 %v2144
      %v2267 = vpop.f32.mrf.mxu0
      %v2268 = vadd.f32 0.0, %v2267
      %2269 = vdwg.mxu0
      %2270 = vmatpush.msra.mxu0 %v2209
      %2271 = vmatpush.msra.mxu0 %v2205
      %2272 = vmatpush.msra.mxu0 %v2201
      %2273 = vmatpush.msra.mxu0 %v2197
      %2274 = vmatpush.msra.mxu0 %v2193
      %2275 = vmatpush.msra.mxu0 %v2189
      %2276 = vmatpush.msra.mxu0 %v2185
      %2277 = vmatpush.msra.mxu0 %v2181
      %2278 = vmatpush.msra.mxu0 %v2177
      %2279 = vmatpush.msra.mxu0 %v2173
      %2280 = vmatpush.msra.mxu0 %v2169
      %2281 = vmatpush.msra.mxu0 %v2165
      %2282 = vmatpush.msra.mxu0 %v2161
      %2283 = vmatpush.msra.mxu0 %v2157
      %2284 = vmatpush.msra.mxu0 %v2153
      %2285 = vmatpush.msra.mxu0 %v2149
      %2286 = vmatmul.f32.gmra.mxu0 %v2144
      %v2287 = vpop.f32.mrf.mxu0
      %v2288 = vadd.f32 0.0, %v2287
      %2289 = vdwg.mxu0
      %v2290 = vadd.f32 %v2140, %v2228
      %v2291 = vadd.f32 %v2141, %v2248
      %v2292 = vadd.f32 %v2142, %v2268
      %v2293 = vadd.f32 %v2143, %v2288
      %v2294 = vxor.u32 %v2290, 2147483648
      %v2295 = vmul.f32 %v2294, 1.442695
      %v2296 = vpow.pop %v2295
      %v2297 = vadd.f32 %v2296, 1.0
      %v2298 = vrcp.pop %v2297
      %v2299 = vmul.f32 %v2297, %v2298
      %v2300 = vsub.f32 1.0, %v2299
      %v2301 = vmul.f32 %v2298, %v2300
      %v2302 = vadd.f32 %v2298, %v2301
      %vm2303 = vweird.f32 %v2297
      %vm2304 = vweird.f32 %v2298
      %vm2305 = vmor %vm2303, %vm2304
      %v2306 = vsel %vm2305, %v2298, %v2302
      %v2307 = vand.u32 2147483647, %v2297
      %vm2308 = vcmp.eq.f32.partialorder %v2307, 8.507059e+37
      %v2309 = vand.u32 %v2297, 2147483648
      %v2310 = vor.u32 1.1754944e-38, %v2309
      %v2311 = vsel %vm2308, %v2310, %v2306
      %v2312 = vmul.f32 1.0, %v2311
      %v2313 = vxor.u32 %v2291, 2147483648
      %v2314 = vmul.f32 %v2313, 1.442695
      %v2315 = vpow.pop %v2314
      %v2316 = vadd.f32 %v2315, 1.0
      %v2317 = vrcp.pop %v2316
      %v2318 = vmul.f32 %v2316, %v2317
      %v2319 = vsub.f32 1.0, %v2318
      %v2320 = vmul.f32 %v2317, %v2319
      %v2321 = vadd.f32 %v2317, %v2320
      %vm2322 = vweird.f32 %v2316
      %vm2323 = vweird.f32 %v2317
      %vm2324 = vmor %vm2322, %vm2323
      %v2325 = vsel %vm2324, %v2317, %v2321
      %v2326 = vand.u32 2147483647, %v2316
      %vm2327 = vcmp.eq.f32.partialorder %v2326, 8.507059e+37
      %v2328 = vand.u32 %v2316, 2147483648
      %v2329 = vor.u32 1.1754944e-38, %v2328
      %v2330 = vsel %vm2327, %v2329, %v2325
      %v2331 = vmul.f32 1.0, %v2330
      %v2332 = vtanh.pop %v2292
      %v2333 = vxor.u32 %v2293, 2147483648
      %v2334 = vmul.f32 %v2333, 1.442695
      %v2335 = vpow.pop %v2334
      %v2336 = vadd.f32 %v2335, 1.0
      %v2337 = vrcp.pop %v2336
      %v2338 = vmul.f32 %v2336, %v2337
      %v2339 = vsub.f32 1.0, %v2338
      %v2340 = vmul.f32 %v2337, %v2339
      %v2341 = vadd.f32 %v2337, %v2340
      %vm2342 = vweird.f32 %v2336
      %vm2343 = vweird.f32 %v2337
      %vm2344 = vmor %vm2342, %vm2343
      %v2345 = vsel %vm2344, %v2337, %v2341
      %v2346 = vand.u32 2147483647, %v2336
      %vm2347 = vcmp.eq.f32.partialorder %v2346, 8.507059e+37
      %v2348 = vand.u32 %v2336, 2147483648
      %v2349 = vor.u32 1.1754944e-38, %v2348
      %v2350 = vsel %vm2347, %v2349, %v2345
      %v2351 = vmul.f32 1.0, %v2350
      %v2352 = vmul.f32 %v2331, %v2145
      %v2353 = vmul.f32 %v2312, %v2332
      %v2354 = vadd.f32 %v2352, %v2353
      %v2355 = vtanh.pop %v2354
      %v2356 = vmul.f32 %v2351, %v2355
      %v2357 = vld [vmem:[%s571] sm:$0xff]
      %v2358 = vld [vmem:[%s573] sm:$0xff]
      %v2359 = vld [vmem:[%s5] sm:$0xff]
      %v2360 = vld [vmem:[%s5 + $0x8] sm:$0xff]
      %v2361 = vld [vmem:[%s5 + $0x10] sm:$0xff]
      %v2362 = vld [vmem:[%s5 + $0x18] sm:$0xff]
      %v2363 = vld [vmem:[%s5 + $0x20] sm:$0xff]
      %v2364 = vld [vmem:[%s5 + $0x28] sm:$0xff]
      %v2365 = vld [vmem:[%s5 + $0x30] sm:$0xff]
      %v2366 = vld [vmem:[%s5 + $0x38] sm:$0xff]
      %v2367 = vld [vmem:[%s5 + $0x40] sm:$0xff]
      %v2368 = vld [vmem:[%s5 + $0x48] sm:$0xff]
      %v2369 = vld [vmem:[%s5 + $0x50] sm:$0xff]
      %v2370 = vld [vmem:[%s5 + $0x58] sm:$0xff]
      %v2371 = vld [vmem:[%s5 + $0x60] sm:$0xff]
      %v2372 = vld [vmem:[%s5 + $0x68] sm:$0xff]
      %v2373 = vld [vmem:[%s5 + $0x70] sm:$0xff]
      %v2374 = vld [vmem:[%s5 + $0x78] sm:$0xff]
      %v2375 = vld [vmem:[%s5 + $0x80] sm:$0xff]
      %v2376 = vld [vmem:[%s5 + $0x88] sm:$0xff]
      %v2377 = vld [vmem:[%s5 + $0x90] sm:$0xff]
      %v2378 = vld [vmem:[%s5 + $0x98] sm:$0xff]
      %v2379 = vld [vmem:[%s5 + $0xa0] sm:$0xff]
      %v2380 = vld [vmem:[%s5 + $0xa8] sm:$0xff]
      %v2381 = vld [vmem:[%s5 + $0xb0] sm:$0xff]
      %v2382 = vld [vmem:[%s5 + $0xb8] sm:$0xff]
      %v2383 = vld [vmem:[%s5 + $0xc0] sm:$0xff]
      %v2384 = vld [vmem:[%s5 + $0xc8] sm:$0xff]
      %v2385 = vld [vmem:[%s5 + $0xd0] sm:$0xff]
      %v2386 = vld [vmem:[%s5 + $0xd8] sm:$0xff]
      %v2387 = vld [vmem:[%s5 + $0xe0] sm:$0xff]
      %v2388 = vld [vmem:[%s5 + $0xe8] sm:$0xff]
      %v2389 = vld [vmem:[%s5 + $0xf0] sm:$0xff]
      %v2390 = vld [vmem:[%s5 + $0xf8] sm:$0xff]
      %v2391 = vld [vmem:[%s5 + $0x100] sm:$0xff]
      %v2392 = vld [vmem:[%s5 + $0x108] sm:$0xff]
      %v2393 = vld [vmem:[%s5 + $0x110] sm:$0xff]
      %v2394 = vld [vmem:[%s5 + $0x118] sm:$0xff]
      %v2395 = vld [vmem:[%s5 + $0x120] sm:$0xff]
      %v2396 = vld [vmem:[%s5 + $0x128] sm:$0xff]
      %v2397 = vld [vmem:[%s5 + $0x130] sm:$0xff]
      %v2398 = vld [vmem:[%s5 + $0x138] sm:$0xff]
      %v2399 = vld [vmem:[%s5 + $0x140] sm:$0xff]
      %v2400 = vld [vmem:[%s5 + $0x148] sm:$0xff]
      %v2401 = vld [vmem:[%s5 + $0x150] sm:$0xff]
      %v2402 = vld [vmem:[%s5 + $0x158] sm:$0xff]
      %v2403 = vld [vmem:[%s5 + $0x160] sm:$0xff]
      %v2404 = vld [vmem:[%s5 + $0x168] sm:$0xff]
      %v2405 = vld [vmem:[%s5 + $0x170] sm:$0xff]
      %v2406 = vld [vmem:[%s5 + $0x178] sm:$0xff]
      %v2407 = vld [vmem:[%s5 + $0x180] sm:$0xff]
      %v2408 = vld [vmem:[%s5 + $0x188] sm:$0xff]
      %v2409 = vld [vmem:[%s5 + $0x190] sm:$0xff]
      %v2410 = vld [vmem:[%s5 + $0x198] sm:$0xff]
      %v2411 = vld [vmem:[%s5 + $0x1a0] sm:$0xff]
      %v2412 = vld [vmem:[%s5 + $0x1a8] sm:$0xff]
      %v2413 = vld [vmem:[%s5 + $0x1b0] sm:$0xff]
      %v2414 = vld [vmem:[%s5 + $0x1b8] sm:$0xff]
      %v2415 = vld [vmem:[%s5 + $0x1c0] sm:$0xff]
      %v2416 = vld [vmem:[%s5 + $0x1c8] sm:$0xff]
      %v2417 = vld [vmem:[%s5 + $0x1d0] sm:$0xff]
      %v2418 = vld [vmem:[%s5 + $0x1d8] sm:$0xff]
      %v2419 = vld [vmem:[%s5 + $0x1e0] sm:$0xff]
      %v2420 = vld [vmem:[%s5 + $0x1e8] sm:$0xff]
      %v2421 = vld [vmem:[%s5 + $0x1f0] sm:$0xff]
      %v2422 = vld [vmem:[%s5 + $0x1f8] sm:$0xff]
      %v2423 = vld [vmem:[%s5 + $0x200] sm:$0xff]
      %v2424 = vld [vmem:[%s5 + $0x208] sm:$0xff]
      %v2425 = vld [vmem:[%s5 + $0x210] sm:$0xff]
      %v2426 = vld [vmem:[%s5 + $0x218] sm:$0xff]
      %v2427 = vld [vmem:[%s5 + $0x220] sm:$0xff]
      %v2428 = vld [vmem:[%s5 + $0x228] sm:$0xff]
      %v2429 = vld [vmem:[%s5 + $0x230] sm:$0xff]
      %v2430 = vld [vmem:[%s5 + $0x238] sm:$0xff]
      %v2431 = vld [vmem:[%s5 + $0x240] sm:$0xff]
      %v2432 = vld [vmem:[%s5 + $0x248] sm:$0xff]
      %v2433 = vld [vmem:[%s5 + $0x250] sm:$0xff]
      %v2434 = vld [vmem:[%s5 + $0x258] sm:$0xff]
      %v2435 = vld [vmem:[%s5 + $0x260] sm:$0xff]
      %v2436 = vld [vmem:[%s5 + $0x268] sm:$0xff]
      %v2437 = vld [vmem:[%s5 + $0x270] sm:$0xff]
      %v2438 = vld [vmem:[%s5 + $0x278] sm:$0xff]
      %v2439 = vld [vmem:[%s5 + $0x280] sm:$0xff]
      %v2440 = vld [vmem:[%s5 + $0x288] sm:$0xff]
      %v2441 = vld [vmem:[%s5 + $0x290] sm:$0xff]
      %v2442 = vld [vmem:[%s5 + $0x298] sm:$0xff]
      %v2443 = vld [vmem:[%s5 + $0x2a0] sm:$0xff]
      %v2444 = vld [vmem:[%s5 + $0x2a8] sm:$0xff]
      %v2445 = vld [vmem:[%s5 + $0x2b0] sm:$0xff]
      %v2446 = vld [vmem:[%s5 + $0x2b8] sm:$0xff]
      %v2447 = vld [vmem:[%s5 + $0x2c0] sm:$0xff]
      %v2448 = vld [vmem:[%s5 + $0x2c8] sm:$0xff]
      %v2449 = vld [vmem:[%s5 + $0x2d0] sm:$0xff]
      %v2450 = vld [vmem:[%s5 + $0x2d8] sm:$0xff]
      %v2451 = vld [vmem:[%s5 + $0x2e0] sm:$0xff]
      %v2452 = vld [vmem:[%s5 + $0x2e8] sm:$0xff]
      %v2453 = vld [vmem:[%s5 + $0x2f0] sm:$0xff]
      %v2454 = vld [vmem:[%s5 + $0x2f8] sm:$0xff]
      %v2455 = vld [vmem:[%s5 + $0x300] sm:$0xff]
      %v2456 = vld [vmem:[%s5 + $0x308] sm:$0xff]
      %v2457 = vld [vmem:[%s5 + $0x310] sm:$0xff]
      %v2458 = vld [vmem:[%s5 + $0x318] sm:$0xff]
      %v2459 = vld [vmem:[%s5 + $0x320] sm:$0xff]
      %v2460 = vld [vmem:[%s5 + $0x328] sm:$0xff]
      %v2461 = vld [vmem:[%s5 + $0x330] sm:$0xff]
      %v2462 = vld [vmem:[%s5 + $0x338] sm:$0xff]
      %v2463 = vld [vmem:[%s5 + $0x340] sm:$0xff]
      %v2464 = vld [vmem:[%s5 + $0x348] sm:$0xff]
      %v2465 = vld [vmem:[%s5 + $0x350] sm:$0xff]
      %v2466 = vld [vmem:[%s5 + $0x358] sm:$0xff]
      %v2467 = vld [vmem:[%s5 + $0x360] sm:$0xff]
      %v2468 = vld [vmem:[%s5 + $0x368] sm:$0xff]
      %v2469 = vld [vmem:[%s5 + $0x370] sm:$0xff]
      %v2470 = vld [vmem:[%s5 + $0x378] sm:$0xff]
      %v2471 = vld [vmem:[%s5 + $0x380] sm:$0xff]
      %v2472 = vld [vmem:[%s5 + $0x388] sm:$0xff]
      %v2473 = vld [vmem:[%s5 + $0x390] sm:$0xff]
      %v2474 = vld [vmem:[%s5 + $0x398] sm:$0xff]
      %v2475 = vld [vmem:[%s5 + $0x3a0] sm:$0xff]
      %v2476 = vld [vmem:[%s5 + $0x3a8] sm:$0xff]
      %v2477 = vld [vmem:[%s5 + $0x3b0] sm:$0xff]
      %v2478 = vld [vmem:[%s5 + $0x3b8] sm:$0xff]
      %v2479 = vld [vmem:[%s5 + $0x3c0] sm:$0xff]
      %v2480 = vld [vmem:[%s5 + $0x3c8] sm:$0xff]
      %v2481 = vld [vmem:[%s5 + $0x3d0] sm:$0xff]
      %v2482 = vld [vmem:[%s5 + $0x3d8] sm:$0xff]
      %v2483 = vld [vmem:[%s5 + $0x3e0] sm:$0xff]
      %v2484 = vld [vmem:[%s5 + $0x3e8] sm:$0xff]
      %v2485 = vld [vmem:[%s5 + $0x3f0] sm:$0xff]
      %v2486 = vld [vmem:[%s5 + $0x3f8] sm:$0xff]
      %v2487 = vld [vmem:[%s6] sm:$0xf]
      %v2489 = vperm.slane %v2487, 0
      %v2490 = vperm.slane %v2487, 1
      %v2491 = vperm.slane %v2487, 2
      %v2492 = vperm.slane %v2487, 3
      %2497 = vmatpush.msra.mxu0 %v2419
      %2498 = vmatpush.msra.mxu0 %v2415
      %2499 = vmatpush.msra.mxu0 %v2411
      %2500 = vmatpush.msra.mxu0 %v2407
      %2501 = vmatpush.msra.mxu0 %v2403
      %2502 = vmatpush.msra.mxu0 %v2399
      %2503 = vmatpush.msra.mxu0 %v2395
      %2504 = vmatpush.msra.mxu0 %v2391
      %2505 = vmatpush.msra.mxu0 %v2387
      %2506 = vmatpush.msra.mxu0 %v2383
      %2507 = vmatpush.msra.mxu0 %v2379
      %2508 = vmatpush.msra.mxu0 %v2375
      %2509 = vmatpush.msra.mxu0 %v2371
      %2510 = vmatpush.msra.mxu0 %v2367
      %2511 = vmatpush.msra.mxu0 %v2363
      %2512 = vmatpush.msra.mxu0 %v2359
      %2513 = vmatmul.f32.gmra.mxu0 %v2356
      %v2514 = vpop.f32.mrf.mxu0
      %v2515 = vadd.f32 %v2489, %v2514
      %2516 = vdwg.mxu0
      %2517 = vmatpush.msra.mxu0 %v2483
      %2518 = vmatpush.msra.mxu0 %v2479
      %2519 = vmatpush.msra.mxu0 %v2475
      %2520 = vmatpush.msra.mxu0 %v2471
      %2521 = vmatpush.msra.mxu0 %v2467
      %2522 = vmatpush.msra.mxu0 %v2463
      %2523 = vmatpush.msra.mxu0 %v2459
      %2524 = vmatpush.msra.mxu0 %v2455
      %2525 = vmatpush.msra.mxu0 %v2451
      %2526 = vmatpush.msra.mxu0 %v2447
      %2527 = vmatpush.msra.mxu0 %v2443
      %2528 = vmatpush.msra.mxu0 %v2439
      %2529 = vmatpush.msra.mxu0 %v2435
      %2530 = vmatpush.msra.mxu0 %v2431
      %2531 = vmatpush.msra.mxu0 %v2427
      %2532 = vmatpush.msra.mxu0 %v2423
      %2533 = vmatmul.f32.gmra.mxu0 %v2357
      %v2534 = vpop.f32.mrf.mxu0
      %v2535 = vadd.f32 %v2515, %v2534
      %2536 = vdwg.mxu0
      %2537 = vmatpush.msra.mxu0 %v2420
      %2538 = vmatpush.msra.mxu0 %v2416
      %2539 = vmatpush.msra.mxu0 %v2412
      %2540 = vmatpush.msra.mxu0 %v2408
      %2541 = vmatpush.msra.mxu0 %v2404
      %2542 = vmatpush.msra.mxu0 %v2400
      %2543 = vmatpush.msra.mxu0 %v2396
      %2544 = vmatpush.msra.mxu0 %v2392
      %2545 = vmatpush.msra.mxu0 %v2388
      %2546 = vmatpush.msra.mxu0 %v2384
      %2547 = vmatpush.msra.mxu0 %v2380
      %2548 = vmatpush.msra.mxu0 %v2376
      %2549 = vmatpush.msra.mxu0 %v2372
      %2550 = vmatpush.msra.mxu0 %v2368
      %2551 = vmatpush.msra.mxu0 %v2364
      %2552 = vmatpush.msra.mxu0 %v2360
      %2553 = vmatmul.f32.gmra.mxu0 %v2356
      %v2554 = vpop.f32.mrf.mxu0
      %v2555 = vadd.f32 %v2490, %v2554
      %2556 = vdwg.mxu0
      %2557 = vmatpush.msra.mxu0 %v2484
      %2558 = vmatpush.msra.mxu0 %v2480
      %2559 = vmatpush.msra.mxu0 %v2476
      %2560 = vmatpush.msra.mxu0 %v2472
      %2561 = vmatpush.msra.mxu0 %v2468
      %2562 = vmatpush.msra.mxu0 %v2464
      %2563 = vmatpush.msra.mxu0 %v2460
      %2564 = vmatpush.msra.mxu0 %v2456
      %2565 = vmatpush.msra.mxu0 %v2452
      %2566 = vmatpush.msra.mxu0 %v2448
      %2567 = vmatpush.msra.mxu0 %v2444
      %2568 = vmatpush.msra.mxu0 %v2440
      %2569 = vmatpush.msra.mxu0 %v2436
      %2570 = vmatpush.msra.mxu0 %v2432
      %2571 = vmatpush.msra.mxu0 %v2428
      %2572 = vmatpush.msra.mxu0 %v2424
      %2573 = vmatmul.f32.gmra.mxu0 %v2357
      %v2574 = vpop.f32.mrf.mxu0
      %v2575 = vadd.f32 %v2555, %v2574
      %2576 = vdwg.mxu0
      %2577 = vmatpush.msra.mxu0 %v2421
      %2578 = vmatpush.msra.mxu0 %v2417
      %2579 = vmatpush.msra.mxu0 %v2413
      %2580 = vmatpush.msra.mxu0 %v2409
      %2581 = vmatpush.msra.mxu0 %v2405
      %2582 = vmatpush.msra.mxu0 %v2401
      %2583 = vmatpush.msra.mxu0 %v2397
      %2584 = vmatpush.msra.mxu0 %v2393
      %2585 = vmatpush.msra.mxu0 %v2389
      %2586 = vmatpush.msra.mxu0 %v2385
      %2587 = vmatpush.msra.mxu0 %v2381
      %2588 = vmatpush.msra.mxu0 %v2377
      %2589 = vmatpush.msra.mxu0 %v2373
      %2590 = vmatpush.msra.mxu0 %v2369
      %2591 = vmatpush.msra.mxu0 %v2365
      %2592 = vmatpush.msra.mxu0 %v2361
      %2593 = vmatmul.f32.gmra.mxu0 %v2356
      %v2594 = vpop.f32.mrf.mxu0
      %v2595 = vadd.f32 %v2491, %v2594
      %2596 = vdwg.mxu0
      %2597 = vmatpush.msra.mxu0 %v2485
      %2598 = vmatpush.msra.mxu0 %v2481
      %2599 = vmatpush.msra.mxu0 %v2477
      %2600 = vmatpush.msra.mxu0 %v2473
      %2601 = vmatpush.msra.mxu0 %v2469
      %2602 = vmatpush.msra.mxu0 %v2465
      %2603 = vmatpush.msra.mxu0 %v2461
      %2604 = vmatpush.msra.mxu0 %v2457
      %2605 = vmatpush.msra.mxu0 %v2453
      %2606 = vmatpush.msra.mxu0 %v2449
      %2607 = vmatpush.msra.mxu0 %v2445
      %2608 = vmatpush.msra.mxu0 %v2441
      %2609 = vmatpush.msra.mxu0 %v2437
      %2610 = vmatpush.msra.mxu0 %v2433
      %2611 = vmatpush.msra.mxu0 %v2429
      %2612 = vmatpush.msra.mxu0 %v2425
      %2613 = vmatmul.f32.gmra.mxu0 %v2357
      %v2614 = vpop.f32.mrf.mxu0
      %v2615 = vadd.f32 %v2595, %v2614
      %2616 = vdwg.mxu0
      %2617 = vmatpush.msra.mxu0 %v2422
      %2618 = vmatpush.msra.mxu0 %v2418
      %2619 = vmatpush.msra.mxu0 %v2414
      %2620 = vmatpush.msra.mxu0 %v2410
      %2621 = vmatpush.msra.mxu0 %v2406
      %2622 = vmatpush.msra.mxu0 %v2402
      %2623 = vmatpush.msra.mxu0 %v2398
      %2624 = vmatpush.msra.mxu0 %v2394
      %2625 = vmatpush.msra.mxu0 %v2390
      %2626 = vmatpush.msra.mxu0 %v2386
      %2627 = vmatpush.msra.mxu0 %v2382
      %2628 = vmatpush.msra.mxu0 %v2378
      %2629 = vmatpush.msra.mxu0 %v2374
      %2630 = vmatpush.msra.mxu0 %v2370
      %2631 = vmatpush.msra.mxu0 %v2366
      %2632 = vmatpush.msra.mxu0 %v2362
      %2633 = vmatmul.f32.gmra.mxu0 %v2356
      %v2634 = vpop.f32.mrf.mxu0
      %v2635 = vadd.f32 %v2492, %v2634
      %2636 = vdwg.mxu0
      %2637 = vmatpush.msra.mxu0 %v2486
      %2638 = vmatpush.msra.mxu0 %v2482
      %2639 = vmatpush.msra.mxu0 %v2478
      %2640 = vmatpush.msra.mxu0 %v2474
      %2641 = vmatpush.msra.mxu0 %v2470
      %2642 = vmatpush.msra.mxu0 %v2466
      %2643 = vmatpush.msra.mxu0 %v2462
      %2644 = vmatpush.msra.mxu0 %v2458
      %2645 = vmatpush.msra.mxu0 %v2454
      %2646 = vmatpush.msra.mxu0 %v2450
      %2647 = vmatpush.msra.mxu0 %v2446
      %2648 = vmatpush.msra.mxu0 %v2442
      %2649 = vmatpush.msra.mxu0 %v2438
      %2650 = vmatpush.msra.mxu0 %v2434
      %2651 = vmatpush.msra.mxu0 %v2430
      %2652 = vmatpush.msra.mxu0 %v2426
      %2653 = vmatmul.f32.gmra.mxu0 %v2357
      %v2654 = vpop.f32.mrf.mxu0
      %v2655 = vadd.f32 %v2635, %v2654
      %2656 = vdwg.mxu0
      %v2657 = vxor.u32 %v2535, 2147483648
      %v2658 = vmul.f32 %v2657, 1.442695
      %v2659 = vpow.pop %v2658
      %v2660 = vadd.f32 %v2659, 1.0
      %v2661 = vrcp.pop %v2660
      %v2662 = vmul.f32 %v2660, %v2661
      %v2663 = vsub.f32 1.0, %v2662
      %v2664 = vmul.f32 %v2661, %v2663
      %v2665 = vadd.f32 %v2661, %v2664
      %vm2666 = vweird.f32 %v2660
      %vm2667 = vweird.f32 %v2661
      %vm2668 = vmor %vm2666, %vm2667
      %v2669 = vsel %vm2668, %v2661, %v2665
      %v2670 = vand.u32 2147483647, %v2660
      %vm2671 = vcmp.eq.f32.partialorder %v2670, 8.507059e+37
      %v2672 = vand.u32 %v2660, 2147483648
      %v2673 = vor.u32 1.1754944e-38, %v2672
      %v2674 = vsel %vm2671, %v2673, %v2669
      %v2675 = vmul.f32 1.0, %v2674
      %v2676 = vxor.u32 %v2575, 2147483648
      %v2677 = vmul.f32 %v2676, 1.442695
      %v2678 = vpow.pop %v2677
      %v2679 = vadd.f32 %v2678, 1.0
      %v2680 = vrcp.pop %v2679
      %v2681 = vmul.f32 %v2679, %v2680
      %v2682 = vsub.f32 1.0, %v2681
      %v2683 = vmul.f32 %v2680, %v2682
      %v2684 = vadd.f32 %v2680, %v2683
      %vm2685 = vweird.f32 %v2679
      %vm2686 = vweird.f32 %v2680
      %vm2687 = vmor %vm2685, %vm2686
      %v2688 = vsel %vm2687, %v2680, %v2684
      %v2689 = vand.u32 2147483647, %v2679
      %vm2690 = vcmp.eq.f32.partialorder %v2689, 8.507059e+37
      %v2691 = vand.u32 %v2679, 2147483648
      %v2692 = vor.u32 1.1754944e-38, %v2691
      %v2693 = vsel %vm2690, %v2692, %v2688
      %v2694 = vmul.f32 1.0, %v2693
      %v2695 = vtanh.pop %v2615
      %v2696 = vxor.u32 %v2655, 2147483648
      %v2697 = vmul.f32 %v2696, 1.442695
      %v2698 = vpow.pop %v2697
      %v2699 = vadd.f32 %v2698, 1.0
      %v2700 = vrcp.pop %v2699
      %v2701 = vmul.f32 %v2699, %v2700
      %v2702 = vsub.f32 1.0, %v2701
      %v2703 = vmul.f32 %v2700, %v2702
      %v2704 = vadd.f32 %v2700, %v2703
      %vm2705 = vweird.f32 %v2699
      %vm2706 = vweird.f32 %v2700
      %vm2707 = vmor %vm2705, %vm2706
      %v2708 = vsel %vm2707, %v2700, %v2704
      %v2709 = vand.u32 2147483647, %v2699
      %vm2710 = vcmp.eq.f32.partialorder %v2709, 8.507059e+37
      %v2711 = vand.u32 %v2699, 2147483648
      %v2712 = vor.u32 1.1754944e-38, %v2711
      %v2713 = vsel %vm2710, %v2712, %v2708
      %v2714 = vmul.f32 1.0, %v2713
      %v2715 = vmul.f32 %v2694, %v2358
      %v2716 = vmul.f32 %v2675, %v2695
      %v2717 = vadd.f32 %v2715, %v2716
      %v2718 = vtanh.pop %v2717
      %v2719 = vmul.f32 %v2714, %v2718
      %s2720 = scalar_lea.vmem %s332, 24
      %2721 = vst [vmem:[%s2720] sm:$0xff] %v2719
      %2722 = vst [vmem:[%s8] sm:$0xff] %v2356
      %2723 = vst [vmem:[%s9] sm:$0xff] %v2354
      %2724 = vst [vmem:[%s571] sm:$0xff] %v2719
      %2725 = vst [vmem:[%s573] sm:$0xff] %v2717
      %s2726 = smul.u32 4, %s21
      %p2727 = scmp.lt.s32.totalorder %s2726, 7
      %s2728 = scalar_select %p2727, %s2726, 7
      %s2729 = smul.addr %s2728, 8
      %s2730 = scalar_lea.vmem %s7, %s2729
      // Predicated region
      $region53: #{lyrics_generator_forward.6} parent=47 // pred_check
        %p2731 = pneg %p191
      $region54: #{lyrics_generator_forward.6} parent=47 // pred_check_branch
        %2733 = sbr.rel (%p2731) target = $region56
      $region55: #{lyrics_generator_forward.6} parent=47 // pred_region
        %s2734 = smul.u32 4, %s21
      $region56: #{lyrics_generator_forward.6} parent=47 // pred_fallthru
        _
      // Predicated region
      $region57: #{lyrics_generator_forward.6} parent=47 // pred_check
        %p2735 = pneg %p212
      $region58: #{lyrics_generator_forward.6} parent=47 // pred_check_branch
        %2737 = sbr.rel (%p2735) target = $region60
      $region59: #{lyrics_generator_forward.6} parent=47 // pred_region
        _
      $region60: #{lyrics_generator_forward.6} parent=47 // pred_fallthru
        _
      // Predicated region
      $region61: #{lyrics_generator_forward.6} parent=47 // pred_check
        %p2738 = pneg %p233
      $region62: #{lyrics_generator_forward.6} parent=47 // pred_check_branch
        %2740 = sbr.rel (%p2738) target = $region64
      $region63: #{lyrics_generator_forward.6} parent=47 // pred_region
        _
      $region64: #{lyrics_generator_forward.6} parent=47 // pred_fallthru
        _
      // Predicated region
      $region65: #{lyrics_generator_forward.6} parent=47 // pred_check
        %p2741 = pneg %p212
      $region66: #{lyrics_generator_forward.6} parent=47 // pred_check_branch
        %2743 = sbr.rel (%p2741) target = $region68
      $region67: #{lyrics_generator_forward.6} parent=47 // pred_region
        _
      $region68: #{lyrics_generator_forward.6} parent=47 // pred_fallthru
        _
      // Predicated region
      $region69: #{lyrics_generator_forward.6} parent=47 // pred_check
        %p2744 = pneg %p233
      $region70: #{lyrics_generator_forward.6} parent=47 // pred_check_branch
        %2746 = sbr.rel (%p2744) target = $region72
      $region71: #{lyrics_generator_forward.6} parent=47 // pred_region
        _
      $region72: #{lyrics_generator_forward.6} parent=47 // pred_fallthru
        _
    $region48: #{lyrics_generator_forward.6} parent=5 // pred_fallthru
      _
    %p2747 = scmp.le.s32.totalorder 2, %s16
    // Predicated region
    $region73: #{lyrics_generator_forward.6} parent=5 // pred_check
      %p2748 = pneg %p2747
    $region74: #{lyrics_generator_forward.6} parent=5 // pred_check_branch
      %2750 = sbr.rel (%p2748) target = $region76
    $region75: #{lyrics_generator_forward.6} parent=5 // pred_region
      %s2751 = ssub.s32 %s16, 2
      // Predicated region
      $region77: #{lyrics_generator_forward.6} parent=75 // pred_check
        %p2752 = pneg %p197
      $region78: #{lyrics_generator_forward.6} parent=75 // pred_check_branch
        %2754 = sbr.rel (%p2752) target = $region80
      $region79: #{lyrics_generator_forward.6} parent=75 // pred_region
        %s2755 = smul.u32 4, %s22
        %p2756 = scmp.lt.s32.totalorder %s2755, 7
        %s2757 = scalar_select %p2756, %s2755, 7
        %s2758 = smul.addr %s2757, 8
        %s2759 = scalar_lea.vmem %s7, %s2758
      $region80: #{lyrics_generator_forward.6} parent=75 // pred_fallthru
        _
    $region76: #{lyrics_generator_forward.6} parent=5 // pred_fallthru
      _
  $region6: #{lyrics_generator_forward.6} parent=0 // loop_footer
    %s20 = sadd.s32 1, %s16
  $region7: #{lyrics_generator_forward.6} parent=0 // loop_footer_branch
    %15 = sbr.rel target = $region3
  $region8: #{lyrics_generator_forward.6} parent=0 // loop_exit
    _

</llo_original>
